<compile_context>
chip_gen: v6e
topology: v6e:2x2x1
jax: 0.10.0
libtpu: 0.0.40
codegen_flags: <defaults>
</compile_context>

<pallas_src>
import functools

import jax
import jax.numpy as jnp
from jax.experimental import pallas as pl
from jax.experimental.pallas import tpu as pltpu

EPS = 1e-5
LANE = 128
N_ALIGN = 256          # node-dim padding: lane-dense + 256-deep MXU K cadence
_VMEM = pl.BlockSpec(memory_space=pltpu.MemorySpace.VMEM)
_ANY = pl.BlockSpec(memory_space=pl.ANY)


def _round_up(x, m):
    return (x + m - 1) // m * m


def _pad_to(a, shape):
    out = jnp.zeros(shape, a.dtype)
    return out.at[tuple(slice(0, s) for s in a.shape)].set(a)


def _vmem_limit_bytes():
    """~85% of this generation's physical VMEM (v5e/v6e: 128 MiB, v7x: 64 MiB)."""
    cap = 64 * 1024 * 1024
    try:
        cap = int(getattr(pltpu.get_tpu_info(), "vmem_capacity_bytes", cap))
    except Exception:
        pass
    return int(cap * 0.85)


def _dense_vmem_estimate(n_pad, c_pad, num_layers, linear_l):
    """Rough VMEM footprint of the dense resident-A path (bytes)."""
    nb = n_pad * c_pad
    est = 2 * n_pad * n_pad                    # resident bf16 A_hat scratch
    est += 2 * n_pad * 2 * c_pad               # persistent bf16 [N, 2C] scratch
    est += 6 * nb * 4                          # live f32 [N, C] intermediates
    est += 2 * nb + 2 * 2 * nb                 # bf16 x0 input + two bf16 outputs
    est += num_layers * (2 * c_pad) * c_pad * 2          # stacked bf16 weights
    est += 4 * num_layers * c_pad * 4                    # biases / gamma / beta
    if linear_l:
        est += 2 * 2 * c_pad * c_pad                     # w1, w2 (bf16)
    est += 4 * 1024 * 1024                     # Mosaic internal scratch headroom
    return est


# ------------------------------ fused kernel ------------------------------- #

def _gcn_fused_kernel(*refs, num_layers, linear_l, n_real, n_stripes):
    if linear_l:
        (a_hbm, x0_ref, w1_ref, b1_ref, wcat_ref, bcat_ref,
         gamma_ref, beta_ref, w2_ref, b2_ref,
         h_out_ref, x_out_ref,
         a_vmem, a_sem, z_ref) = refs
    else:
        (a_hbm, x0_ref, wcat_ref, bcat_ref, gamma_ref, beta_ref,
         h_out_ref, x_out_ref,
         a_vmem, a_sem, z_ref) = refs

    f32, bf16 = jnp.float32, jnp.bfloat16
    n_pad = a_vmem.shape[0]
    c_pad = wcat_ref.shape[2]
    stripe = n_pad // n_stripes

    def a_copy(s):
        rows = pl.ds(s * stripe, stripe)
        return pltpu.make_async_copy(a_hbm.at[rows, :], a_vmem.at[rows, :],
                                     a_sem.at[s])

    # Kick off all A_hat HBM->VMEM row-stripe DMAs up front (disjoint targets,
    # no buffer reuse). They overlap with lin1 and with the earlier stripes'
    # A@X matmuls below.
    for s in range(n_stripes):
        a_copy(s).start()

    # --- BatchNorm batch statistics: one masked pass (sum & sum-of-squares) ---
    inv_n = 1.0 / float(n_real)
    if n_pad != n_real:
        row_mask = (jax.lax.broadcasted_iota(jnp.int32, (n_pad, 1), 0)
                    < n_real).astype(f32)

        def _stats(y):
            ym = y * row_mask
            mean = jnp.sum(ym, axis=0, keepdims=True) * inv_n
            ex2 = jnp.sum(ym * y, axis=0, keepdims=True) * inv_n
            return mean, ex2 - mean * mean
    else:
        def _stats(y):
            mean = jnp.mean(y, axis=0, keepdims=True)
            ex2 = jnp.mean(y * y, axis=0, keepdims=True)
            return mean, ex2 - mean * mean

    def conv_skip(layer, x_f, h_f, first_use_of_a):
        # (A_hat @ X) @ Wc + H @ Ws == [A_hat@X | H] @ [Wc ; Ws] (one K=2C pass).
        # The bf16 halves live in ONE persistent VMEM scratch (no f32 concat
        # temp, no per-layer re-materialisation).
        x_bf = x_f.astype(bf16)
        if first_use_of_a:
            # Consume A row stripes as their DMAs land (DMA / MXU overlap).
            for s in range(n_stripes):
                a_copy(s).wait()
                rows = pl.ds(s * stripe, stripe)
                z_ref[rows, pl.ds(0, c_pad)] = jnp.dot(
                    a_vmem[rows, :], x_bf,
                    preferred_element_type=f32).astype(bf16)
        else:
            z_ref[:, pl.ds(0, c_pad)] = jnp.dot(
                a_vmem[...], x_bf, preferred_element_type=f32).astype(bf16)
        z_ref[:, pl.ds(c_pad, c_pad)] = h_f.astype(bf16)
        # TODO(synk): on v7x prefer two K=C matmuls accumulated in the MRB
        #             (dot(ax, Wc) + dot(h, Ws)) instead of the K=2C fused form.
        return (jnp.dot(z_ref[...], wcat_ref[layer],
                        preferred_element_type=f32) + bcat_ref[layer])

    if linear_l:
        x = jnp.dot(x0_ref[...], w1_ref[...], preferred_element_type=f32)
        x = jnp.maximum(x + b1_ref[...], 0.0)
        h = x
        n_bn = num_layers
    else:
        x = x0_ref[...].astype(f32)
        h = x
        n_bn = num_layers - 1

    # Layer loop unrolled (num_layers is small and static).
    # TODO(synk): switch to lax.fori_loop with wcat_ref[pl.ds(l, 1)] indexing if
    #             num_layers grows beyond ~4 (vreg pressure / compile time).
    for l in range(n_bn):
        y = conv_skip(l, x, h, first_use_of_a=(l == 0))
        h = y                                     # pre-BN value -> next h
        mean, var = _stats(y)
        yn = (y - mean) * jax.lax.rsqrt(var + EPS)
        x = jnp.maximum(yn * gamma_ref[l] + beta_ref[l], 0.0)
        # dropout: identity (eval semantics)

    if linear_l:
        x = (jnp.dot(x.astype(bf16), w2_ref[...], preferred_element_type=f32)
             + b2_ref[...])
    else:
        # last conv+skip, no BN/ReLU; h keeps the previous layer's pre-BN value
        x = conv_skip(num_layers - 1, x, h, first_use_of_a=(n_bn == 0))

    h_out_ref[...] = h.astype(h_out_ref.dtype)
    x_out_ref[...] = x.astype(x_out_ref.dtype)


def _gcn_fused_call(a_hat, x0, params, *, n_real, n_pad, c_pad):
    num_layers = params["num_layers"]
    linear_l = params["linear_l"]

    vmem_limit = _vmem_limit_bytes()
    if _dense_vmem_estimate(n_pad, c_pad, num_layers, linear_l) > vmem_limit:
        # TODO(synk): row-tiled SpMM fallback for graphs past the dense cap.
        raise NotImplementedError(
            "graph too large for the dense VMEM-resident-A_hat path on this "
            "TPU generation; a row-tiled / sparse path is required.")

    # Row-stripe count for the streamed A_hat DMA (n_pad is a multiple of 256,
    # so stripes stay sublane/lane aligned).
    n_stripes = max(1, min(8, n_pad // 256))
    assert n_pad % n_stripes == 0

    kernel = functools.partial(_gcn_fused_kernel, num_layers=num_layers,
                               linear_l=linear_l, n_real=n_real,
                               n_stripes=n_stripes)
    if linear_l:
        inputs = (a_hat, x0, params["w1"], params["b1"], params["wcat"],
                  params["bcat"], params["gamma"], params["beta"],
                  params["w2"], params["b2"])
    else:
        inputs = (a_hat, x0, params["wcat"], params["bcat"],
                  params["gamma"], params["beta"])

    return pl.pallas_call(
        kernel,
        out_shape=(jax.ShapeDtypeStruct((n_pad, c_pad), jnp.bfloat16),
                   jax.ShapeDtypeStruct((n_pad, c_pad), jnp.bfloat16)),
        in_specs=[_ANY] + [_VMEM] * (len(inputs) - 1),
        out_specs=(_VMEM, _VMEM),
        scratch_shapes=[
            pltpu.VMEM((n_pad, n_pad), jnp.bfloat16),       # resident A_hat
            pltpu.SemaphoreType.DMA((n_stripes,)),           # stripe DMA sems
            pltpu.VMEM((n_pad, 2 * c_pad), jnp.bfloat16),    # [A@X | H] scratch
        ],
        compiler_params=pltpu.CompilerParams(vmem_limit_bytes=vmem_limit),
    )(*inputs)


# ------------------------------- glue (JAX) -------------------------------- #

def build_normalized_adjacency(edge_index, num_nodes):
    """Dense symmetric-normalized adjacency with self-loops: D^-1/2 (A+I) D^-1/2."""
    src, dst = edge_index[0], edge_index[1]
    a = jnp.zeros((num_nodes, num_nodes), jnp.float32).at[dst, src].add(1.0)
    a = a + jnp.eye(num_nodes, dtype=jnp.float32)
    deg = jnp.sum(a, axis=1)
    d_inv_sqrt = jax.lax.rsqrt(jnp.maximum(deg, 1e-12))
    return d_inv_sqrt[:, None] * a * d_inv_sqrt[None, :]


def prepare_adjacency(edge_index, num_nodes, n_pad=None):
    """Build + pad + bf16-cast A_hat once; cache across calls for static graphs."""
    if n_pad is None:
        n_pad = _round_up(num_nodes, N_ALIGN)
    a_hat = build_normalized_adjacency(edge_index, num_nodes)
    return _pad_to(a_hat, (n_pad, n_pad)).astype(jnp.bfloat16)


def _init_linear(key, c_in, c_out):
    kw, kb = jax.random.split(key)
    scale = 1.0 / jnp.sqrt(jnp.float32(c_in))
    w = jax.random.uniform(kw, (c_in, c_out), jnp.float32, -scale, scale)
    b = jax.random.uniform(kb, (1, c_out), jnp.float32, -scale, scale)
    return w, b


def init_gcn_params(key, in_channels, hidden_channels, out_channels,
                    num_layers, linear_l):
    """Initialize and pack (pad + stack + bf16-cast) params for the fused kernel."""
    c_pad = _round_up(max(in_channels, hidden_channels, out_channels), LANE)
    keys = iter(jax.random.split(key, 4 * num_layers + 8))
    params = {"linear_l": linear_l, "num_layers": num_layers,
              "dims": (in_channels, hidden_channels, out_channels),
              "c_pad": c_pad}

    if linear_l:
        conv_dims = [(hidden_channels, hidden_channels)] * num_layers
        n_bn = num_layers
        w1, b1 = _init_linear(next(keys), in_channels, hidden_channels)
        params["w1"] = _pad_to(w1, (c_pad, c_pad)).astype(jnp.bfloat16)
        params["b1"] = _pad_to(b1, (1, c_pad))
        w2, b2 = _init_linear(next(keys), hidden_channels, out_channels)
        params["w2"] = _pad_to(w2, (c_pad, c_pad)).astype(jnp.bfloat16)
        params["b2"] = _pad_to(b2, (1, c_pad))
    else:
        conv_dims = ([(in_channels, hidden_channels)]
                     + [(hidden_channels, hidden_channels)] * (num_layers - 2)
                     + [(hidden_channels, out_channels)])
        n_bn = num_layers - 1

    # Stack [Wc ; Ws] along K and fold (bc + bs) per layer.
    wcat = jnp.zeros((num_layers, 2 * c_pad, c_pad), jnp.float32)
    bcat = jnp.zeros((num_layers, 1, c_pad), jnp.float32)
    for l, (ci, co) in enumerate(conv_dims):
        wc, bc = _init_linear(next(keys), ci, co)     # GCNConv weight + bias
        ws, bs = _init_linear(next(keys), ci, co)     # skip Linear weight + bias
        wcat = wcat.at[l, :ci, :co].set(wc)
        wcat = wcat.at[l, c_pad:c_pad + ci, :co].set(ws)
        bcat = bcat.at[l, 0, :co].set((bc + bs)[0])
    params["wcat"] = wcat.astype(jnp.bfloat16)
    params["bcat"] = bcat

    gamma = jnp.zeros((n_bn, 1, c_pad), jnp.float32)
    gamma = gamma.at[:, :, :hidden_channels].set(1.0)
    params["gamma"] = gamma
    params["beta"] = jnp.zeros((n_bn, 1, c_pad), jnp.float32)
    return params


def gcn_forward(params, x, edge_index=None, a_hat=None):
    """Returns (h, x) matching the PyTorch module's forward.

    Pass a precomputed `a_hat` (from prepare_adjacency) to cache the padded
    adjacency across calls when the graph is static.
    """
    n = x.shape[0]
    in_c, hid_c, out_c = params["dims"]
    c_pad = params["c_pad"]
    n_pad = _round_up(n, N_ALIGN)

    if a_hat is None:
        if edge_index is None:
            raise ValueError("gcn_forward needs edge_index or a precomputed a_hat")
        a_hat = prepare_adjacency(edge_index, n, n_pad)
    assert a_hat.shape == (n_pad, n_pad)

    x0 = _pad_to(x.astype(jnp.float32), (n_pad, c_pad)).astype(jnp.bfloat16)

    h_pad, x_pad = _gcn_fused_call(a_hat, x0, params,
                                   n_real=n, n_pad=n_pad, c_pad=c_pad)
    return (h_pad[:n, :hid_c].astype(jnp.float32),
            x_pad[:n, :out_c].astype(jnp.float32))


# ---------------------------------- main ----------------------------------- #

if __name__ == "__main__":
    key = jax.random.PRNGKey(0)
    k_x, k_e, k_p1, k_p2 = jax.random.split(key, 4)

    N, E = 16, 40
    IN_C, HID_C, OUT_C = 4, 32, 8
    NUM_LAYERS = 3

    x = jax.random.normal(k_x, (N, IN_C), jnp.float32)
    edge_index = jax.random.randint(k_e, (2, E), 0, N, jnp.int32)

    # Build/pad A_hat once (cacheable across forward calls for static graphs).
    a_hat = prepare_adjacency(edge_index, N)

    # linear_l=True path
    params_t = init_gcn_params(k_p1, IN_C, HID_C, OUT_C, NUM_LAYERS, True)
    h_t, x_t = gcn_forward(params_t, x, a_hat=a_hat)

    # linear_l=False path
    params_f = init_gcn_params(k_p2, IN_C, HID_C, OUT_C, NUM_LAYERS, False)
    h_f, x_f = gcn_forward(params_f, x, a_hat=a_hat)

    jax.block_until_ready((h_t, x_t, h_f, x_f))

    assert h_t.shape == (N, HID_C) and x_t.shape == (N, OUT_C)
    assert h_f.shape == (N, HID_C) and x_f.shape == (N, OUT_C)
    assert bool(jnp.all(jnp.isfinite(h_t))) and bool(jnp.all(jnp.isfinite(x_t)))
    assert bool(jnp.all(jnp.isfinite(h_f))) and bool(jnp.all(jnp.isfinite(x_f)))
    print("KERNEL_OK")
</pallas_src>

<mosaic_0001>
module attributes {stable_mosaic.version = 11 : i64} {
  func.func @_gcn_fused_kernel(%arg0: memref<256x256xbf16, #tpu.memory_space<any>>, %arg1: memref<256x128xbf16, #tpu.memory_space<vmem>>, %arg2: memref<128x128xbf16, #tpu.memory_space<vmem>>, %arg3: memref<1x128xf32, #tpu.memory_space<vmem>>, %arg4: memref<3x256x128xbf16, #tpu.memory_space<vmem>>, %arg5: memref<3x1x128xf32, #tpu.memory_space<vmem>>, %arg6: memref<3x1x128xf32, #tpu.memory_space<vmem>>, %arg7: memref<3x1x128xf32, #tpu.memory_space<vmem>>, %arg8: memref<128x128xbf16, #tpu.memory_space<vmem>>, %arg9: memref<1x128xf32, #tpu.memory_space<vmem>>, %arg10: memref<256x128xbf16, #tpu.memory_space<vmem>>, %arg11: memref<256x128xbf16, #tpu.memory_space<vmem>>, %arg12: memref<256x256xbf16, #tpu.memory_space<vmem>>, %arg13: memref<1x!tpu.dma_semaphore, #tpu.memory_space<semaphore_mem>>, %arg14: memref<256x256xbf16, #tpu.memory_space<vmem>>) attributes {dimension_semantics = [], scalar_prefetch = 0 : i64, scratch_operands = 3 : i64, tpu.core_type = #tpu.core_type<tc>} {
    %c0_i32 = arith.constant 0 : i32
    %c0_i32_0 = arith.constant 0 : i32
    %c0_i32_1 = arith.constant 0 : i32
    %0 = tpu.memref_slice %arg0[%c0_i32_0, %c0_i32_1] : memref<256x256xbf16, #tpu.memory_space<any>> -> memref<256x256xbf16, #tpu.memory_space<any>>
    %c0_i32_2 = arith.constant 0 : i32
    %c0_i32_3 = arith.constant 0 : i32
    %1 = tpu.memref_slice %arg12[%c0_i32_2, %c0_i32_3] : memref<256x256xbf16, #tpu.memory_space<vmem>> -> memref<256x256xbf16, #tpu.memory_space<vmem>>
    %2 = tpu.memref_slice %arg13[%c0_i32] : memref<1x!tpu.dma_semaphore, #tpu.memory_space<semaphore_mem>> -> memref<1x!tpu.dma_semaphore, #tpu.memory_space<semaphore_mem>>
    %3 = tpu.memref_squeeze %2 : memref<1x!tpu.dma_semaphore, #tpu.memory_space<semaphore_mem>> -> memref<!tpu.dma_semaphore, #tpu.memory_space<semaphore_mem>>
    tpu.enqueue_dma source(%0 : memref<256x256xbf16, #tpu.memory_space<any>>) target(%1 : memref<256x256xbf16, #tpu.memory_space<vmem>>) target_semaphore(%3 : memref<!tpu.dma_semaphore, #tpu.memory_space<semaphore_mem>>)
    %4 = tpu.iota {dimensions = array<i32: 0>} : vector<256x1xi32>
    %c16_i32 = arith.constant 16 : i32
    %5 = vector.broadcast %c16_i32 : i32 to vector<256x1xi32>
    %6 = arith.cmpi slt, %4, %5 : vector<256x1xi32>
    %7 = arith.extui %6 : vector<256x1xi1> to vector<256x1xi32>
    %8 = arith.sitofp %7 : vector<256x1xi32> to vector<256x1xf32>
    %c0 = arith.constant 0 : index
    %c0_4 = arith.constant 0 : index
    %9 = vector.load %arg1[%c0, %c0_4] : memref<256x128xbf16, #tpu.memory_space<vmem>>, vector<256x128xbf16>
    %c0_5 = arith.constant 0 : index
    %c0_6 = arith.constant 0 : index
    %10 = vector.load %arg2[%c0_5, %c0_6] : memref<128x128xbf16, #tpu.memory_space<vmem>>, vector<128x128xbf16>
    %cst = arith.constant dense<0.000000e+00> : vector<256x128xf32>
    %11 = tpu.matmul %9, %10, %cst {dimension_numbers = #tpu.dot_dimension_numbers<[1], [0], [0], [1], [0, 0, 1, 1], [], []>} : vector<256x128xbf16>, vector<128x128xbf16>, vector<256x128xf32> -> vector<256x128xf32>
    %c0_7 = arith.constant 0 : index
    %c0_8 = arith.constant 0 : index
    %12 = vector.load %arg3[%c0_7, %c0_8] : memref<1x128xf32, #tpu.memory_space<vmem>>, vector<1x128xf32>
    %13 = vector.broadcast %12 : vector<1x128xf32> to vector<256x128xf32>
    %14 = arith.addf %11, %13 : vector<256x128xf32>
    %cst_9 = arith.constant 0.000000e+00 : f32
    %15 = vector.broadcast %cst_9 : f32 to vector<256x128xf32>
    %16 = arith.maximumf %14, %15 : vector<256x128xf32>
    %17 = arith.truncf %16 : vector<256x128xf32> to vector<256x128xbf16>
    %c0_i32_10 = arith.constant 0 : i32
    %c0_i32_11 = arith.constant 0 : i32
    %c0_i32_12 = arith.constant 0 : i32
    %18 = tpu.memref_slice %arg0[%c0_i32_11, %c0_i32_12] : memref<256x256xbf16, #tpu.memory_space<any>> -> memref<256x256xbf16, #tpu.memory_space<any>>
    %c0_i32_13 = arith.constant 0 : i32
    %c0_i32_14 = arith.constant 0 : i32
    %19 = tpu.memref_slice %arg12[%c0_i32_13, %c0_i32_14] : memref<256x256xbf16, #tpu.memory_space<vmem>> -> memref<256x256xbf16, #tpu.memory_space<vmem>>
    %20 = tpu.memref_slice %arg13[%c0_i32_10] : memref<1x!tpu.dma_semaphore, #tpu.memory_space<semaphore_mem>> -> memref<1x!tpu.dma_semaphore, #tpu.memory_space<semaphore_mem>>
    %21 = tpu.memref_squeeze %20 : memref<1x!tpu.dma_semaphore, #tpu.memory_space<semaphore_mem>> -> memref<!tpu.dma_semaphore, #tpu.memory_space<semaphore_mem>>
    tpu.wait_dma2 semaphore(%21 : memref<!tpu.dma_semaphore, #tpu.memory_space<semaphore_mem>>) src(%18 : memref<256x256xbf16, #tpu.memory_space<any>>) dst(%19 : memref<256x256xbf16, #tpu.memory_space<vmem>>)
    %c0_15 = arith.constant 0 : index
    %c0_16 = arith.constant 0 : index
    %22 = vector.load %arg12[%c0_15, %c0_16] : memref<256x256xbf16, #tpu.memory_space<vmem>>, vector<256x256xbf16>
    %cst_17 = arith.constant dense<0.000000e+00> : vector<256x128xf32>
    %23 = tpu.matmul %22, %17, %cst_17 {dimension_numbers = #tpu.dot_dimension_numbers<[1], [0], [0], [1], [0, 0, 1, 1], [], []>} : vector<256x256xbf16>, vector<256x128xbf16>, vector<256x128xf32> -> vector<256x128xf32>
    %24 = arith.truncf %23 : vector<256x128xf32> to vector<256x128xbf16>
    %c0_18 = arith.constant 0 : index
    %c0_19 = arith.constant 0 : index
    %25 = vector.load %arg14[%c0_18, %c0_19] : memref<256x256xbf16, #tpu.memory_space<vmem>>, vector<256x128xbf16>
    tpu.vector_store %arg14[%c0_18, %c0_19], %24 {strides = array<i32>} : memref<256x256xbf16, #tpu.memory_space<vmem>>, vector<256x128xbf16>,
    %26 = arith.truncf %16 : vector<256x128xf32> to vector<256x128xbf16>
    %c0_20 = arith.constant 0 : index
    %c128 = arith.constant 128 : index
    %27 = vector.load %arg14[%c0_20, %c128] : memref<256x256xbf16, #tpu.memory_space<vmem>>, vector<256x128xbf16>
    tpu.vector_store %arg14[%c0_20, %c128], %26 {strides = array<i32>} : memref<256x256xbf16, #tpu.memory_space<vmem>>, vector<256x128xbf16>,
    %c0_21 = arith.constant 0 : index
    %c0_22 = arith.constant 0 : index
    %28 = vector.load %arg14[%c0_21, %c0_22] : memref<256x256xbf16, #tpu.memory_space<vmem>>, vector<256x256xbf16>
    %c0_23 = arith.constant 0 : index
    %c0_24 = arith.constant 0 : index
    %c0_25 = arith.constant 0 : index
    %29 = vector.load %arg4[%c0_23, %c0_24, %c0_25] : memref<3x256x128xbf16, #tpu.memory_space<vmem>>, vector<1x256x128xbf16>
    %30 = vector.shape_cast %29 : vector<1x256x128xbf16> to vector<256x128xbf16>
    %cst_26 = arith.constant dense<0.000000e+00> : vector<256x128xf32>
    %31 = tpu.matmul %28, %30, %cst_26 {dimension_numbers = #tpu.dot_dimension_numbers<[1], [0], [0], [1], [0, 0, 1, 1], [], []>} : vector<256x256xbf16>, vector<256x128xbf16>, vector<256x128xf32> -> vector<256x128xf32>
    %c0_27 = arith.constant 0 : index
    %c0_28 = arith.constant 0 : index
    %c0_29 = arith.constant 0 : index
    %32 = vector.load %arg5[%c0_27, %c0_28, %c0_29] : memref<3x1x128xf32, #tpu.memory_space<vmem>>, vector<1x1x128xf32>
    %33 = vector.shape_cast %32 : vector<1x1x128xf32> to vector<1x128xf32>
    %34 = vector.broadcast %33 : vector<1x128xf32> to vector<256x128xf32>
    %35 = arith.addf %31, %34 : vector<256x128xf32>
    %36 = vector.broadcast %8 : vector<256x1xf32> to vector<256x128xf32>
    %37 = arith.mulf %35, %36 : vector<256x128xf32>
    %cst_30 = arith.constant dense<0.000000e+00> : vector<128xf32>
    %38 = vector.multi_reduction <add>, %37, %cst_30 [0] : vector<256x128xf32> to vector<128xf32>
    %39 = vector.shape_cast %38 : vector<128xf32> to vector<1x128xf32>
    %cst_31 = arith.constant 6.250000e-02 : f32
    %40 = vector.broadcast %cst_31 : f32 to vector<1x128xf32>
    %41 = arith.mulf %39, %40 : vector<1x128xf32>
    %42 = arith.mulf %37, %35 : vector<256x128xf32>
    %cst_32 = arith.constant dense<0.000000e+00> : vector<128xf32>
    %43 = vector.multi_reduction <add>, %42, %cst_32 [0] : vector<256x128xf32> to vector<128xf32>
    %44 = vector.shape_cast %43 : vector<128xf32> to vector<1x128xf32>
    %cst_33 = arith.constant 6.250000e-02 : f32
    %45 = vector.broadcast %cst_33 : f32 to vector<1x128xf32>
    %46 = arith.mulf %44, %45 : vector<1x128xf32>
    %47 = arith.mulf %41, %41 : vector<1x128xf32>
    %48 = arith.subf %46, %47 : vector<1x128xf32>
    %49 = vector.broadcast %41 : vector<1x128xf32> to vector<256x128xf32>
    %50 = arith.subf %35, %49 : vector<256x128xf32>
    %cst_34 = arith.constant 9.99999974E-6 : f32
    %51 = vector.broadcast %cst_34 : f32 to vector<1x128xf32>
    %52 = arith.addf %48, %51 : vector<1x128xf32>
    %53 = math.rsqrt %52 : vector<1x128xf32>
    %54 = vector.broadcast %53 : vector<1x128xf32> to vector<256x128xf32>
    %55 = arith.mulf %50, %54 : vector<256x128xf32>
    %c0_35 = arith.constant 0 : index
    %c0_36 = arith.constant 0 : index
    %c0_37 = arith.constant 0 : index
    %56 = vector.load %arg6[%c0_35, %c0_36, %c0_37] : memref<3x1x128xf32, #tpu.memory_space<vmem>>, vector<1x1x128xf32>
    %57 = vector.shape_cast %56 : vector<1x1x128xf32> to vector<1x128xf32>
    %58 = vector.broadcast %57 : vector<1x128xf32> to vector<256x128xf32>
    %59 = arith.mulf %55, %58 : vector<256x128xf32>
    %c0_38 = arith.constant 0 : index
    %c0_39 = arith.constant 0 : index
    %c0_40 = arith.constant 0 : index
    %60 = vector.load %arg7[%c0_38, %c0_39, %c0_40] : memref<3x1x128xf32, #tpu.memory_space<vmem>>, vector<1x1x128xf32>
    %61 = vector.shape_cast %60 : vector<1x1x128xf32> to vector<1x128xf32>
    %62 = vector.broadcast %61 : vector<1x128xf32> to vector<256x128xf32>
    %63 = arith.addf %59, %62 : vector<256x128xf32>
    %cst_41 = arith.constant 0.000000e+00 : f32
    %64 = vector.broadcast %cst_41 : f32 to vector<256x128xf32>
    %65 = arith.maximumf %63, %64 : vector<256x128xf32>
    %66 = arith.truncf %65 : vector<256x128xf32> to vector<256x128xbf16>
    %c0_42 = arith.constant 0 : index
    %c0_43 = arith.constant 0 : index
    %67 = vector.load %arg12[%c0_42, %c0_43] : memref<256x256xbf16, #tpu.memory_space<vmem>>, vector<256x256xbf16>
    %cst_44 = arith.constant dense<0.000000e+00> : vector<256x128xf32>
    %68 = tpu.matmul %67, %66, %cst_44 {dimension_numbers = #tpu.dot_dimension_numbers<[1], [0], [0], [1], [0, 0, 1, 1], [], []>} : vector<256x256xbf16>, vector<256x128xbf16>, vector<256x128xf32> -> vector<256x128xf32>
    %69 = arith.truncf %68 : vector<256x128xf32> to vector<256x128xbf16>
    %c0_45 = arith.constant 0 : index
    %c0_46 = arith.constant 0 : index
    %70 = vector.load %arg14[%c0_45, %c0_46] : memref<256x256xbf16, #tpu.memory_space<vmem>>, vector<256x128xbf16>
    tpu.vector_store %arg14[%c0_45, %c0_46], %69 {strides = array<i32>} : memref<256x256xbf16, #tpu.memory_space<vmem>>, vector<256x128xbf16>,
    %71 = arith.truncf %35 : vector<256x128xf32> to vector<256x128xbf16>
    %c0_47 = arith.constant 0 : index
    %c128_48 = arith.constant 128 : index
    %72 = vector.load %arg14[%c0_47, %c128_48] : memref<256x256xbf16, #tpu.memory_space<vmem>>, vector<256x128xbf16>
    tpu.vector_store %arg14[%c0_47, %c128_48], %71 {strides = array<i32>} : memref<256x256xbf16, #tpu.memory_space<vmem>>, vector<256x128xbf16>,
    %c0_49 = arith.constant 0 : index
    %c0_50 = arith.constant 0 : index
    %73 = vector.load %arg14[%c0_49, %c0_50] : memref<256x256xbf16, #tpu.memory_space<vmem>>, vector<256x256xbf16>
    %c1 = arith.constant 1 : index
    %c0_51 = arith.constant 0 : index
    %c0_52 = arith.constant 0 : index
    %74 = vector.load %arg4[%c1, %c0_51, %c0_52] : memref<3x256x128xbf16, #tpu.memory_space<vmem>>, vector<1x256x128xbf16>
    %75 = vector.shape_cast %74 : vector<1x256x128xbf16> to vector<256x128xbf16>
    %cst_53 = arith.constant dense<0.000000e+00> : vector<256x128xf32>
    %76 = tpu.matmul %73, %75, %cst_53 {dimension_numbers = #tpu.dot_dimension_numbers<[1], [0], [0], [1], [0, 0, 1, 1], [], []>} : vector<256x256xbf16>, vector<256x128xbf16>, vector<256x128xf32> -> vector<256x128xf32>
    %c1_54 = arith.constant 1 : index
    %c0_55 = arith.constant 0 : index
    %c0_56 = arith.constant 0 : index
    %77 = vector.load %arg5[%c1_54, %c0_55, %c0_56] : memref<3x1x128xf32, #tpu.memory_space<vmem>>, vector<1x1x128xf32>
    %78 = vector.shape_cast %77 : vector<1x1x128xf32> to vector<1x128xf32>
    %79 = vector.broadcast %78 : vector<1x128xf32> to vector<256x128xf32>
    %80 = arith.addf %76, %79 : vector<256x128xf32>
    %81 = vector.broadcast %8 : vector<256x1xf32> to vector<256x128xf32>
    %82 = arith.mulf %80, %81 : vector<256x128xf32>
    %cst_57 = arith.constant dense<0.000000e+00> : vector<128xf32>
    %83 = vector.multi_reduction <add>, %82, %cst_57 [0] : vector<256x128xf32> to vector<128xf32>
    %84 = vector.shape_cast %83 : vector<128xf32> to vector<1x128xf32>
    %cst_58 = arith.constant 6.250000e-02 : f32
    %85 = vector.broadcast %cst_58 : f32 to vector<1x128xf32>
    %86 = arith.mulf %84, %85 : vector<1x128xf32>
    %87 = arith.mulf %82, %80 : vector<256x128xf32>
    %cst_59 = arith.constant dense<0.000000e+00> : vector<128xf32>
    %88 = vector.multi_reduction <add>, %87, %cst_59 [0] : vector<256x128xf32> to vector<128xf32>
    %89 = vector.shape_cast %88 : vector<128xf32> to vector<1x128xf32>
    %cst_60 = arith.constant 6.250000e-02 : f32
    %90 = vector.broadcast %cst_60 : f32 to vector<1x128xf32>
    %91 = arith.mulf %89, %90 : vector<1x128xf32>
    %92 = arith.mulf %86, %86 : vector<1x128xf32>
    %93 = arith.subf %91, %92 : vector<1x128xf32>
    %94 = vector.broadcast %86 : vector<1x128xf32> to vector<256x128xf32>
    %95 = arith.subf %80, %94 : vector<256x128xf32>
    %cst_61 = arith.constant 9.99999974E-6 : f32
    %96 = vector.broadcast %cst_61 : f32 to vector<1x128xf32>
    %97 = arith.addf %93, %96 : vector<1x128xf32>
    %98 = math.rsqrt %97 : vector<1x128xf32>
    %99 = vector.broadcast %98 : vector<1x128xf32> to vector<256x128xf32>
    %100 = arith.mulf %95, %99 : vector<256x128xf32>
    %c1_62 = arith.constant 1 : index
    %c0_63 = arith.constant 0 : index
    %c0_64 = arith.constant 0 : index
    %101 = vector.load %arg6[%c1_62, %c0_63, %c0_64] : memref<3x1x128xf32, #tpu.memory_space<vmem>>, vector<1x1x128xf32>
    %102 = vector.shape_cast %101 : vector<1x1x128xf32> to vector<1x128xf32>
    %103 = vector.broadcast %102 : vector<1x128xf32> to vector<256x128xf32>
    %104 = arith.mulf %100, %103 : vector<256x128xf32>
    %c1_65 = arith.constant 1 : index
    %c0_66 = arith.constant 0 : index
    %c0_67 = arith.constant 0 : index
    %105 = vector.load %arg7[%c1_65, %c0_66, %c0_67] : memref<3x1x128xf32, #tpu.memory_space<vmem>>, vector<1x1x128xf32>
    %106 = vector.shape_cast %105 : vector<1x1x128xf32> to vector<1x128xf32>
    %107 = vector.broadcast %106 : vector<1x128xf32> to vector<256x128xf32>
    %108 = arith.addf %104, %107 : vector<256x128xf32>
    %cst_68 = arith.constant 0.000000e+00 : f32
    %109 = vector.broadcast %cst_68 : f32 to vector<256x128xf32>
    %110 = arith.maximumf %108, %109 : vector<256x128xf32>
    %111 = arith.truncf %110 : vector<256x128xf32> to vector<256x128xbf16>
    %c0_69 = arith.constant 0 : index
    %c0_70 = arith.constant 0 : index
    %112 = vector.load %arg12[%c0_69, %c0_70] : memref<256x256xbf16, #tpu.memory_space<vmem>>, vector<256x256xbf16>
    %cst_71 = arith.constant dense<0.000000e+00> : vector<256x128xf32>
    %113 = tpu.matmul %112, %111, %cst_71 {dimension_numbers = #tpu.dot_dimension_numbers<[1], [0], [0], [1], [0, 0, 1, 1], [], []>} : vector<256x256xbf16>, vector<256x128xbf16>, vector<256x128xf32> -> vector<256x128xf32>
    %114 = arith.truncf %113 : vector<256x128xf32> to vector<256x128xbf16>
    %c0_72 = arith.constant 0 : index
    %c0_73 = arith.constant 0 : index
    %115 = vector.load %arg14[%c0_72, %c0_73] : memref<256x256xbf16, #tpu.memory_space<vmem>>, vector<256x128xbf16>
    tpu.vector_store %arg14[%c0_72, %c0_73], %114 {strides = array<i32>} : memref<256x256xbf16, #tpu.memory_space<vmem>>, vector<256x128xbf16>,
    %116 = arith.truncf %80 : vector<256x128xf32> to vector<256x128xbf16>
    %c0_74 = arith.constant 0 : index
    %c128_75 = arith.constant 128 : index
    %117 = vector.load %arg14[%c0_74, %c128_75] : memref<256x256xbf16, #tpu.memory_space<vmem>>, vector<256x128xbf16>
    tpu.vector_store %arg14[%c0_74, %c128_75], %116 {strides = array<i32>} : memref<256x256xbf16, #tpu.memory_space<vmem>>, vector<256x128xbf16>,
    %c0_76 = arith.constant 0 : index
    %c0_77 = arith.constant 0 : index
    %118 = vector.load %arg14[%c0_76, %c0_77] : memref<256x256xbf16, #tpu.memory_space<vmem>>, vector<256x256xbf16>
    %c2 = arith.constant 2 : index
    %c0_78 = arith.constant 0 : index
    %c0_79 = arith.constant 0 : index
    %119 = vector.load %arg4[%c2, %c0_78, %c0_79] : memref<3x256x128xbf16, #tpu.memory_space<vmem>>, vector<1x256x128xbf16>
    %120 = vector.shape_cast %119 : vector<1x256x128xbf16> to vector<256x128xbf16>
    %cst_80 = arith.constant dense<0.000000e+00> : vector<256x128xf32>
    %121 = tpu.matmul %118, %120, %cst_80 {dimension_numbers = #tpu.dot_dimension_numbers<[1], [0], [0], [1], [0, 0, 1, 1], [], []>} : vector<256x256xbf16>, vector<256x128xbf16>, vector<256x128xf32> -> vector<256x128xf32>
    %c2_81 = arith.constant 2 : index
    %c0_82 = arith.constant 0 : index
    %c0_83 = arith.constant 0 : index
    %122 = vector.load %arg5[%c2_81, %c0_82, %c0_83] : memref<3x1x128xf32, #tpu.memory_space<vmem>>, vector<1x1x128xf32>
    %123 = vector.shape_cast %122 : vector<1x1x128xf32> to vector<1x128xf32>
    %124 = vector.broadcast %123 : vector<1x128xf32> to vector<256x128xf32>
    %125 = arith.addf %121, %124 : vector<256x128xf32>
    %126 = vector.broadcast %8 : vector<256x1xf32> to vector<256x128xf32>
    %127 = arith.mulf %125, %126 : vector<256x128xf32>
    %cst_84 = arith.constant dense<0.000000e+00> : vector<128xf32>
    %128 = vector.multi_reduction <add>, %127, %cst_84 [0] : vector<256x128xf32> to vector<128xf32>
    %129 = vector.shape_cast %128 : vector<128xf32> to vector<1x128xf32>
    %cst_85 = arith.constant 6.250000e-02 : f32
    %130 = vector.broadcast %cst_85 : f32 to vector<1x128xf32>
    %131 = arith.mulf %129, %130 : vector<1x128xf32>
    %132 = arith.mulf %127, %125 : vector<256x128xf32>
    %cst_86 = arith.constant dense<0.000000e+00> : vector<128xf32>
    %133 = vector.multi_reduction <add>, %132, %cst_86 [0] : vector<256x128xf32> to vector<128xf32>
    %134 = vector.shape_cast %133 : vector<128xf32> to vector<1x128xf32>
    %cst_87 = arith.constant 6.250000e-02 : f32
    %135 = vector.broadcast %cst_87 : f32 to vector<1x128xf32>
    %136 = arith.mulf %134, %135 : vector<1x128xf32>
    %137 = arith.mulf %131, %131 : vector<1x128xf32>
    %138 = arith.subf %136, %137 : vector<1x128xf32>
    %139 = vector.broadcast %131 : vector<1x128xf32> to vector<256x128xf32>
    %140 = arith.subf %125, %139 : vector<256x128xf32>
    %cst_88 = arith.constant 9.99999974E-6 : f32
    %141 = vector.broadcast %cst_88 : f32 to vector<1x128xf32>
    %142 = arith.addf %138, %141 : vector<1x128xf32>
    %143 = math.rsqrt %142 : vector<1x128xf32>
    %144 = vector.broadcast %143 : vector<1x128xf32> to vector<256x128xf32>
    %145 = arith.mulf %140, %144 : vector<256x128xf32>
    %c2_89 = arith.constant 2 : index
    %c0_90 = arith.constant 0 : index
    %c0_91 = arith.constant 0 : index
    %146 = vector.load %arg6[%c2_89, %c0_90, %c0_91] : memref<3x1x128xf32, #tpu.memory_space<vmem>>, vector<1x1x128xf32>
    %147 = vector.shape_cast %146 : vector<1x1x128xf32> to vector<1x128xf32>
    %148 = vector.broadcast %147 : vector<1x128xf32> to vector<256x128xf32>
    %149 = arith.mulf %145, %148 : vector<256x128xf32>
    %c2_92 = arith.constant 2 : index
    %c0_93 = arith.constant 0 : index
    %c0_94 = arith.constant 0 : index
    %150 = vector.load %arg7[%c2_92, %c0_93, %c0_94] : memref<3x1x128xf32, #tpu.memory_space<vmem>>, vector<1x1x128xf32>
    %151 = vector.shape_cast %150 : vector<1x1x128xf32> to vector<1x128xf32>
    %152 = vector.broadcast %151 : vector<1x128xf32> to vector<256x128xf32>
    %153 = arith.addf %149, %152 : vector<256x128xf32>
    %cst_95 = arith.constant 0.000000e+00 : f32
    %154 = vector.broadcast %cst_95 : f32 to vector<256x128xf32>
    %155 = arith.maximumf %153, %154 : vector<256x128xf32>
    %156 = arith.truncf %155 : vector<256x128xf32> to vector<256x128xbf16>
    %c0_96 = arith.constant 0 : index
    %c0_97 = arith.constant 0 : index
    %157 = vector.load %arg8[%c0_96, %c0_97] : memref<128x128xbf16, #tpu.memory_space<vmem>>, vector<128x128xbf16>
    %cst_98 = arith.constant dense<0.000000e+00> : vector<256x128xf32>
    %158 = tpu.matmul %156, %157, %cst_98 {dimension_numbers = #tpu.dot_dimension_numbers<[1], [0], [0], [1], [0, 0, 1, 1], [], []>} : vector<256x128xbf16>, vector<128x128xbf16>, vector<256x128xf32> -> vector<256x128xf32>
    %c0_99 = arith.constant 0 : index
    %c0_100 = arith.constant 0 : index
    %159 = vector.load %arg9[%c0_99, %c0_100] : memref<1x128xf32, #tpu.memory_space<vmem>>, vector<1x128xf32>
    %160 = vector.broadcast %159 : vector<1x128xf32> to vector<256x128xf32>
    %161 = arith.addf %158, %160 : vector<256x128xf32>
    %162 = arith.truncf %125 : vector<256x128xf32> to vector<256x128xbf16>
    %c0_101 = arith.constant 0 : index
    %c0_102 = arith.constant 0 : index
    %163 = vector.load %arg10[%c0_101, %c0_102] : memref<256x128xbf16, #tpu.memory_space<vmem>>, vector<256x128xbf16>
    tpu.vector_store %arg10[%c0_101, %c0_102], %162 {strides = array<i32>} : memref<256x128xbf16, #tpu.memory_space<vmem>>, vector<256x128xbf16>,
    %164 = arith.truncf %161 : vector<256x128xf32> to vector<256x128xbf16>
    %c0_103 = arith.constant 0 : index
    %c0_104 = arith.constant 0 : index
    %165 = vector.load %arg11[%c0_103, %c0_104] : memref<256x128xbf16, #tpu.memory_space<vmem>>, vector<256x128xbf16>
    tpu.vector_store %arg11[%c0_103, %c0_104], %164 {strides = array<i32>} : memref<256x128xbf16, #tpu.memory_space<vmem>>, vector<256x128xbf16>,
    return
  }
}

</mosaic_0001>

<llo_original>
// kernel: tpu_custom_call.1
$region0: #{tpu_custom_call.1}
  #allocation0 [shape = 'u32[]', space=smem, size = 0x4, offset = 0x4, fixed_abs, tag = 'smem constant byte address 0x4 - core index']
  #allocation1 [shape = 'u32[144,128]{1,0:T(1,128)}', space=vmem, size = 0x12000, scoped, tag = 'internal scratch']
  #allocation2 [shape = 'bf16[256,256]{1,0:T(8,128)(2,1)}', space=vmem, size = 0x20000, scoped, tag = 'scratch operand']
  #allocation3 [shape = 's32[1]{0}', space=sflag, size = 0x4, scoped, tag = 'scratch operand']
  #allocation4 [shape = 'bf16[256,256]{1,0:T(8,128)(2,1)}', space=vmem, size = 0x20000, scoped, tag = 'scratch operand']
  #allocation17 [shape = 's32[]', space=sflag, size = 0x4, offset = 0, fixed_abs, tag = 'sflag constant byte address 0x0 - dummy sync flag']
  #allocation18 [shape = 's32[]', space=sflag, size = 0x4, offset = 0, fixed_abs, tag = 'sflag constant byte address 0x0 - dummy sync flag']
  #allocation19 [shape = 'u32[]', space=smem, size = 0x4, offset = 0x44, fixed_abs, tag = 'smem constant byte address 0x44 - assertion arg 0']
  #allocation20 [shape = 'u32[]', space=smem, size = 0x4, offset = 0x48, fixed_abs, tag = 'smem constant byte address 0x48 - assertion arg 1']
  %s0 = inlined_call_operand.hbm [shape: bf16[256,256], index: 0, kind: input, shape index: {}]
  %s1 = inlined_call_operand.hbm [shape: bf16[256,128], index: 1, kind: input, shape index: {}]
  %s2 = inlined_call_operand.hbm [shape: bf16[128,128], index: 2, kind: input, shape index: {}]
  %s3 = inlined_call_operand.hbm [shape: f32[1,128], index: 3, kind: input, shape index: {}]
  %s4 = inlined_call_operand.hbm [shape: bf16[3,256,128], index: 4, kind: input, shape index: {}]
  %s5 = inlined_call_operand.vmem [shape: f32[3,1,128], index: 5, kind: input, shape index: {}]
  %s6 = inlined_call_operand.vmem [shape: f32[3,1,128], index: 6, kind: input, shape index: {}]
  %s7 = inlined_call_operand.vmem [shape: f32[3,1,128], index: 7, kind: input, shape index: {}]
  %s8 = inlined_call_operand.hbm [shape: bf16[128,128], index: 8, kind: input, shape index: {}]
  %s9 = inlined_call_operand.vmem [shape: f32[1,128], index: 9, kind: input, shape index: {}]
  %s10 = inlined_call_operand.hbm [shape: bf16[256,128], index: 10, kind: output, shape index: {0}]
  %s11 = inlined_call_operand.hbm [shape: bf16[256,128], index: 11, kind: output, shape index: {1}]
  %12 = xla_tuple %s10, %s11
  %s13 = sld [smem:[#allocation0]]
  $region78: #{tpu_custom_call.1} parent=0
    _
  %s15 = ssub.s32 1, %s13
  %s16 = scalar_select 0, %s15, %s13
  $region1: #{tpu_custom_call.1} parent=0
    #allocation5 [shape = 'u8[65536]{0}', space=vmem, size = 0x10000, scoped, tag = 'input window, operand 1, single buffered']
    #allocation6 [shape = 's32[1]{0}', space=sflag, size = 0x4, scoped, tag = 'scoped memory for tpu_custom_call.1']
    #allocation7 [shape = 's32[1]{0}', space=sflag, size = 0x4, scoped, tag = 'scoped memory for tpu_custom_call.1']
    #allocation8 [shape = 'u8[32768]{0}', space=vmem, size = 0x8000, scoped, tag = 'input window, operand 2, single buffered']
    #allocation9 [shape = 's32[1]{0}', space=sflag, size = 0x4, scoped, tag = 'scoped memory for tpu_custom_call.1']
    #allocation10 [shape = 'u8[512]{0}', space=vmem, size = 0x400, scoped, tag = 'input window, operand 3, single buffered']
    #allocation11 [shape = 'u8[196608]{0}', space=vmem, size = 0x30000, scoped, tag = 'input window, operand 4, single buffered']
    #allocation12 [shape = 's32[1]{0}', space=sflag, size = 0x4, scoped, tag = 'scoped memory for tpu_custom_call.1']
    #allocation13 [shape = 'u8[32768]{0}', space=vmem, size = 0x8000, scoped, tag = 'input window, operand 8, single buffered']
    #allocation14 [shape = 'u8[65536]{0}', space=vmem, size = 0x10000, scoped, tag = 'output window, operand 0, single buffered']
    #allocation15 [shape = 'u8[65536]{0}', space=vmem, size = 0x10000, scoped, tag = 'output window, operand 1, single buffered']
    #allocation16 [shape = 's32[1]{0}', space=sflag, size = 0x4, scoped, tag = 'scoped memory for tpu_custom_call.1']
    %17 = vsyncpa [#allocation6], 0
    %18 = vsyncpa [#allocation9], 0
    %19 = vsyncpa [#allocation12], 0
    %20 = vsyncpa [#allocation7], 0
    %21 = vsyncpa [#allocation16], 0
    // Predicated region
    $region2: #{tpu_custom_call.1} parent=1 // pred_check
      _
    $region3: #{tpu_custom_call.1} parent=1 // pred_check_branch
      %23 = sbr.rel (0) target = $region5
    $region4: #{tpu_custom_call.1} parent=1 // pred_region
      %s25 = ssub.s32 2048, 2048
      %26 = vsyncadd [#allocation6], %s25
      %s27 = sshll.u32 [#allocation5], 4
      %s28 = int_to_ptr.vmem [resolvable:$true] %s27
      %33 = dma.hbm_to_vmem [thread:$0]  %s1, 2048, %s28, [#allocation6], 64, 64, 4
    $region5: #{tpu_custom_call.1} parent=1 // pred_fallthru
      _
    // Predicated region
    $region6: #{tpu_custom_call.1} parent=1 // pred_check
      _
    $region7: #{tpu_custom_call.1} parent=1 // pred_check_branch
      %35 = sbr.rel (0) target = $region9
    $region8: #{tpu_custom_call.1} parent=1 // pred_region
      %s37 = ssub.s32 1024, 1024
      %38 = vsyncadd [#allocation9], %s37
      %s39 = sshll.u32 [#allocation8], 4
      %s40 = int_to_ptr.vmem [resolvable:$true] %s39
      %45 = dma.hbm_to_vmem [thread:$0]  %s2, 1024, %s40, [#allocation9], 64, 64, 4
    $region9: #{tpu_custom_call.1} parent=1 // pred_fallthru
      _
    // Predicated region
    $region10: #{tpu_custom_call.1} parent=1 // pred_check
      _
    $region11: #{tpu_custom_call.1} parent=1 // pred_check_branch
      %47 = sbr.rel (0) target = $region13
    $region12: #{tpu_custom_call.1} parent=1 // pred_region
      %s49 = ssub.s32 16, 16
      %50 = vsyncadd [#allocation9], %s49
      %s52 = sshll.u32 [#allocation10], 4
      %s53 = int_to_ptr.vmem [resolvable:$true] %s52
      %55 = dma.hbm_to_vmem [thread:$0]  %s3, 16, %s53, [#allocation9]
    $region13: #{tpu_custom_call.1} parent=1 // pred_fallthru
      _
    // Predicated region
    $region14: #{tpu_custom_call.1} parent=1 // pred_check
      _
    $region15: #{tpu_custom_call.1} parent=1 // pred_check_branch
      %57 = sbr.rel (0) target = $region17
    $region16: #{tpu_custom_call.1} parent=1 // pred_region
      %s59 = ssub.s32 6144, 6144
      %60 = vsyncadd [#allocation12], %s59
      %s61 = sshll.u32 [#allocation11], 4
      %s62 = int_to_ptr.vmem [resolvable:$true] %s61
      %67 = dma.hbm_to_vmem [thread:$0]  %s4, 6144, %s62, [#allocation12], 64, 64, 4
    $region17: #{tpu_custom_call.1} parent=1 // pred_fallthru
      _
    // Predicated region
    $region18: #{tpu_custom_call.1} parent=1 // pred_check
      _
    $region19: #{tpu_custom_call.1} parent=1 // pred_check_branch
      %69 = sbr.rel (0) target = $region21
    $region20: #{tpu_custom_call.1} parent=1 // pred_region
      _
    $region21: #{tpu_custom_call.1} parent=1 // pred_fallthru
      _
    // Predicated region
    $region22: #{tpu_custom_call.1} parent=1 // pred_check
      _
    $region23: #{tpu_custom_call.1} parent=1 // pred_check_branch
      %71 = sbr.rel (0) target = $region25
    $region24: #{tpu_custom_call.1} parent=1 // pred_region
      _
    $region25: #{tpu_custom_call.1} parent=1 // pred_fallthru
      _
    // Predicated region
    $region26: #{tpu_custom_call.1} parent=1 // pred_check
      _
    $region27: #{tpu_custom_call.1} parent=1 // pred_check_branch
      %73 = sbr.rel (0) target = $region29
    $region28: #{tpu_custom_call.1} parent=1 // pred_region
      _
    $region29: #{tpu_custom_call.1} parent=1 // pred_fallthru
      _
    // Predicated region
    $region30: #{tpu_custom_call.1} parent=1 // pred_check
      _
    $region31: #{tpu_custom_call.1} parent=1 // pred_check_branch
      %75 = sbr.rel (0) target = $region33
    $region32: #{tpu_custom_call.1} parent=1 // pred_region
      %s77 = ssub.s32 1024, 1024
      %78 = vsyncadd [#allocation12], %s77
      %s79 = sshll.u32 [#allocation13], 4
      %s80 = int_to_ptr.vmem [resolvable:$true] %s79
      %85 = dma.hbm_to_vmem [thread:$0]  %s8, 1024, %s80, [#allocation12], 64, 64, 4
    $region33: #{tpu_custom_call.1} parent=1 // pred_fallthru
      _
    // Predicated region
    $region34: #{tpu_custom_call.1} parent=1 // pred_check
      _
    $region35: #{tpu_custom_call.1} parent=1 // pred_check_branch
      %87 = sbr.rel (0) target = $region37
    $region36: #{tpu_custom_call.1} parent=1 // pred_region
      _
    $region37: #{tpu_custom_call.1} parent=1 // pred_fallthru
      _
    // Predicated region
    $region38: #{tpu_custom_call.1} parent=1 // pred_check
      _
    $region39: #{tpu_custom_call.1} parent=1 // pred_check_branch
      %89 = sbr.rel (0) target = $region41
    $region40: #{tpu_custom_call.1} parent=1 // pred_region
      %90 = dma.done [#allocation6], 2048
    $region41: #{tpu_custom_call.1} parent=1 // pred_fallthru
      _
    // Predicated region
    $region42: #{tpu_custom_call.1} parent=1 // pred_check
      _
    $region43: #{tpu_custom_call.1} parent=1 // pred_check_branch
      %92 = sbr.rel (0) target = $region45
    $region44: #{tpu_custom_call.1} parent=1 // pred_region
      %93 = dma.done [#allocation9], 1024
    $region45: #{tpu_custom_call.1} parent=1 // pred_fallthru
      _
    // Predicated region
    $region46: #{tpu_custom_call.1} parent=1 // pred_check
      _
    $region47: #{tpu_custom_call.1} parent=1 // pred_check_branch
      %95 = sbr.rel (0) target = $region49
    $region48: #{tpu_custom_call.1} parent=1 // pred_region
      %96 = dma.done [#allocation9], 16
    $region49: #{tpu_custom_call.1} parent=1 // pred_fallthru
      _
    // Predicated region
    $region50: #{tpu_custom_call.1} parent=1 // pred_check
      _
    $region51: #{tpu_custom_call.1} parent=1 // pred_check_branch
      %98 = sbr.rel (0) target = $region53
    $region52: #{tpu_custom_call.1} parent=1 // pred_region
      %99 = dma.done [#allocation12], 6144
    $region53: #{tpu_custom_call.1} parent=1 // pred_fallthru
      _
    // Predicated region
    $region54: #{tpu_custom_call.1} parent=1 // pred_check
      _
    $region55: #{tpu_custom_call.1} parent=1 // pred_check_branch
      %101 = sbr.rel (0) target = $region57
    $region56: #{tpu_custom_call.1} parent=1 // pred_region
      %102 = dma.done [#allocation12], 1024
    $region57: #{tpu_custom_call.1} parent=1 // pred_fallthru
      _
    // Predicated region
    $region58: #{tpu_custom_call.1} parent=1 // pred_check
      _
    $region59: #{tpu_custom_call.1} parent=1 // pred_check_branch
      %105 = sbr.rel target = $region61
    $region60: #{tpu_custom_call.1} parent=1 // pred_region
      %106 = sst [smem:[#allocation19]] [#allocation18]
      %107 = sst [smem:[#allocation20]] [#allocation17]
    $region61: #{tpu_custom_call.1} parent=1 // pred_fallthru
      _
    %109 = shalt.err (0)
    %s111 = sshll.u32 [#allocation2], 4
    %s112 = int_to_ptr.vmem [resolvable:$true] %s111
    %114 = dma.hbm_to_vmem [thread:$0]  %s0, 4096, %s112, [#allocation3]
    %v115 = vlaneseq
    %v116 = vshrl.u32 %v115, 7
    %v117 = vadd.s32 %v116, 8
    %v118 = vadd.s32 %v116, 16
    %v119 = vadd.s32 %v116, 24
    %v120 = vadd.s32 %v116, 32
    %v121 = vadd.s32 %v116, 40
    %v122 = vadd.s32 %v116, 48
    %v123 = vadd.s32 %v116, 56
    %v124 = vadd.s32 %v116, 64
    %v125 = vadd.s32 %v116, 72
    %v126 = vadd.s32 %v116, 80
    %v127 = vadd.s32 %v116, 88
    %v128 = vadd.s32 %v116, 96
    %v129 = vadd.s32 %v116, 104
    %v130 = vadd.s32 %v116, 112
    %v131 = vadd.s32 %v116, 120
    %v132 = vadd.s32 %v116, 128
    %v133 = vadd.s32 %v116, 136
    %v134 = vadd.s32 %v116, 144
    %v135 = vadd.s32 %v116, 152
    %v136 = vadd.s32 %v116, 160
    %v137 = vadd.s32 %v116, 168
    %v138 = vadd.s32 %v116, 176
    %v139 = vadd.s32 %v116, 184
    %v140 = vadd.s32 %v116, 192
    %v141 = vadd.s32 %v116, 200
    %v142 = vadd.s32 %v116, 208
    %v143 = vadd.s32 %v116, 216
    %v144 = vadd.s32 %v116, 224
    %v145 = vadd.s32 %v116, 232
    %v146 = vadd.s32 %v116, 240
    %v147 = vadd.s32 %v116, 248
    %vm148 = vcmp.lt.s32.totalorder %v116, 16
    %vm149 = vcmp.lt.s32.totalorder %v117, 16
    %vm150 = vcmp.lt.s32.totalorder %v118, 16
    %vm151 = vcmp.lt.s32.totalorder %v119, 16
    %vm152 = vcmp.lt.s32.totalorder %v120, 16
    %vm153 = vcmp.lt.s32.totalorder %v121, 16
    %vm154 = vcmp.lt.s32.totalorder %v122, 16
    %vm155 = vcmp.lt.s32.totalorder %v123, 16
    %vm156 = vcmp.lt.s32.totalorder %v124, 16
    %vm157 = vcmp.lt.s32.totalorder %v125, 16
    %vm158 = vcmp.lt.s32.totalorder %v126, 16
    %vm159 = vcmp.lt.s32.totalorder %v127, 16
    %vm160 = vcmp.lt.s32.totalorder %v128, 16
    %vm161 = vcmp.lt.s32.totalorder %v129, 16
    %vm162 = vcmp.lt.s32.totalorder %v130, 16
    %vm163 = vcmp.lt.s32.totalorder %v131, 16
    %vm164 = vcmp.lt.s32.totalorder %v132, 16
    %vm165 = vcmp.lt.s32.totalorder %v133, 16
    %vm166 = vcmp.lt.s32.totalorder %v134, 16
    %vm167 = vcmp.lt.s32.totalorder %v135, 16
    %vm168 = vcmp.lt.s32.totalorder %v136, 16
    %vm169 = vcmp.lt.s32.totalorder %v137, 16
    %vm170 = vcmp.lt.s32.totalorder %v138, 16
    %vm171 = vcmp.lt.s32.totalorder %v139, 16
    %vm172 = vcmp.lt.s32.totalorder %v140, 16
    %vm173 = vcmp.lt.s32.totalorder %v141, 16
    %vm174 = vcmp.lt.s32.totalorder %v142, 16
    %vm175 = vcmp.lt.s32.totalorder %v143, 16
    %vm176 = vcmp.lt.s32.totalorder %v144, 16
    %vm177 = vcmp.lt.s32.totalorder %v145, 16
    %vm178 = vcmp.lt.s32.totalorder %v146, 16
    %vm179 = vcmp.lt.s32.totalorder %v147, 16
    %v180 = vsel %vm148, 1, 0
    %v181 = vsel %vm149, 1, 0
    %v182 = vsel %vm150, 1, 0
    %v183 = vsel %vm151, 1, 0
    %v184 = vsel %vm152, 1, 0
    %v185 = vsel %vm153, 1, 0
    %v186 = vsel %vm154, 1, 0
    %v187 = vsel %vm155, 1, 0
    %v188 = vsel %vm156, 1, 0
    %v189 = vsel %vm157, 1, 0
    %v190 = vsel %vm158, 1, 0
    %v191 = vsel %vm159, 1, 0
    %v192 = vsel %vm160, 1, 0
    %v193 = vsel %vm161, 1, 0
    %v194 = vsel %vm162, 1, 0
    %v195 = vsel %vm163, 1, 0
    %v196 = vsel %vm164, 1, 0
    %v197 = vsel %vm165, 1, 0
    %v198 = vsel %vm166, 1, 0
    %v199 = vsel %vm167, 1, 0
    %v200 = vsel %vm168, 1, 0
    %v201 = vsel %vm169, 1, 0
    %v202 = vsel %vm170, 1, 0
    %v203 = vsel %vm171, 1, 0
    %v204 = vsel %vm172, 1, 0
    %v205 = vsel %vm173, 1, 0
    %v206 = vsel %vm174, 1, 0
    %v207 = vsel %vm175, 1, 0
    %v208 = vsel %vm176, 1, 0
    %v209 = vsel %vm177, 1, 0
    %v210 = vsel %vm178, 1, 0
    %v211 = vsel %vm179, 1, 0
    %v212 = vcvt.s32.f32 %v180
    %v213 = vcvt.s32.f32 %v181
    %v214 = vcvt.s32.f32 %v182
    %v215 = vcvt.s32.f32 %v183
    %v216 = vcvt.s32.f32 %v184
    %v217 = vcvt.s32.f32 %v185
    %v218 = vcvt.s32.f32 %v186
    %v219 = vcvt.s32.f32 %v187
    %v220 = vcvt.s32.f32 %v188
    %v221 = vcvt.s32.f32 %v189
    %v222 = vcvt.s32.f32 %v190
    %v223 = vcvt.s32.f32 %v191
    %v224 = vcvt.s32.f32 %v192
    %v225 = vcvt.s32.f32 %v193
    %v226 = vcvt.s32.f32 %v194
    %v227 = vcvt.s32.f32 %v195
    %v228 = vcvt.s32.f32 %v196
    %v229 = vcvt.s32.f32 %v197
    %v230 = vcvt.s32.f32 %v198
    %v231 = vcvt.s32.f32 %v199
    %v232 = vcvt.s32.f32 %v200
    %v233 = vcvt.s32.f32 %v201
    %v234 = vcvt.s32.f32 %v202
    %v235 = vcvt.s32.f32 %v203
    %v236 = vcvt.s32.f32 %v204
    %v237 = vcvt.s32.f32 %v205
    %v238 = vcvt.s32.f32 %v206
    %v239 = vcvt.s32.f32 %v207
    %v240 = vcvt.s32.f32 %v208
    %v241 = vcvt.s32.f32 %v209
    %v242 = vcvt.s32.f32 %v210
    %v243 = vcvt.s32.f32 %v211
    %v244 = vld [vmem:[#allocation5] sm:$0xf]
    %v245 = vld [vmem:[#allocation5 + $0x4] sm:$0xf]
    %v246 = vld [vmem:[#allocation5 + $0x8] sm:$0xf]
    %v247 = vld [vmem:[#allocation5 + $0xc] sm:$0xf]
    %v248 = vld [vmem:[#allocation5 + $0x10] sm:$0xf]
    %v249 = vld [vmem:[#allocation5 + $0x14] sm:$0xf]
    %v250 = vld [vmem:[#allocation5 + $0x18] sm:$0xf]
    %v251 = vld [vmem:[#allocation5 + $0x1c] sm:$0xf]
    %v252 = vld [vmem:[#allocation5 + $0x20] sm:$0xf]
    %v253 = vld [vmem:[#allocation5 + $0x24] sm:$0xf]
    %v254 = vld [vmem:[#allocation5 + $0x28] sm:$0xf]
    %v255 = vld [vmem:[#allocation5 + $0x2c] sm:$0xf]
    %v256 = vld [vmem:[#allocation5 + $0x30] sm:$0xf]
    %v257 = vld [vmem:[#allocation5 + $0x34] sm:$0xf]
    %v258 = vld [vmem:[#allocation5 + $0x38] sm:$0xf]
    %v259 = vld [vmem:[#allocation5 + $0x3c] sm:$0xf]
    %v260 = vld [vmem:[#allocation5 + $0x40] sm:$0xf]
    %v261 = vld [vmem:[#allocation5 + $0x44] sm:$0xf]
    %v262 = vld [vmem:[#allocation5 + $0x48] sm:$0xf]
    %v263 = vld [vmem:[#allocation5 + $0x4c] sm:$0xf]
    %v264 = vld [vmem:[#allocation5 + $0x50] sm:$0xf]
    %v265 = vld [vmem:[#allocation5 + $0x54] sm:$0xf]
    %v266 = vld [vmem:[#allocation5 + $0x58] sm:$0xf]
    %v267 = vld [vmem:[#allocation5 + $0x5c] sm:$0xf]
    %v268 = vld [vmem:[#allocation5 + $0x60] sm:$0xf]
    %v269 = vld [vmem:[#allocation5 + $0x64] sm:$0xf]
    %v270 = vld [vmem:[#allocation5 + $0x68] sm:$0xf]
    %v271 = vld [vmem:[#allocation5 + $0x6c] sm:$0xf]
    %v272 = vld [vmem:[#allocation5 + $0x70] sm:$0xf]
    %v273 = vld [vmem:[#allocation5 + $0x74] sm:$0xf]
    %v274 = vld [vmem:[#allocation5 + $0x78] sm:$0xf]
    %v275 = vld [vmem:[#allocation5 + $0x7c] sm:$0xf]
    %v276 = vld [vmem:[#allocation8] sm:$0xf]
    %v277 = vld [vmem:[#allocation8 + $0x4] sm:$0xf]
    %v278 = vld [vmem:[#allocation8 + $0x8] sm:$0xf]
    %v279 = vld [vmem:[#allocation8 + $0xc] sm:$0xf]
    %v280 = vld [vmem:[#allocation8 + $0x10] sm:$0xf]
    %v281 = vld [vmem:[#allocation8 + $0x14] sm:$0xf]
    %v282 = vld [vmem:[#allocation8 + $0x18] sm:$0xf]
    %v283 = vld [vmem:[#allocation8 + $0x1c] sm:$0xf]
    %v284 = vld [vmem:[#allocation8 + $0x20] sm:$0xf]
    %v285 = vld [vmem:[#allocation8 + $0x24] sm:$0xf]
    %v286 = vld [vmem:[#allocation8 + $0x28] sm:$0xf]
    %v287 = vld [vmem:[#allocation8 + $0x2c] sm:$0xf]
    %v288 = vld [vmem:[#allocation8 + $0x30] sm:$0xf]
    %v289 = vld [vmem:[#allocation8 + $0x34] sm:$0xf]
    %v290 = vld [vmem:[#allocation8 + $0x38] sm:$0xf]
    %v291 = vld [vmem:[#allocation8 + $0x3c] sm:$0xf]
    %v292 = vld [vmem:[#allocation10] sm:$0x1]
    %v294 = vlaneseq
    %v295 = vshrl.u32 %v294, 7
    %v296 = vsub.s32 0, %v295
    %v297 = vrot.slane %v292, %v296
    %v331 = vunpack.c.l.b16 %v244
    %v332 = vunpack.c.l.b16 %v245
    %v333 = vunpack.c.l.b16 %v246
    %v334 = vunpack.c.l.b16 %v247
    %v335 = vunpack.c.l.b16 %v248
    %v336 = vunpack.c.l.b16 %v249
    %v337 = vunpack.c.l.b16 %v250
    %v338 = vunpack.c.l.b16 %v251
    %v339 = vunpack.c.l.b16 %v252
    %v340 = vunpack.c.l.b16 %v253
    %v341 = vunpack.c.l.b16 %v254
    %v342 = vunpack.c.l.b16 %v255
    %v343 = vunpack.c.l.b16 %v256
    %v344 = vunpack.c.l.b16 %v257
    %v345 = vunpack.c.l.b16 %v258
    %v346 = vunpack.c.l.b16 %v259
    %v347 = vunpack.c.l.b16 %v260
    %v348 = vunpack.c.l.b16 %v261
    %v349 = vunpack.c.l.b16 %v262
    %v350 = vunpack.c.l.b16 %v263
    %v351 = vunpack.c.l.b16 %v264
    %v352 = vunpack.c.l.b16 %v265
    %v353 = vunpack.c.l.b16 %v266
    %v354 = vunpack.c.l.b16 %v267
    %v355 = vunpack.c.l.b16 %v268
    %v356 = vunpack.c.l.b16 %v269
    %v357 = vunpack.c.l.b16 %v270
    %v358 = vunpack.c.l.b16 %v271
    %v359 = vunpack.c.l.b16 %v272
    %v360 = vunpack.c.l.b16 %v273
    %v361 = vunpack.c.l.b16 %v274
    %v362 = vunpack.c.l.b16 %v275
    %v363 = vpack.c.b16 %v332, %v331
    %v364 = vpack.c.b16 %v334, %v333
    %v365 = vpack.c.b16 %v336, %v335
    %v366 = vpack.c.b16 %v338, %v337
    %v367 = vpack.c.b16 %v340, %v339
    %v368 = vpack.c.b16 %v342, %v341
    %v369 = vpack.c.b16 %v344, %v343
    %v370 = vpack.c.b16 %v346, %v345
    %v371 = vpack.c.b16 %v348, %v347
    %v372 = vpack.c.b16 %v350, %v349
    %v373 = vpack.c.b16 %v352, %v351
    %v374 = vpack.c.b16 %v354, %v353
    %v375 = vpack.c.b16 %v356, %v355
    %v376 = vpack.c.b16 %v358, %v357
    %v377 = vpack.c.b16 %v360, %v359
    %v378 = vpack.c.b16 %v362, %v361
    %v411 = vunpack.c.l.b16 %v276
    %v412 = vunpack.c.l.b16 %v277
    %v413 = vunpack.c.l.b16 %v278
    %v414 = vunpack.c.l.b16 %v279
    %v415 = vunpack.c.l.b16 %v280
    %v416 = vunpack.c.l.b16 %v281
    %v417 = vunpack.c.l.b16 %v282
    %v418 = vunpack.c.l.b16 %v283
    %v419 = vunpack.c.l.b16 %v284
    %v420 = vunpack.c.l.b16 %v285
    %v421 = vunpack.c.l.b16 %v286
    %v422 = vunpack.c.l.b16 %v287
    %v423 = vunpack.c.l.b16 %v288
    %v424 = vunpack.c.l.b16 %v289
    %v425 = vunpack.c.l.b16 %v290
    %v426 = vunpack.c.l.b16 %v291
    %v427 = vpack.c.b16 %v412, %v411
    %v428 = vpack.c.b16 %v414, %v413
    %v429 = vpack.c.b16 %v416, %v415
    %v430 = vpack.c.b16 %v418, %v417
    %v431 = vpack.c.b16 %v420, %v419
    %v432 = vpack.c.b16 %v422, %v421
    %v433 = vpack.c.b16 %v424, %v423
    %v434 = vpack.c.b16 %v426, %v425
    %443 = vmatprep.subr.bf16.mxu0 0
    %444 = vmatpush1.bf16.msra.mxu0 %v434
    %445 = vmatprep.subr.bf16.mxu0 0
    %446 = vmatpush1.bf16.msra.mxu0 %v433
    %447 = vmatprep.subr.bf16.mxu0 0
    %448 = vmatpush1.bf16.msra.mxu0 %v432
    %449 = vmatprep.subr.bf16.mxu0 0
    %450 = vmatpush1.bf16.msra.mxu0 %v431
    %451 = vmatprep.subr.bf16.mxu0 0
    %452 = vmatpush1.bf16.msra.mxu0 %v430
    %453 = vmatprep.subr.bf16.mxu0 0
    %454 = vmatpush1.bf16.msra.mxu0 %v429
    %455 = vmatprep.subr.bf16.mxu0 0
    %456 = vmatpush1.bf16.msra.mxu0 %v428
    %457 = vmatprep.subr.bf16.mxu0 0
    %458 = vmatpush1.bf16.msra.mxu0 %v427
    %459 = vmatprep.subr.bf16.mxu0 0
    %460 = vmatpush2.bf16.msra.mxu0 0
    %461 = vmatprep.subr.bf16.mxu0 0
    %462 = vmatpush2.bf16.msra.mxu0 0
    %463 = vmatprep.subr.bf16.mxu0 0
    %464 = vmatpush2.bf16.msra.mxu0 0
    %465 = vmatprep.subr.bf16.mxu0 0
    %466 = vmatpush2.bf16.msra.mxu0 0
    %467 = vmatprep.subr.bf16.mxu0 0
    %468 = vmatpush2.bf16.msra.mxu0 0
    %469 = vmatprep.subr.bf16.mxu0 0
    %470 = vmatpush2.bf16.msra.mxu0 0
    %471 = vmatprep.subr.bf16.mxu0 0
    %472 = vmatpush2.bf16.msra.mxu0 0
    %473 = vmatprep.subr.bf16.mxu0 0
    %474 = vmatpush2.bf16.msra.mxu0 0
    %475 = vmatprep.mubr.bf16.mxu0 0
    %476 = vmatmul.mubr.bf16.gmra.mxu0 %v363
    %v477 = vpop.f32.mrf.mxu0
    %v478 = vadd.f32 %v297, %v477
    %v479 = vpop.f32.mrf.mxu0
    %v480 = vpop.f32.mrf.mxu0
    %v481 = vadd.f32 %v297, %v480
    %v482 = vpop.f32.mrf.mxu0
    %483 = vmatprep.mubr.bf16.mxu0 0
    %484 = vmatmul.mubr.bf16.gmra.mxu0 %v364
    %v485 = vpop.f32.mrf.mxu0
    %v486 = vadd.f32 %v297, %v485
    %v487 = vpop.f32.mrf.mxu0
    %v488 = vpop.f32.mrf.mxu0
    %v489 = vadd.f32 %v297, %v488
    %v490 = vpop.f32.mrf.mxu0
    %491 = vmatprep.mubr.bf16.mxu0 0
    %492 = vmatmul.mubr.bf16.gmra.mxu0 %v365
    %v493 = vpop.f32.mrf.mxu0
    %v494 = vadd.f32 %v297, %v493
    %v495 = vpop.f32.mrf.mxu0
    %v496 = vpop.f32.mrf.mxu0
    %v497 = vadd.f32 %v297, %v496
    %v498 = vpop.f32.mrf.mxu0
    %499 = vmatprep.mubr.bf16.mxu0 0
    %500 = vmatmul.mubr.bf16.gmra.mxu0 %v366
    %v501 = vpop.f32.mrf.mxu0
    %v502 = vadd.f32 %v297, %v501
    %v503 = vpop.f32.mrf.mxu0
    %v504 = vpop.f32.mrf.mxu0
    %v505 = vadd.f32 %v297, %v504
    %v506 = vpop.f32.mrf.mxu0
    %507 = vmatprep.mubr.bf16.mxu0 0
    %508 = vmatmul.mubr.bf16.gmra.mxu0 %v367
    %v509 = vpop.f32.mrf.mxu0
    %v510 = vadd.f32 %v297, %v509
    %v511 = vpop.f32.mrf.mxu0
    %v512 = vpop.f32.mrf.mxu0
    %v513 = vadd.f32 %v297, %v512
    %v514 = vpop.f32.mrf.mxu0
    %515 = vmatprep.mubr.bf16.mxu0 0
    %516 = vmatmul.mubr.bf16.gmra.mxu0 %v368
    %v517 = vpop.f32.mrf.mxu0
    %v518 = vadd.f32 %v297, %v517
    %v519 = vpop.f32.mrf.mxu0
    %v520 = vpop.f32.mrf.mxu0
    %v521 = vadd.f32 %v297, %v520
    %v522 = vpop.f32.mrf.mxu0
    %523 = vmatprep.mubr.bf16.mxu0 0
    %524 = vmatmul.mubr.bf16.gmra.mxu0 %v369
    %v525 = vpop.f32.mrf.mxu0
    %v526 = vadd.f32 %v297, %v525
    %v527 = vpop.f32.mrf.mxu0
    %v528 = vpop.f32.mrf.mxu0
    %v529 = vadd.f32 %v297, %v528
    %v530 = vpop.f32.mrf.mxu0
    %531 = vmatprep.mubr.bf16.mxu0 0
    %532 = vmatmul.mubr.bf16.gmra.mxu0 %v370
    %v533 = vpop.f32.mrf.mxu0
    %v534 = vadd.f32 %v297, %v533
    %v535 = vpop.f32.mrf.mxu0
    %v536 = vpop.f32.mrf.mxu0
    %v537 = vadd.f32 %v297, %v536
    %v538 = vpop.f32.mrf.mxu0
    %539 = vmatprep.mubr.bf16.mxu0 0
    %540 = vmatmul.mubr.bf16.gmra.mxu0 %v371
    %v541 = vpop.f32.mrf.mxu0
    %v542 = vadd.f32 %v297, %v541
    %v543 = vpop.f32.mrf.mxu0
    %v544 = vpop.f32.mrf.mxu0
    %v545 = vadd.f32 %v297, %v544
    %v546 = vpop.f32.mrf.mxu0
    %547 = vmatprep.mubr.bf16.mxu0 0
    %548 = vmatmul.mubr.bf16.gmra.mxu0 %v372
    %v549 = vpop.f32.mrf.mxu0
    %v550 = vadd.f32 %v297, %v549
    %v551 = vpop.f32.mrf.mxu0
    %v552 = vpop.f32.mrf.mxu0
    %v553 = vadd.f32 %v297, %v552
    %v554 = vpop.f32.mrf.mxu0
    %555 = vmatprep.mubr.bf16.mxu0 0
    %556 = vmatmul.mubr.bf16.gmra.mxu0 %v373
    %v557 = vpop.f32.mrf.mxu0
    %v558 = vadd.f32 %v297, %v557
    %v559 = vpop.f32.mrf.mxu0
    %v560 = vpop.f32.mrf.mxu0
    %v561 = vadd.f32 %v297, %v560
    %v562 = vpop.f32.mrf.mxu0
    %563 = vmatprep.mubr.bf16.mxu0 0
    %564 = vmatmul.mubr.bf16.gmra.mxu0 %v374
    %v565 = vpop.f32.mrf.mxu0
    %v566 = vadd.f32 %v297, %v565
    %v567 = vpop.f32.mrf.mxu0
    %v568 = vpop.f32.mrf.mxu0
    %v569 = vadd.f32 %v297, %v568
    %v570 = vpop.f32.mrf.mxu0
    %571 = vmatprep.mubr.bf16.mxu0 0
    %572 = vmatmul.mubr.bf16.gmra.mxu0 %v375
    %v573 = vpop.f32.mrf.mxu0
    %v574 = vadd.f32 %v297, %v573
    %v575 = vpop.f32.mrf.mxu0
    %v576 = vpop.f32.mrf.mxu0
    %v577 = vadd.f32 %v297, %v576
    %v578 = vpop.f32.mrf.mxu0
    %579 = vmatprep.mubr.bf16.mxu0 0
    %580 = vmatmul.mubr.bf16.gmra.mxu0 %v376
    %v581 = vpop.f32.mrf.mxu0
    %v582 = vadd.f32 %v297, %v581
    %v583 = vpop.f32.mrf.mxu0
    %v584 = vpop.f32.mrf.mxu0
    %v585 = vadd.f32 %v297, %v584
    %v586 = vpop.f32.mrf.mxu0
    %587 = vmatprep.mubr.bf16.mxu0 0
    %588 = vmatmul.mubr.bf16.gmra.mxu0 %v377
    %v589 = vpop.f32.mrf.mxu0
    %v590 = vadd.f32 %v297, %v589
    %v591 = vpop.f32.mrf.mxu0
    %v592 = vpop.f32.mrf.mxu0
    %v593 = vadd.f32 %v297, %v592
    %v594 = vpop.f32.mrf.mxu0
    %595 = vmatprep.mubr.bf16.mxu0 0
    %596 = vmatmul.mubr.bf16.gmra.mxu0 %v378
    %v597 = vpop.f32.mrf.mxu0
    %v598 = vadd.f32 %v297, %v597
    %v599 = vpop.f32.mrf.mxu0
    %v600 = vpop.f32.mrf.mxu0
    %v601 = vadd.f32 %v297, %v600
    %v602 = vpop.f32.mrf.mxu0
    %603 = vdwg.mxu0
    %v604 = vmax.f32 %v478, 0.0
    %v605 = vmax.f32 %v481, 0.0
    %v606 = vmax.f32 %v486, 0.0
    %v607 = vmax.f32 %v489, 0.0
    %v608 = vmax.f32 %v494, 0.0
    %v609 = vmax.f32 %v497, 0.0
    %v610 = vmax.f32 %v502, 0.0
    %v611 = vmax.f32 %v505, 0.0
    %v612 = vmax.f32 %v510, 0.0
    %v613 = vmax.f32 %v513, 0.0
    %v614 = vmax.f32 %v518, 0.0
    %v615 = vmax.f32 %v521, 0.0
    %v616 = vmax.f32 %v526, 0.0
    %v617 = vmax.f32 %v529, 0.0
    %v618 = vmax.f32 %v534, 0.0
    %v619 = vmax.f32 %v537, 0.0
    %v620 = vmax.f32 %v542, 0.0
    %v621 = vmax.f32 %v545, 0.0
    %v622 = vmax.f32 %v550, 0.0
    %v623 = vmax.f32 %v553, 0.0
    %v624 = vmax.f32 %v558, 0.0
    %v625 = vmax.f32 %v561, 0.0
    %v626 = vmax.f32 %v566, 0.0
    %v627 = vmax.f32 %v569, 0.0
    %v628 = vmax.f32 %v574, 0.0
    %v629 = vmax.f32 %v577, 0.0
    %v630 = vmax.f32 %v582, 0.0
    %v631 = vmax.f32 %v585, 0.0
    %v632 = vmax.f32 %v590, 0.0
    %v633 = vmax.f32 %v593, 0.0
    %v634 = vmax.f32 %v598, 0.0
    %v635 = vmax.f32 %v601, 0.0
    %v636 = vpack.c.bf16 %v605, %v604
    %v637 = vpack.c.bf16 %v607, %v606
    %v638 = vpack.c.bf16 %v609, %v608
    %v639 = vpack.c.bf16 %v611, %v610
    %v640 = vpack.c.bf16 %v613, %v612
    %v641 = vpack.c.bf16 %v615, %v614
    %v642 = vpack.c.bf16 %v617, %v616
    %v643 = vpack.c.bf16 %v619, %v618
    %v644 = vpack.c.bf16 %v621, %v620
    %v645 = vpack.c.bf16 %v623, %v622
    %v646 = vpack.c.bf16 %v625, %v624
    %v647 = vpack.c.bf16 %v627, %v626
    %v648 = vpack.c.bf16 %v629, %v628
    %v649 = vpack.c.bf16 %v631, %v630
    %v650 = vpack.c.bf16 %v633, %v632
    %v651 = vpack.c.bf16 %v635, %v634
    %s652 = smul.u32 4, 32
    %s653 = smul.u32 %s652, 2
    %s654 = sshll.u32 %s653, 4
    %655 = dma.done [#allocation3], %s654
    %v656 = vld [vmem:[#allocation2] sm:$0xff]
    %v657 = vld [vmem:[#allocation2 + $0x8] sm:$0xff]
    %v658 = vld [vmem:[#allocation2 + $0x10] sm:$0xff]
    %v659 = vld [vmem:[#allocation2 + $0x18] sm:$0xff]
    %v660 = vld [vmem:[#allocation2 + $0x20] sm:$0xff]
    %v661 = vld [vmem:[#allocation2 + $0x28] sm:$0xff]
    %v662 = vld [vmem:[#allocation2 + $0x30] sm:$0xff]
    %v663 = vld [vmem:[#allocation2 + $0x38] sm:$0xff]
    %v664 = vld [vmem:[#allocation2 + $0x40] sm:$0xff]
    %v665 = vld [vmem:[#allocation2 + $0x48] sm:$0xff]
    %v666 = vld [vmem:[#allocation2 + $0x50] sm:$0xff]
    %v667 = vld [vmem:[#allocation2 + $0x58] sm:$0xff]
    %v668 = vld [vmem:[#allocation2 + $0x60] sm:$0xff]
    %v669 = vld [vmem:[#allocation2 + $0x68] sm:$0xff]
    %v670 = vld [vmem:[#allocation2 + $0x70] sm:$0xff]
    %v671 = vld [vmem:[#allocation2 + $0x78] sm:$0xff]
    %v672 = vld [vmem:[#allocation2 + $0x80] sm:$0xff]
    %v673 = vld [vmem:[#allocation2 + $0x88] sm:$0xff]
    %v674 = vld [vmem:[#allocation2 + $0x90] sm:$0xff]
    %v675 = vld [vmem:[#allocation2 + $0x98] sm:$0xff]
    %v676 = vld [vmem:[#allocation2 + $0xa0] sm:$0xff]
    %v677 = vld [vmem:[#allocation2 + $0xa8] sm:$0xff]
    %v678 = vld [vmem:[#allocation2 + $0xb0] sm:$0xff]
    %v679 = vld [vmem:[#allocation2 + $0xb8] sm:$0xff]
    %v680 = vld [vmem:[#allocation2 + $0xc0] sm:$0xff]
    %v681 = vld [vmem:[#allocation2 + $0xc8] sm:$0xff]
    %v682 = vld [vmem:[#allocation2 + $0xd0] sm:$0xff]
    %v683 = vld [vmem:[#allocation2 + $0xd8] sm:$0xff]
    %v684 = vld [vmem:[#allocation2 + $0xe0] sm:$0xff]
    %v685 = vld [vmem:[#allocation2 + $0xe8] sm:$0xff]
    %v686 = vld [vmem:[#allocation2 + $0xf0] sm:$0xff]
    %v687 = vld [vmem:[#allocation2 + $0xf8] sm:$0xff]
    %v720 = vunpack.c.l.b16 %v656
    %v721 = vunpack.c.h.b16 %v656
    %v722 = vunpack.c.l.b16 %v657
    %v723 = vunpack.c.h.b16 %v657
    %v724 = vunpack.c.l.b16 %v658
    %v725 = vunpack.c.h.b16 %v658
    %v726 = vunpack.c.l.b16 %v659
    %v727 = vunpack.c.h.b16 %v659
    %v728 = vunpack.c.l.b16 %v660
    %v729 = vunpack.c.h.b16 %v660
    %v730 = vunpack.c.l.b16 %v661
    %v731 = vunpack.c.h.b16 %v661
    %v732 = vunpack.c.l.b16 %v662
    %v733 = vunpack.c.h.b16 %v662
    %v734 = vunpack.c.l.b16 %v663
    %v735 = vunpack.c.h.b16 %v663
    %v736 = vunpack.c.l.b16 %v664
    %v737 = vunpack.c.h.b16 %v664
    %v738 = vunpack.c.l.b16 %v665
    %v739 = vunpack.c.h.b16 %v665
    %v740 = vunpack.c.l.b16 %v666
    %v741 = vunpack.c.h.b16 %v666
    %v742 = vunpack.c.l.b16 %v667
    %v743 = vunpack.c.h.b16 %v667
    %v744 = vunpack.c.l.b16 %v668
    %v745 = vunpack.c.h.b16 %v668
    %v746 = vunpack.c.l.b16 %v669
    %v747 = vunpack.c.h.b16 %v669
    %v748 = vunpack.c.l.b16 %v670
    %v749 = vunpack.c.h.b16 %v670
    %v750 = vunpack.c.l.b16 %v671
    %v751 = vunpack.c.h.b16 %v671
    %v752 = vunpack.c.l.b16 %v672
    %v753 = vunpack.c.h.b16 %v672
    %v754 = vunpack.c.l.b16 %v673
    %v755 = vunpack.c.h.b16 %v673
    %v756 = vunpack.c.l.b16 %v674
    %v757 = vunpack.c.h.b16 %v674
    %v758 = vunpack.c.l.b16 %v675
    %v759 = vunpack.c.h.b16 %v675
    %v760 = vunpack.c.l.b16 %v676
    %v761 = vunpack.c.h.b16 %v676
    %v762 = vunpack.c.l.b16 %v677
    %v763 = vunpack.c.h.b16 %v677
    %v764 = vunpack.c.l.b16 %v678
    %v765 = vunpack.c.h.b16 %v678
    %v766 = vunpack.c.l.b16 %v679
    %v767 = vunpack.c.h.b16 %v679
    %v768 = vunpack.c.l.b16 %v680
    %v769 = vunpack.c.h.b16 %v680
    %v770 = vunpack.c.l.b16 %v681
    %v771 = vunpack.c.h.b16 %v681
    %v772 = vunpack.c.l.b16 %v682
    %v773 = vunpack.c.h.b16 %v682
    %v774 = vunpack.c.l.b16 %v683
    %v775 = vunpack.c.h.b16 %v683
    %v776 = vunpack.c.l.b16 %v684
    %v777 = vunpack.c.h.b16 %v684
    %v778 = vunpack.c.l.b16 %v685
    %v779 = vunpack.c.h.b16 %v685
    %v780 = vunpack.c.l.b16 %v686
    %v781 = vunpack.c.h.b16 %v686
    %v782 = vunpack.c.l.b16 %v687
    %v783 = vunpack.c.h.b16 %v687
    %v784 = vpack.c.b16 %v722, %v720
    %v785 = vpack.c.b16 %v723, %v721
    %v786 = vpack.c.b16 %v726, %v724
    %v787 = vpack.c.b16 %v727, %v725
    %v788 = vpack.c.b16 %v730, %v728
    %v789 = vpack.c.b16 %v731, %v729
    %v790 = vpack.c.b16 %v734, %v732
    %v791 = vpack.c.b16 %v735, %v733
    %v792 = vpack.c.b16 %v738, %v736
    %v793 = vpack.c.b16 %v739, %v737
    %v794 = vpack.c.b16 %v742, %v740
    %v795 = vpack.c.b16 %v743, %v741
    %v796 = vpack.c.b16 %v746, %v744
    %v797 = vpack.c.b16 %v747, %v745
    %v798 = vpack.c.b16 %v750, %v748
    %v799 = vpack.c.b16 %v751, %v749
    %v800 = vpack.c.b16 %v754, %v752
    %v801 = vpack.c.b16 %v755, %v753
    %v802 = vpack.c.b16 %v758, %v756
    %v803 = vpack.c.b16 %v759, %v757
    %v804 = vpack.c.b16 %v762, %v760
    %v805 = vpack.c.b16 %v763, %v761
    %v806 = vpack.c.b16 %v766, %v764
    %v807 = vpack.c.b16 %v767, %v765
    %v808 = vpack.c.b16 %v770, %v768
    %v809 = vpack.c.b16 %v771, %v769
    %v810 = vpack.c.b16 %v774, %v772
    %v811 = vpack.c.b16 %v775, %v773
    %v812 = vpack.c.b16 %v778, %v776
    %v813 = vpack.c.b16 %v779, %v777
    %v814 = vpack.c.b16 %v782, %v780
    %v815 = vpack.c.b16 %v783, %v781
    %848 = vmatprep.subr.bf16.mxu0 0
    %849 = vmatpush1.bf16.msra.mxu0 %v643
    %850 = vmatprep.subr.bf16.mxu0 0
    %851 = vmatpush1.bf16.msra.mxu0 %v642
    %852 = vmatprep.subr.bf16.mxu0 0
    %853 = vmatpush1.bf16.msra.mxu0 %v641
    %854 = vmatprep.subr.bf16.mxu0 0
    %855 = vmatpush1.bf16.msra.mxu0 %v640
    %856 = vmatprep.subr.bf16.mxu0 0
    %857 = vmatpush1.bf16.msra.mxu0 %v639
    %858 = vmatprep.subr.bf16.mxu0 0
    %859 = vmatpush1.bf16.msra.mxu0 %v638
    %860 = vmatprep.subr.bf16.mxu0 0
    %861 = vmatpush1.bf16.msra.mxu0 %v637
    %862 = vmatprep.subr.bf16.mxu0 0
    %863 = vmatpush1.bf16.msra.mxu0 %v636
    %864 = vmatprep.subr.bf16.mxu0 0
    %865 = vmatpush2.bf16.msra.mxu0 %v651
    %866 = vmatprep.subr.bf16.mxu0 0
    %867 = vmatpush2.bf16.msra.mxu0 %v650
    %868 = vmatprep.subr.bf16.mxu0 0
    %869 = vmatpush2.bf16.msra.mxu0 %v649
    %870 = vmatprep.subr.bf16.mxu0 0
    %871 = vmatpush2.bf16.msra.mxu0 %v648
    %872 = vmatprep.subr.bf16.mxu0 0
    %873 = vmatpush2.bf16.msra.mxu0 %v647
    %874 = vmatprep.subr.bf16.mxu0 0
    %875 = vmatpush2.bf16.msra.mxu0 %v646
    %876 = vmatprep.subr.bf16.mxu0 0
    %877 = vmatpush2.bf16.msra.mxu0 %v645
    %878 = vmatprep.subr.bf16.mxu0 0
    %879 = vmatpush2.bf16.msra.mxu0 %v644
    %880 = vmatprep.mubr.bf16.mxu0 %v785
    %881 = vmatmul.mubr.bf16.gmra.mxu0 %v784
    %v882 = vpop.f32.mrf.mxu0
    %v883 = vadd.f32 0.0, %v882
    %v884 = vpop.f32.mrf.mxu0
    %v885 = vpop.f32.mrf.mxu0
    %v886 = vadd.f32 0.0, %v885
    %v887 = vpop.f32.mrf.mxu0
    %888 = vmatprep.mubr.bf16.mxu0 %v787
    %889 = vmatmul.mubr.bf16.gmra.mxu0 %v786
    %v890 = vpop.f32.mrf.mxu0
    %v891 = vadd.f32 0.0, %v890
    %v892 = vpop.f32.mrf.mxu0
    %v893 = vpop.f32.mrf.mxu0
    %v894 = vadd.f32 0.0, %v893
    %v895 = vpop.f32.mrf.mxu0
    %896 = vmatprep.mubr.bf16.mxu0 %v789
    %897 = vmatmul.mubr.bf16.gmra.mxu0 %v788
    %v898 = vpop.f32.mrf.mxu0
    %v899 = vadd.f32 0.0, %v898
    %v900 = vpop.f32.mrf.mxu0
    %v901 = vpop.f32.mrf.mxu0
    %v902 = vadd.f32 0.0, %v901
    %v903 = vpop.f32.mrf.mxu0
    %904 = vmatprep.mubr.bf16.mxu0 %v791
    %905 = vmatmul.mubr.bf16.gmra.mxu0 %v790
    %v906 = vpop.f32.mrf.mxu0
    %v907 = vadd.f32 0.0, %v906
    %v908 = vpop.f32.mrf.mxu0
    %v909 = vpop.f32.mrf.mxu0
    %v910 = vadd.f32 0.0, %v909
    %v911 = vpop.f32.mrf.mxu0
    %912 = vmatprep.mubr.bf16.mxu0 %v793
    %913 = vmatmul.mubr.bf16.gmra.mxu0 %v792
    %v914 = vpop.f32.mrf.mxu0
    %v915 = vadd.f32 0.0, %v914
    %v916 = vpop.f32.mrf.mxu0
    %v917 = vpop.f32.mrf.mxu0
    %v918 = vadd.f32 0.0, %v917
    %v919 = vpop.f32.mrf.mxu0
    %920 = vmatprep.mubr.bf16.mxu0 %v795
    %921 = vmatmul.mubr.bf16.gmra.mxu0 %v794
    %v922 = vpop.f32.mrf.mxu0
    %v923 = vadd.f32 0.0, %v922
    %v924 = vpop.f32.mrf.mxu0
    %v925 = vpop.f32.mrf.mxu0
    %v926 = vadd.f32 0.0, %v925
    %v927 = vpop.f32.mrf.mxu0
    %928 = vmatprep.mubr.bf16.mxu0 %v797
    %929 = vmatmul.mubr.bf16.gmra.mxu0 %v796
    %v930 = vpop.f32.mrf.mxu0
    %v931 = vadd.f32 0.0, %v930
    %v932 = vpop.f32.mrf.mxu0
    %v933 = vpop.f32.mrf.mxu0
    %v934 = vadd.f32 0.0, %v933
    %v935 = vpop.f32.mrf.mxu0
    %936 = vmatprep.mubr.bf16.mxu0 %v799
    %937 = vmatmul.mubr.bf16.gmra.mxu0 %v798
    %v938 = vpop.f32.mrf.mxu0
    %v939 = vadd.f32 0.0, %v938
    %v940 = vpop.f32.mrf.mxu0
    %v941 = vpop.f32.mrf.mxu0
    %v942 = vadd.f32 0.0, %v941
    %v943 = vpop.f32.mrf.mxu0
    %944 = vmatprep.mubr.bf16.mxu0 %v801
    %945 = vmatmul.mubr.bf16.gmra.mxu0 %v800
    %v946 = vpop.f32.mrf.mxu0
    %v947 = vadd.f32 0.0, %v946
    %v948 = vpop.f32.mrf.mxu0
    %v949 = vpop.f32.mrf.mxu0
    %v950 = vadd.f32 0.0, %v949
    %v951 = vpop.f32.mrf.mxu0
    %952 = vmatprep.mubr.bf16.mxu0 %v803
    %953 = vmatmul.mubr.bf16.gmra.mxu0 %v802
    %v954 = vpop.f32.mrf.mxu0
    %v955 = vadd.f32 0.0, %v954
    %v956 = vpop.f32.mrf.mxu0
    %v957 = vpop.f32.mrf.mxu0
    %v958 = vadd.f32 0.0, %v957
    %v959 = vpop.f32.mrf.mxu0
    %960 = vmatprep.mubr.bf16.mxu0 %v805
    %961 = vmatmul.mubr.bf16.gmra.mxu0 %v804
    %v962 = vpop.f32.mrf.mxu0
    %v963 = vadd.f32 0.0, %v962
    %v964 = vpop.f32.mrf.mxu0
    %v965 = vpop.f32.mrf.mxu0
    %v966 = vadd.f32 0.0, %v965
    %v967 = vpop.f32.mrf.mxu0
    %968 = vmatprep.mubr.bf16.mxu0 %v807
    %969 = vmatmul.mubr.bf16.gmra.mxu0 %v806
    %v970 = vpop.f32.mrf.mxu0
    %v971 = vadd.f32 0.0, %v970
    %v972 = vpop.f32.mrf.mxu0
    %v973 = vpop.f32.mrf.mxu0
    %v974 = vadd.f32 0.0, %v973
    %v975 = vpop.f32.mrf.mxu0
    %976 = vmatprep.mubr.bf16.mxu0 %v809
    %977 = vmatmul.mubr.bf16.gmra.mxu0 %v808
    %v978 = vpop.f32.mrf.mxu0
    %v979 = vadd.f32 0.0, %v978
    %v980 = vpop.f32.mrf.mxu0
    %v981 = vpop.f32.mrf.mxu0
    %v982 = vadd.f32 0.0, %v981
    %v983 = vpop.f32.mrf.mxu0
    %984 = vmatprep.mubr.bf16.mxu0 %v811
    %985 = vmatmul.mubr.bf16.gmra.mxu0 %v810
    %v986 = vpop.f32.mrf.mxu0
    %v987 = vadd.f32 0.0, %v986
    %v988 = vpop.f32.mrf.mxu0
    %v989 = vpop.f32.mrf.mxu0
    %v990 = vadd.f32 0.0, %v989
    %v991 = vpop.f32.mrf.mxu0
    %992 = vmatprep.mubr.bf16.mxu0 %v813
    %993 = vmatmul.mubr.bf16.gmra.mxu0 %v812
    %v994 = vpop.f32.mrf.mxu0
    %v995 = vadd.f32 0.0, %v994
    %v996 = vpop.f32.mrf.mxu0
    %v997 = vpop.f32.mrf.mxu0
    %v998 = vadd.f32 0.0, %v997
    %v999 = vpop.f32.mrf.mxu0
    %1000 = vmatprep.mubr.bf16.mxu0 %v815
    %1001 = vmatmul.mubr.bf16.gmra.mxu0 %v814
    %v1002 = vpop.f32.mrf.mxu0
    %v1003 = vadd.f32 0.0, %v1002
    %v1004 = vpop.f32.mrf.mxu0
    %v1005 = vpop.f32.mrf.mxu0
    %v1006 = vadd.f32 0.0, %v1005
    %v1007 = vpop.f32.mrf.mxu0
    %1008 = vdwg.mxu0
    %v1009 = vpack.c.bf16 %v886, %v883
    %v1010 = vpack.c.bf16 %v894, %v891
    %v1011 = vpack.c.bf16 %v902, %v899
    %v1012 = vpack.c.bf16 %v910, %v907
    %v1013 = vpack.c.bf16 %v918, %v915
    %v1014 = vpack.c.bf16 %v926, %v923
    %v1015 = vpack.c.bf16 %v934, %v931
    %v1016 = vpack.c.bf16 %v942, %v939
    %v1017 = vpack.c.bf16 %v950, %v947
    %v1018 = vpack.c.bf16 %v958, %v955
    %v1019 = vpack.c.bf16 %v966, %v963
    %v1020 = vpack.c.bf16 %v974, %v971
    %v1021 = vpack.c.bf16 %v982, %v979
    %v1022 = vpack.c.bf16 %v990, %v987
    %v1023 = vpack.c.bf16 %v998, %v995
    %v1024 = vpack.c.bf16 %v1006, %v1003
    %v1041 = vunpack.c.l.b16 %v1009
    %v1042 = vunpack.c.h.b16 %v1009
    %v1043 = vunpack.c.l.b16 %v1010
    %v1044 = vunpack.c.h.b16 %v1010
    %v1045 = vunpack.c.l.b16 %v1011
    %v1046 = vunpack.c.h.b16 %v1011
    %v1047 = vunpack.c.l.b16 %v1012
    %v1048 = vunpack.c.h.b16 %v1012
    %v1049 = vunpack.c.l.b16 %v1013
    %v1050 = vunpack.c.h.b16 %v1013
    %v1051 = vunpack.c.l.b16 %v1014
    %v1052 = vunpack.c.h.b16 %v1014
    %v1053 = vunpack.c.l.b16 %v1015
    %v1054 = vunpack.c.h.b16 %v1015
    %v1055 = vunpack.c.l.b16 %v1016
    %v1056 = vunpack.c.h.b16 %v1016
    %v1057 = vunpack.c.l.b16 %v1017
    %v1058 = vunpack.c.h.b16 %v1017
    %v1059 = vunpack.c.l.b16 %v1018
    %v1060 = vunpack.c.h.b16 %v1018
    %v1061 = vunpack.c.l.b16 %v1019
    %v1062 = vunpack.c.h.b16 %v1019
    %v1063 = vunpack.c.l.b16 %v1020
    %v1064 = vunpack.c.h.b16 %v1020
    %v1065 = vunpack.c.l.b16 %v1021
    %v1066 = vunpack.c.h.b16 %v1021
    %v1067 = vunpack.c.l.b16 %v1022
    %v1068 = vunpack.c.h.b16 %v1022
    %v1069 = vunpack.c.l.b16 %v1023
    %v1070 = vunpack.c.h.b16 %v1023
    %v1071 = vunpack.c.l.b16 %v1024
    %v1072 = vunpack.c.h.b16 %v1024
    %v1073 = vpack.c.b16 %v1041, %v1041
    %v1074 = vpack.c.b16 %v1042, %v1042
    %v1075 = vpack.c.b16 %v1043, %v1043
    %v1076 = vpack.c.b16 %v1044, %v1044
    %v1077 = vpack.c.b16 %v1045, %v1045
    %v1078 = vpack.c.b16 %v1046, %v1046
    %v1079 = vpack.c.b16 %v1047, %v1047
    %v1080 = vpack.c.b16 %v1048, %v1048
    %v1081 = vpack.c.b16 %v1049, %v1049
    %v1082 = vpack.c.b16 %v1050, %v1050
    %v1083 = vpack.c.b16 %v1051, %v1051
    %v1084 = vpack.c.b16 %v1052, %v1052
    %v1085 = vpack.c.b16 %v1053, %v1053
    %v1086 = vpack.c.b16 %v1054, %v1054
    %v1087 = vpack.c.b16 %v1055, %v1055
    %v1088 = vpack.c.b16 %v1056, %v1056
    %v1089 = vpack.c.b16 %v1057, %v1057
    %v1090 = vpack.c.b16 %v1058, %v1058
    %v1091 = vpack.c.b16 %v1059, %v1059
    %v1092 = vpack.c.b16 %v1060, %v1060
    %v1093 = vpack.c.b16 %v1061, %v1061
    %v1094 = vpack.c.b16 %v1062, %v1062
    %v1095 = vpack.c.b16 %v1063, %v1063
    %v1096 = vpack.c.b16 %v1064, %v1064
    %v1097 = vpack.c.b16 %v1065, %v1065
    %v1098 = vpack.c.b16 %v1066, %v1066
    %v1099 = vpack.c.b16 %v1067, %v1067
    %v1100 = vpack.c.b16 %v1068, %v1068
    %v1101 = vpack.c.b16 %v1069, %v1069
    %v1102 = vpack.c.b16 %v1070, %v1070
    %v1103 = vpack.c.b16 %v1071, %v1071
    %v1104 = vpack.c.b16 %v1072, %v1072
    %1137 = vst [vmem:[#allocation4] sm:$0xf] %v1073
    %1138 = vst [vmem:[#allocation4 + $0x8] sm:$0xf] %v1074
    %1139 = vst [vmem:[#allocation4 + $0x10] sm:$0xf] %v1075
    %1140 = vst [vmem:[#allocation4 + $0x18] sm:$0xf] %v1076
    %1141 = vst [vmem:[#allocation4 + $0x20] sm:$0xf] %v1077
    %1142 = vst [vmem:[#allocation4 + $0x28] sm:$0xf] %v1078
    %1143 = vst [vmem:[#allocation4 + $0x30] sm:$0xf] %v1079
    %1144 = vst [vmem:[#allocation4 + $0x38] sm:$0xf] %v1080
    %1145 = vst [vmem:[#allocation4 + $0x40] sm:$0xf] %v1081
    %1146 = vst [vmem:[#allocation4 + $0x48] sm:$0xf] %v1082
    %1147 = vst [vmem:[#allocation4 + $0x50] sm:$0xf] %v1083
    %1148 = vst [vmem:[#allocation4 + $0x58] sm:$0xf] %v1084
    %1149 = vst [vmem:[#allocation4 + $0x60] sm:$0xf] %v1085
    %1150 = vst [vmem:[#allocation4 + $0x68] sm:$0xf] %v1086
    %1151 = vst [vmem:[#allocation4 + $0x70] sm:$0xf] %v1087
    %1152 = vst [vmem:[#allocation4 + $0x78] sm:$0xf] %v1088
    %1153 = vst [vmem:[#allocation4 + $0x80] sm:$0xf] %v1089
    %1154 = vst [vmem:[#allocation4 + $0x88] sm:$0xf] %v1090
    %1155 = vst [vmem:[#allocation4 + $0x90] sm:$0xf] %v1091
    %1156 = vst [vmem:[#allocation4 + $0x98] sm:$0xf] %v1092
    %1157 = vst [vmem:[#allocation4 + $0xa0] sm:$0xf] %v1093
    %1158 = vst [vmem:[#allocation4 + $0xa8] sm:$0xf] %v1094
    %1159 = vst [vmem:[#allocation4 + $0xb0] sm:$0xf] %v1095
    %1160 = vst [vmem:[#allocation4 + $0xb8] sm:$0xf] %v1096
    %1161 = vst [vmem:[#allocation4 + $0xc0] sm:$0xf] %v1097
    %1162 = vst [vmem:[#allocation4 + $0xc8] sm:$0xf] %v1098
    %1163 = vst [vmem:[#allocation4 + $0xd0] sm:$0xf] %v1099
    %1164 = vst [vmem:[#allocation4 + $0xd8] sm:$0xf] %v1100
    %1165 = vst [vmem:[#allocation4 + $0xe0] sm:$0xf] %v1101
    %1166 = vst [vmem:[#allocation4 + $0xe8] sm:$0xf] %v1102
    %1167 = vst [vmem:[#allocation4 + $0xf0] sm:$0xf] %v1103
    %1168 = vst [vmem:[#allocation4 + $0xf8] sm:$0xf] %v1104
    %v1185 = vunpack.c.l.b16 %v636
    %v1186 = vunpack.c.h.b16 %v636
    %v1187 = vunpack.c.l.b16 %v637
    %v1188 = vunpack.c.h.b16 %v637
    %v1189 = vunpack.c.l.b16 %v638
    %v1190 = vunpack.c.h.b16 %v638
    %v1191 = vunpack.c.l.b16 %v639
    %v1192 = vunpack.c.h.b16 %v639
    %v1193 = vunpack.c.l.b16 %v640
    %v1194 = vunpack.c.h.b16 %v640
    %v1195 = vunpack.c.l.b16 %v641
    %v1196 = vunpack.c.h.b16 %v641
    %v1197 = vunpack.c.l.b16 %v642
    %v1198 = vunpack.c.h.b16 %v642
    %v1199 = vunpack.c.l.b16 %v643
    %v1200 = vunpack.c.h.b16 %v643
    %v1201 = vunpack.c.l.b16 %v644
    %v1202 = vunpack.c.h.b16 %v644
    %v1203 = vunpack.c.l.b16 %v645
    %v1204 = vunpack.c.h.b16 %v645
    %v1205 = vunpack.c.l.b16 %v646
    %v1206 = vunpack.c.h.b16 %v646
    %v1207 = vunpack.c.l.b16 %v647
    %v1208 = vunpack.c.h.b16 %v647
    %v1209 = vunpack.c.l.b16 %v648
    %v1210 = vunpack.c.h.b16 %v648
    %v1211 = vunpack.c.l.b16 %v649
    %v1212 = vunpack.c.h.b16 %v649
    %v1213 = vunpack.c.l.b16 %v650
    %v1214 = vunpack.c.h.b16 %v650
    %v1215 = vunpack.c.l.b16 %v651
    %v1216 = vunpack.c.h.b16 %v651
    %v1217 = vpack.c.b16 %v1185, %v1185
    %v1218 = vpack.c.b16 %v1186, %v1186
    %v1219 = vpack.c.b16 %v1187, %v1187
    %v1220 = vpack.c.b16 %v1188, %v1188
    %v1221 = vpack.c.b16 %v1189, %v1189
    %v1222 = vpack.c.b16 %v1190, %v1190
    %v1223 = vpack.c.b16 %v1191, %v1191
    %v1224 = vpack.c.b16 %v1192, %v1192
    %v1225 = vpack.c.b16 %v1193, %v1193
    %v1226 = vpack.c.b16 %v1194, %v1194
    %v1227 = vpack.c.b16 %v1195, %v1195
    %v1228 = vpack.c.b16 %v1196, %v1196
    %v1229 = vpack.c.b16 %v1197, %v1197
    %v1230 = vpack.c.b16 %v1198, %v1198
    %v1231 = vpack.c.b16 %v1199, %v1199
    %v1232 = vpack.c.b16 %v1200, %v1200
    %v1233 = vpack.c.b16 %v1201, %v1201
    %v1234 = vpack.c.b16 %v1202, %v1202
    %v1235 = vpack.c.b16 %v1203, %v1203
    %v1236 = vpack.c.b16 %v1204, %v1204
    %v1237 = vpack.c.b16 %v1205, %v1205
    %v1238 = vpack.c.b16 %v1206, %v1206
    %v1239 = vpack.c.b16 %v1207, %v1207
    %v1240 = vpack.c.b16 %v1208, %v1208
    %v1241 = vpack.c.b16 %v1209, %v1209
    %v1242 = vpack.c.b16 %v1210, %v1210
    %v1243 = vpack.c.b16 %v1211, %v1211
    %v1244 = vpack.c.b16 %v1212, %v1212
    %v1245 = vpack.c.b16 %v1213, %v1213
    %v1246 = vpack.c.b16 %v1214, %v1214
    %v1247 = vpack.c.b16 %v1215, %v1215
    %v1248 = vpack.c.b16 %v1216, %v1216
    %1281 = vst [vmem:[#allocation4 + $0x4] sm:$0xf] %v1217
    %1282 = vst [vmem:[#allocation4 + $0xc] sm:$0xf] %v1218
    %1283 = vst [vmem:[#allocation4 + $0x14] sm:$0xf] %v1219
    %1284 = vst [vmem:[#allocation4 + $0x1c] sm:$0xf] %v1220
    %1285 = vst [vmem:[#allocation4 + $0x24] sm:$0xf] %v1221
    %1286 = vst [vmem:[#allocation4 + $0x2c] sm:$0xf] %v1222
    %1287 = vst [vmem:[#allocation4 + $0x34] sm:$0xf] %v1223
    %1288 = vst [vmem:[#allocation4 + $0x3c] sm:$0xf] %v1224
    %1289 = vst [vmem:[#allocation4 + $0x44] sm:$0xf] %v1225
    %1290 = vst [vmem:[#allocation4 + $0x4c] sm:$0xf] %v1226
    %1291 = vst [vmem:[#allocation4 + $0x54] sm:$0xf] %v1227
    %1292 = vst [vmem:[#allocation4 + $0x5c] sm:$0xf] %v1228
    %1293 = vst [vmem:[#allocation4 + $0x64] sm:$0xf] %v1229
    %1294 = vst [vmem:[#allocation4 + $0x6c] sm:$0xf] %v1230
    %1295 = vst [vmem:[#allocation4 + $0x74] sm:$0xf] %v1231
    %1296 = vst [vmem:[#allocation4 + $0x7c] sm:$0xf] %v1232
    %1297 = vst [vmem:[#allocation4 + $0x84] sm:$0xf] %v1233
    %1298 = vst [vmem:[#allocation4 + $0x8c] sm:$0xf] %v1234
    %1299 = vst [vmem:[#allocation4 + $0x94] sm:$0xf] %v1235
    %1300 = vst [vmem:[#allocation4 + $0x9c] sm:$0xf] %v1236
    %1301 = vst [vmem:[#allocation4 + $0xa4] sm:$0xf] %v1237
    %1302 = vst [vmem:[#allocation4 + $0xac] sm:$0xf] %v1238
    %1303 = vst [vmem:[#allocation4 + $0xb4] sm:$0xf] %v1239
    %1304 = vst [vmem:[#allocation4 + $0xbc] sm:$0xf] %v1240
    %1305 = vst [vmem:[#allocation4 + $0xc4] sm:$0xf] %v1241
    %1306 = vst [vmem:[#allocation4 + $0xcc] sm:$0xf] %v1242
    %1307 = vst [vmem:[#allocation4 + $0xd4] sm:$0xf] %v1243
    %1308 = vst [vmem:[#allocation4 + $0xdc] sm:$0xf] %v1244
    %1309 = vst [vmem:[#allocation4 + $0xe4] sm:$0xf] %v1245
    %1310 = vst [vmem:[#allocation4 + $0xec] sm:$0xf] %v1246
    %1311 = vst [vmem:[#allocation4 + $0xf4] sm:$0xf] %v1247
    %1312 = vst [vmem:[#allocation4 + $0xfc] sm:$0xf] %v1248
    %v1313 = vld [vmem:[#allocation4] sm:$0xff]
    %v1314 = vld [vmem:[#allocation4 + $0x8] sm:$0xff]
    %v1315 = vld [vmem:[#allocation4 + $0x10] sm:$0xff]
    %v1316 = vld [vmem:[#allocation4 + $0x18] sm:$0xff]
    %v1317 = vld [vmem:[#allocation4 + $0x20] sm:$0xff]
    %v1318 = vld [vmem:[#allocation4 + $0x28] sm:$0xff]
    %v1319 = vld [vmem:[#allocation4 + $0x30] sm:$0xff]
    %v1320 = vld [vmem:[#allocation4 + $0x38] sm:$0xff]
    %v1321 = vld [vmem:[#allocation4 + $0x40] sm:$0xff]
    %v1322 = vld [vmem:[#allocation4 + $0x48] sm:$0xff]
    %v1323 = vld [vmem:[#allocation4 + $0x50] sm:$0xff]
    %v1324 = vld [vmem:[#allocation4 + $0x58] sm:$0xff]
    %v1325 = vld [vmem:[#allocation4 + $0x60] sm:$0xff]
    %v1326 = vld [vmem:[#allocation4 + $0x68] sm:$0xff]
    %v1327 = vld [vmem:[#allocation4 + $0x70] sm:$0xff]
    %v1328 = vld [vmem:[#allocation4 + $0x78] sm:$0xff]
    %v1329 = vld [vmem:[#allocation4 + $0x80] sm:$0xff]
    %v1330 = vld [vmem:[#allocation4 + $0x88] sm:$0xff]
    %v1331 = vld [vmem:[#allocation4 + $0x90] sm:$0xff]
    %v1332 = vld [vmem:[#allocation4 + $0x98] sm:$0xff]
    %v1333 = vld [vmem:[#allocation4 + $0xa0] sm:$0xff]
    %v1334 = vld [vmem:[#allocation4 + $0xa8] sm:$0xff]
    %v1335 = vld [vmem:[#allocation4 + $0xb0] sm:$0xff]
    %v1336 = vld [vmem:[#allocation4 + $0xb8] sm:$0xff]
    %v1337 = vld [vmem:[#allocation4 + $0xc0] sm:$0xff]
    %v1338 = vld [vmem:[#allocation4 + $0xc8] sm:$0xff]
    %v1339 = vld [vmem:[#allocation4 + $0xd0] sm:$0xff]
    %v1340 = vld [vmem:[#allocation4 + $0xd8] sm:$0xff]
    %v1341 = vld [vmem:[#allocation4 + $0xe0] sm:$0xff]
    %v1342 = vld [vmem:[#allocation4 + $0xe8] sm:$0xff]
    %v1343 = vld [vmem:[#allocation4 + $0xf0] sm:$0xff]
    %v1344 = vld [vmem:[#allocation4 + $0xf8] sm:$0xff]
    %v1345 = vld [vmem:[#allocation11] sm:$0xf]
    %v1346 = vld [vmem:[#allocation11 + $0x4] sm:$0xf]
    %v1347 = vld [vmem:[#allocation11 + $0x8] sm:$0xf]
    %v1348 = vld [vmem:[#allocation11 + $0xc] sm:$0xf]
    %v1349 = vld [vmem:[#allocation11 + $0x10] sm:$0xf]
    %v1350 = vld [vmem:[#allocation11 + $0x14] sm:$0xf]
    %v1351 = vld [vmem:[#allocation11 + $0x18] sm:$0xf]
    %v1352 = vld [vmem:[#allocation11 + $0x1c] sm:$0xf]
    %v1353 = vld [vmem:[#allocation11 + $0x20] sm:$0xf]
    %v1354 = vld [vmem:[#allocation11 + $0x24] sm:$0xf]
    %v1355 = vld [vmem:[#allocation11 + $0x28] sm:$0xf]
    %v1356 = vld [vmem:[#allocation11 + $0x2c] sm:$0xf]
    %v1357 = vld [vmem:[#allocation11 + $0x30] sm:$0xf]
    %v1358 = vld [vmem:[#allocation11 + $0x34] sm:$0xf]
    %v1359 = vld [vmem:[#allocation11 + $0x38] sm:$0xf]
    %v1360 = vld [vmem:[#allocation11 + $0x3c] sm:$0xf]
    %v1361 = vld [vmem:[#allocation11 + $0x40] sm:$0xf]
    %v1362 = vld [vmem:[#allocation11 + $0x44] sm:$0xf]
    %v1363 = vld [vmem:[#allocation11 + $0x48] sm:$0xf]
    %v1364 = vld [vmem:[#allocation11 + $0x4c] sm:$0xf]
    %v1365 = vld [vmem:[#allocation11 + $0x50] sm:$0xf]
    %v1366 = vld [vmem:[#allocation11 + $0x54] sm:$0xf]
    %v1367 = vld [vmem:[#allocation11 + $0x58] sm:$0xf]
    %v1368 = vld [vmem:[#allocation11 + $0x5c] sm:$0xf]
    %v1369 = vld [vmem:[#allocation11 + $0x60] sm:$0xf]
    %v1370 = vld [vmem:[#allocation11 + $0x64] sm:$0xf]
    %v1371 = vld [vmem:[#allocation11 + $0x68] sm:$0xf]
    %v1372 = vld [vmem:[#allocation11 + $0x6c] sm:$0xf]
    %v1373 = vld [vmem:[#allocation11 + $0x70] sm:$0xf]
    %v1374 = vld [vmem:[#allocation11 + $0x74] sm:$0xf]
    %v1375 = vld [vmem:[#allocation11 + $0x78] sm:$0xf]
    %v1376 = vld [vmem:[#allocation11 + $0x7c] sm:$0xf]
    %v1377 = vld [vmem:[%s5] sm:$0x1]
    %v1379 = vlaneseq
    %v1380 = vshrl.u32 %v1379, 7
    %v1381 = vsub.s32 0, %v1380
    %v1382 = vrot.slane %v1377, %v1381
    %v1416 = vunpack.c.l.b16 %v1313
    %v1417 = vunpack.c.h.b16 %v1313
    %v1418 = vunpack.c.l.b16 %v1314
    %v1419 = vunpack.c.h.b16 %v1314
    %v1420 = vunpack.c.l.b16 %v1315
    %v1421 = vunpack.c.h.b16 %v1315
    %v1422 = vunpack.c.l.b16 %v1316
    %v1423 = vunpack.c.h.b16 %v1316
    %v1424 = vunpack.c.l.b16 %v1317
    %v1425 = vunpack.c.h.b16 %v1317
    %v1426 = vunpack.c.l.b16 %v1318
    %v1427 = vunpack.c.h.b16 %v1318
    %v1428 = vunpack.c.l.b16 %v1319
    %v1429 = vunpack.c.h.b16 %v1319
    %v1430 = vunpack.c.l.b16 %v1320
    %v1431 = vunpack.c.h.b16 %v1320
    %v1432 = vunpack.c.l.b16 %v1321
    %v1433 = vunpack.c.h.b16 %v1321
    %v1434 = vunpack.c.l.b16 %v1322
    %v1435 = vunpack.c.h.b16 %v1322
    %v1436 = vunpack.c.l.b16 %v1323
    %v1437 = vunpack.c.h.b16 %v1323
    %v1438 = vunpack.c.l.b16 %v1324
    %v1439 = vunpack.c.h.b16 %v1324
    %v1440 = vunpack.c.l.b16 %v1325
    %v1441 = vunpack.c.h.b16 %v1325
    %v1442 = vunpack.c.l.b16 %v1326
    %v1443 = vunpack.c.h.b16 %v1326
    %v1444 = vunpack.c.l.b16 %v1327
    %v1445 = vunpack.c.h.b16 %v1327
    %v1446 = vunpack.c.l.b16 %v1328
    %v1447 = vunpack.c.h.b16 %v1328
    %v1448 = vunpack.c.l.b16 %v1329
    %v1449 = vunpack.c.h.b16 %v1329
    %v1450 = vunpack.c.l.b16 %v1330
    %v1451 = vunpack.c.h.b16 %v1330
    %v1452 = vunpack.c.l.b16 %v1331
    %v1453 = vunpack.c.h.b16 %v1331
    %v1454 = vunpack.c.l.b16 %v1332
    %v1455 = vunpack.c.h.b16 %v1332
    %v1456 = vunpack.c.l.b16 %v1333
    %v1457 = vunpack.c.h.b16 %v1333
    %v1458 = vunpack.c.l.b16 %v1334
    %v1459 = vunpack.c.h.b16 %v1334
    %v1460 = vunpack.c.l.b16 %v1335
    %v1461 = vunpack.c.h.b16 %v1335
    %v1462 = vunpack.c.l.b16 %v1336
    %v1463 = vunpack.c.h.b16 %v1336
    %v1464 = vunpack.c.l.b16 %v1337
    %v1465 = vunpack.c.h.b16 %v1337
    %v1466 = vunpack.c.l.b16 %v1338
    %v1467 = vunpack.c.h.b16 %v1338
    %v1468 = vunpack.c.l.b16 %v1339
    %v1469 = vunpack.c.h.b16 %v1339
    %v1470 = vunpack.c.l.b16 %v1340
    %v1471 = vunpack.c.h.b16 %v1340
    %v1472 = vunpack.c.l.b16 %v1341
    %v1473 = vunpack.c.h.b16 %v1341
    %v1474 = vunpack.c.l.b16 %v1342
    %v1475 = vunpack.c.h.b16 %v1342
    %v1476 = vunpack.c.l.b16 %v1343
    %v1477 = vunpack.c.h.b16 %v1343
    %v1478 = vunpack.c.l.b16 %v1344
    %v1479 = vunpack.c.h.b16 %v1344
    %v1480 = vpack.c.b16 %v1418, %v1416
    %v1481 = vpack.c.b16 %v1419, %v1417
    %v1482 = vpack.c.b16 %v1422, %v1420
    %v1483 = vpack.c.b16 %v1423, %v1421
    %v1484 = vpack.c.b16 %v1426, %v1424
    %v1485 = vpack.c.b16 %v1427, %v1425
    %v1486 = vpack.c.b16 %v1430, %v1428
    %v1487 = vpack.c.b16 %v1431, %v1429
    %v1488 = vpack.c.b16 %v1434, %v1432
    %v1489 = vpack.c.b16 %v1435, %v1433
    %v1490 = vpack.c.b16 %v1438, %v1436
    %v1491 = vpack.c.b16 %v1439, %v1437
    %v1492 = vpack.c.b16 %v1442, %v1440
    %v1493 = vpack.c.b16 %v1443, %v1441
    %v1494 = vpack.c.b16 %v1446, %v1444
    %v1495 = vpack.c.b16 %v1447, %v1445
    %v1496 = vpack.c.b16 %v1450, %v1448
    %v1497 = vpack.c.b16 %v1451, %v1449
    %v1498 = vpack.c.b16 %v1454, %v1452
    %v1499 = vpack.c.b16 %v1455, %v1453
    %v1500 = vpack.c.b16 %v1458, %v1456
    %v1501 = vpack.c.b16 %v1459, %v1457
    %v1502 = vpack.c.b16 %v1462, %v1460
    %v1503 = vpack.c.b16 %v1463, %v1461
    %v1504 = vpack.c.b16 %v1466, %v1464
    %v1505 = vpack.c.b16 %v1467, %v1465
    %v1506 = vpack.c.b16 %v1470, %v1468
    %v1507 = vpack.c.b16 %v1471, %v1469
    %v1508 = vpack.c.b16 %v1474, %v1472
    %v1509 = vpack.c.b16 %v1475, %v1473
    %v1510 = vpack.c.b16 %v1478, %v1476
    %v1511 = vpack.c.b16 %v1479, %v1477
    %v1576 = vunpack.c.l.b16 %v1345
    %v1577 = vunpack.c.l.b16 %v1346
    %v1578 = vunpack.c.l.b16 %v1347
    %v1579 = vunpack.c.l.b16 %v1348
    %v1580 = vunpack.c.l.b16 %v1349
    %v1581 = vunpack.c.l.b16 %v1350
    %v1582 = vunpack.c.l.b16 %v1351
    %v1583 = vunpack.c.l.b16 %v1352
    %v1584 = vunpack.c.l.b16 %v1353
    %v1585 = vunpack.c.l.b16 %v1354
    %v1586 = vunpack.c.l.b16 %v1355
    %v1587 = vunpack.c.l.b16 %v1356
    %v1588 = vunpack.c.l.b16 %v1357
    %v1589 = vunpack.c.l.b16 %v1358
    %v1590 = vunpack.c.l.b16 %v1359
    %v1591 = vunpack.c.l.b16 %v1360
    %v1592 = vunpack.c.l.b16 %v1361
    %v1593 = vunpack.c.l.b16 %v1362
    %v1594 = vunpack.c.l.b16 %v1363
    %v1595 = vunpack.c.l.b16 %v1364
    %v1596 = vunpack.c.l.b16 %v1365
    %v1597 = vunpack.c.l.b16 %v1366
    %v1598 = vunpack.c.l.b16 %v1367
    %v1599 = vunpack.c.l.b16 %v1368
    %v1600 = vunpack.c.l.b16 %v1369
    %v1601 = vunpack.c.l.b16 %v1370
    %v1602 = vunpack.c.l.b16 %v1371
    %v1603 = vunpack.c.l.b16 %v1372
    %v1604 = vunpack.c.l.b16 %v1373
    %v1605 = vunpack.c.l.b16 %v1374
    %v1606 = vunpack.c.l.b16 %v1375
    %v1607 = vunpack.c.l.b16 %v1376
    %v1608 = vpack.c.b16 %v1577, %v1576
    %v1609 = vpack.c.b16 %v1579, %v1578
    %v1610 = vpack.c.b16 %v1581, %v1580
    %v1611 = vpack.c.b16 %v1583, %v1582
    %v1612 = vpack.c.b16 %v1585, %v1584
    %v1613 = vpack.c.b16 %v1587, %v1586
    %v1614 = vpack.c.b16 %v1589, %v1588
    %v1615 = vpack.c.b16 %v1591, %v1590
    %v1616 = vpack.c.b16 %v1593, %v1592
    %v1617 = vpack.c.b16 %v1595, %v1594
    %v1618 = vpack.c.b16 %v1597, %v1596
    %v1619 = vpack.c.b16 %v1599, %v1598
    %v1620 = vpack.c.b16 %v1601, %v1600
    %v1621 = vpack.c.b16 %v1603, %v1602
    %v1622 = vpack.c.b16 %v1605, %v1604
    %v1623 = vpack.c.b16 %v1607, %v1606
    %1640 = vmatprep.subr.bf16.mxu0 0
    %1641 = vmatpush1.bf16.msra.mxu0 %v1615
    %1642 = vmatprep.subr.bf16.mxu0 0
    %1643 = vmatpush1.bf16.msra.mxu0 %v1614
    %1644 = vmatprep.subr.bf16.mxu0 0
    %1645 = vmatpush1.bf16.msra.mxu0 %v1613
    %1646 = vmatprep.subr.bf16.mxu0 0
    %1647 = vmatpush1.bf16.msra.mxu0 %v1612
    %1648 = vmatprep.subr.bf16.mxu0 0
    %1649 = vmatpush1.bf16.msra.mxu0 %v1611
    %1650 = vmatprep.subr.bf16.mxu0 0
    %1651 = vmatpush1.bf16.msra.mxu0 %v1610
    %1652 = vmatprep.subr.bf16.mxu0 0
    %1653 = vmatpush1.bf16.msra.mxu0 %v1609
    %1654 = vmatprep.subr.bf16.mxu0 0
    %1655 = vmatpush1.bf16.msra.mxu0 %v1608
    %1656 = vmatprep.subr.bf16.mxu0 0
    %1657 = vmatpush2.bf16.msra.mxu0 %v1623
    %1658 = vmatprep.subr.bf16.mxu0 0
    %1659 = vmatpush2.bf16.msra.mxu0 %v1622
    %1660 = vmatprep.subr.bf16.mxu0 0
    %1661 = vmatpush2.bf16.msra.mxu0 %v1621
    %1662 = vmatprep.subr.bf16.mxu0 0
    %1663 = vmatpush2.bf16.msra.mxu0 %v1620
    %1664 = vmatprep.subr.bf16.mxu0 0
    %1665 = vmatpush2.bf16.msra.mxu0 %v1619
    %1666 = vmatprep.subr.bf16.mxu0 0
    %1667 = vmatpush2.bf16.msra.mxu0 %v1618
    %1668 = vmatprep.subr.bf16.mxu0 0
    %1669 = vmatpush2.bf16.msra.mxu0 %v1617
    %1670 = vmatprep.subr.bf16.mxu0 0
    %1671 = vmatpush2.bf16.msra.mxu0 %v1616
    %1672 = vmatprep.mubr.bf16.mxu0 %v1481
    %1673 = vmatmul.mubr.bf16.gmra.mxu0 %v1480
    %v1674 = vpop.f32.mrf.mxu0
    %v1675 = vadd.f32 %v1382, %v1674
    %v1676 = vpop.f32.mrf.mxu0
    %v1677 = vpop.f32.mrf.mxu0
    %v1678 = vadd.f32 %v1382, %v1677
    %v1679 = vpop.f32.mrf.mxu0
    %1680 = vmatprep.mubr.bf16.mxu0 %v1483
    %1681 = vmatmul.mubr.bf16.gmra.mxu0 %v1482
    %v1682 = vpop.f32.mrf.mxu0
    %v1683 = vadd.f32 %v1382, %v1682
    %v1684 = vpop.f32.mrf.mxu0
    %v1685 = vpop.f32.mrf.mxu0
    %v1686 = vadd.f32 %v1382, %v1685
    %v1687 = vpop.f32.mrf.mxu0
    %1688 = vmatprep.mubr.bf16.mxu0 %v1485
    %1689 = vmatmul.mubr.bf16.gmra.mxu0 %v1484
    %v1690 = vpop.f32.mrf.mxu0
    %v1691 = vadd.f32 %v1382, %v1690
    %v1692 = vpop.f32.mrf.mxu0
    %v1693 = vpop.f32.mrf.mxu0
    %v1694 = vadd.f32 %v1382, %v1693
    %v1695 = vpop.f32.mrf.mxu0
    %1696 = vmatprep.mubr.bf16.mxu0 %v1487
    %1697 = vmatmul.mubr.bf16.gmra.mxu0 %v1486
    %v1698 = vpop.f32.mrf.mxu0
    %v1699 = vadd.f32 %v1382, %v1698
    %v1700 = vpop.f32.mrf.mxu0
    %v1701 = vpop.f32.mrf.mxu0
    %v1702 = vadd.f32 %v1382, %v1701
    %v1703 = vpop.f32.mrf.mxu0
    %1704 = vmatprep.mubr.bf16.mxu0 %v1489
    %1705 = vmatmul.mubr.bf16.gmra.mxu0 %v1488
    %v1706 = vpop.f32.mrf.mxu0
    %v1707 = vadd.f32 %v1382, %v1706
    %v1708 = vpop.f32.mrf.mxu0
    %v1709 = vpop.f32.mrf.mxu0
    %v1710 = vadd.f32 %v1382, %v1709
    %v1711 = vpop.f32.mrf.mxu0
    %1712 = vmatprep.mubr.bf16.mxu0 %v1491
    %1713 = vmatmul.mubr.bf16.gmra.mxu0 %v1490
    %v1714 = vpop.f32.mrf.mxu0
    %v1715 = vadd.f32 %v1382, %v1714
    %v1716 = vpop.f32.mrf.mxu0
    %v1717 = vpop.f32.mrf.mxu0
    %v1718 = vadd.f32 %v1382, %v1717
    %v1719 = vpop.f32.mrf.mxu0
    %1720 = vmatprep.mubr.bf16.mxu0 %v1493
    %1721 = vmatmul.mubr.bf16.gmra.mxu0 %v1492
    %v1722 = vpop.f32.mrf.mxu0
    %v1723 = vadd.f32 %v1382, %v1722
    %v1724 = vpop.f32.mrf.mxu0
    %v1725 = vpop.f32.mrf.mxu0
    %v1726 = vadd.f32 %v1382, %v1725
    %v1727 = vpop.f32.mrf.mxu0
    %1728 = vmatprep.mubr.bf16.mxu0 %v1495
    %1729 = vmatmul.mubr.bf16.gmra.mxu0 %v1494
    %v1730 = vpop.f32.mrf.mxu0
    %v1731 = vadd.f32 %v1382, %v1730
    %v1732 = vpop.f32.mrf.mxu0
    %v1733 = vpop.f32.mrf.mxu0
    %v1734 = vadd.f32 %v1382, %v1733
    %v1735 = vpop.f32.mrf.mxu0
    %1736 = vmatprep.mubr.bf16.mxu0 %v1497
    %1737 = vmatmul.mubr.bf16.gmra.mxu0 %v1496
    %v1738 = vpop.f32.mrf.mxu0
    %v1739 = vadd.f32 %v1382, %v1738
    %v1740 = vpop.f32.mrf.mxu0
    %v1741 = vpop.f32.mrf.mxu0
    %v1742 = vadd.f32 %v1382, %v1741
    %v1743 = vpop.f32.mrf.mxu0
    %1744 = vmatprep.mubr.bf16.mxu0 %v1499
    %1745 = vmatmul.mubr.bf16.gmra.mxu0 %v1498
    %v1746 = vpop.f32.mrf.mxu0
    %v1747 = vadd.f32 %v1382, %v1746
    %v1748 = vpop.f32.mrf.mxu0
    %v1749 = vpop.f32.mrf.mxu0
    %v1750 = vadd.f32 %v1382, %v1749
    %v1751 = vpop.f32.mrf.mxu0
    %1752 = vmatprep.mubr.bf16.mxu0 %v1501
    %1753 = vmatmul.mubr.bf16.gmra.mxu0 %v1500
    %v1754 = vpop.f32.mrf.mxu0
    %v1755 = vadd.f32 %v1382, %v1754
    %v1756 = vpop.f32.mrf.mxu0
    %v1757 = vpop.f32.mrf.mxu0
    %v1758 = vadd.f32 %v1382, %v1757
    %v1759 = vpop.f32.mrf.mxu0
    %1760 = vmatprep.mubr.bf16.mxu0 %v1503
    %1761 = vmatmul.mubr.bf16.gmra.mxu0 %v1502
    %v1762 = vpop.f32.mrf.mxu0
    %v1763 = vadd.f32 %v1382, %v1762
    %v1764 = vpop.f32.mrf.mxu0
    %v1765 = vpop.f32.mrf.mxu0
    %v1766 = vadd.f32 %v1382, %v1765
    %v1767 = vpop.f32.mrf.mxu0
    %1768 = vmatprep.mubr.bf16.mxu0 %v1505
    %1769 = vmatmul.mubr.bf16.gmra.mxu0 %v1504
    %v1770 = vpop.f32.mrf.mxu0
    %v1771 = vadd.f32 %v1382, %v1770
    %v1772 = vpop.f32.mrf.mxu0
    %v1773 = vpop.f32.mrf.mxu0
    %v1774 = vadd.f32 %v1382, %v1773
    %v1775 = vpop.f32.mrf.mxu0
    %1776 = vmatprep.mubr.bf16.mxu0 %v1507
    %1777 = vmatmul.mubr.bf16.gmra.mxu0 %v1506
    %v1778 = vpop.f32.mrf.mxu0
    %v1779 = vadd.f32 %v1382, %v1778
    %v1780 = vpop.f32.mrf.mxu0
    %v1781 = vpop.f32.mrf.mxu0
    %v1782 = vadd.f32 %v1382, %v1781
    %v1783 = vpop.f32.mrf.mxu0
    %1784 = vmatprep.mubr.bf16.mxu0 %v1509
    %1785 = vmatmul.mubr.bf16.gmra.mxu0 %v1508
    %v1786 = vpop.f32.mrf.mxu0
    %v1787 = vadd.f32 %v1382, %v1786
    %v1788 = vpop.f32.mrf.mxu0
    %v1789 = vpop.f32.mrf.mxu0
    %v1790 = vadd.f32 %v1382, %v1789
    %v1791 = vpop.f32.mrf.mxu0
    %1792 = vmatprep.mubr.bf16.mxu0 %v1511
    %1793 = vmatmul.mubr.bf16.gmra.mxu0 %v1510
    %v1794 = vpop.f32.mrf.mxu0
    %v1795 = vadd.f32 %v1382, %v1794
    %v1796 = vpop.f32.mrf.mxu0
    %v1797 = vpop.f32.mrf.mxu0
    %v1798 = vadd.f32 %v1382, %v1797
    %v1799 = vpop.f32.mrf.mxu0
    %1800 = vdwg.mxu0
    %v1801 = vmul.f32 %v1675, %v212
    %v1802 = vmul.f32 %v1678, %v213
    %v1803 = vmul.f32 %v1683, %v214
    %v1804 = vmul.f32 %v1686, %v215
    %v1805 = vmul.f32 %v1691, %v216
    %v1806 = vmul.f32 %v1694, %v217
    %v1807 = vmul.f32 %v1699, %v218
    %v1808 = vmul.f32 %v1702, %v219
    %v1809 = vmul.f32 %v1707, %v220
    %v1810 = vmul.f32 %v1710, %v221
    %v1811 = vmul.f32 %v1715, %v222
    %v1812 = vmul.f32 %v1718, %v223
    %v1813 = vmul.f32 %v1723, %v224
    %v1814 = vmul.f32 %v1726, %v225
    %v1815 = vmul.f32 %v1731, %v226
    %v1816 = vmul.f32 %v1734, %v227
    %v1817 = vmul.f32 %v1739, %v228
    %v1818 = vmul.f32 %v1742, %v229
    %v1819 = vmul.f32 %v1747, %v230
    %v1820 = vmul.f32 %v1750, %v231
    %v1821 = vmul.f32 %v1755, %v232
    %v1822 = vmul.f32 %v1758, %v233
    %v1823 = vmul.f32 %v1763, %v234
    %v1824 = vmul.f32 %v1766, %v235
    %v1825 = vmul.f32 %v1771, %v236
    %v1826 = vmul.f32 %v1774, %v237
    %v1827 = vmul.f32 %v1779, %v238
    %v1828 = vmul.f32 %v1782, %v239
    %v1829 = vmul.f32 %v1787, %v240
    %v1830 = vmul.f32 %v1790, %v241
    %v1831 = vmul.f32 %v1795, %v242
    %v1832 = vmul.f32 %v1798, %v243
    %v1833 = vadd.f32 %v1801, %v1802
    %v1834 = vadd.f32 %v1833, %v1803
    %v1835 = vadd.f32 %v1834, %v1804
    %v1836 = vadd.f32 %v1835, %v1805
    %v1837 = vadd.f32 %v1836, %v1806
    %v1838 = vadd.f32 %v1837, %v1807
    %v1839 = vadd.f32 %v1838, %v1808
    %v1840 = vadd.f32 %v1839, %v1809
    %v1841 = vadd.f32 %v1840, %v1810
    %v1842 = vadd.f32 %v1841, %v1811
    %v1843 = vadd.f32 %v1842, %v1812
    %v1844 = vadd.f32 %v1843, %v1813
    %v1845 = vadd.f32 %v1844, %v1814
    %v1846 = vadd.f32 %v1845, %v1815
    %v1847 = vadd.f32 %v1846, %v1816
    %v1848 = vadd.f32 %v1847, %v1817
    %v1849 = vadd.f32 %v1848, %v1818
    %v1850 = vadd.f32 %v1849, %v1819
    %v1851 = vadd.f32 %v1850, %v1820
    %v1852 = vadd.f32 %v1851, %v1821
    %v1853 = vadd.f32 %v1852, %v1822
    %v1854 = vadd.f32 %v1853, %v1823
    %v1855 = vadd.f32 %v1854, %v1824
    %v1856 = vadd.f32 %v1855, %v1825
    %v1857 = vadd.f32 %v1856, %v1826
    %v1858 = vadd.f32 %v1857, %v1827
    %v1859 = vadd.f32 %v1858, %v1828
    %v1860 = vadd.f32 %v1859, %v1829
    %v1861 = vadd.f32 %v1860, %v1830
    %v1862 = vadd.f32 %v1861, %v1831
    %v1863 = vadd.f32 %v1862, %v1832
    %v1864 = vrot.slane %v1863, 4
    %v1865 = vadd.f32 %v1863, %v1864
    %v1866 = vrot.slane %v1865, 2
    %v1867 = vadd.f32 %v1865, %v1866
    %v1868 = vrot.slane %v1867, 1
    %v1869 = vadd.f32 %v1867, %v1868
    %v1870 = vmul.f32 %v1869, 0.0625
    %v1871 = vmul.f32 %v1801, %v1675
    %v1872 = vmul.f32 %v1802, %v1678
    %v1873 = vmul.f32 %v1803, %v1683
    %v1874 = vmul.f32 %v1804, %v1686
    %v1875 = vmul.f32 %v1805, %v1691
    %v1876 = vmul.f32 %v1806, %v1694
    %v1877 = vmul.f32 %v1807, %v1699
    %v1878 = vmul.f32 %v1808, %v1702
    %v1879 = vmul.f32 %v1809, %v1707
    %v1880 = vmul.f32 %v1810, %v1710
    %v1881 = vmul.f32 %v1811, %v1715
    %v1882 = vmul.f32 %v1812, %v1718
    %v1883 = vmul.f32 %v1813, %v1723
    %v1884 = vmul.f32 %v1814, %v1726
    %v1885 = vmul.f32 %v1815, %v1731
    %v1886 = vmul.f32 %v1816, %v1734
    %v1887 = vmul.f32 %v1817, %v1739
    %v1888 = vmul.f32 %v1818, %v1742
    %v1889 = vmul.f32 %v1819, %v1747
    %v1890 = vmul.f32 %v1820, %v1750
    %v1891 = vmul.f32 %v1821, %v1755
    %v1892 = vmul.f32 %v1822, %v1758
    %v1893 = vmul.f32 %v1823, %v1763
    %v1894 = vmul.f32 %v1824, %v1766
    %v1895 = vmul.f32 %v1825, %v1771
    %v1896 = vmul.f32 %v1826, %v1774
    %v1897 = vmul.f32 %v1827, %v1779
    %v1898 = vmul.f32 %v1828, %v1782
    %v1899 = vmul.f32 %v1829, %v1787
    %v1900 = vmul.f32 %v1830, %v1790
    %v1901 = vmul.f32 %v1831, %v1795
    %v1902 = vmul.f32 %v1832, %v1798
    %v1903 = vadd.f32 %v1871, %v1872
    %v1904 = vadd.f32 %v1903, %v1873
    %v1905 = vadd.f32 %v1904, %v1874
    %v1906 = vadd.f32 %v1905, %v1875
    %v1907 = vadd.f32 %v1906, %v1876
    %v1908 = vadd.f32 %v1907, %v1877
    %v1909 = vadd.f32 %v1908, %v1878
    %v1910 = vadd.f32 %v1909, %v1879
    %v1911 = vadd.f32 %v1910, %v1880
    %v1912 = vadd.f32 %v1911, %v1881
    %v1913 = vadd.f32 %v1912, %v1882
    %v1914 = vadd.f32 %v1913, %v1883
    %v1915 = vadd.f32 %v1914, %v1884
    %v1916 = vadd.f32 %v1915, %v1885
    %v1917 = vadd.f32 %v1916, %v1886
    %v1918 = vadd.f32 %v1917, %v1887
    %v1919 = vadd.f32 %v1918, %v1888
    %v1920 = vadd.f32 %v1919, %v1889
    %v1921 = vadd.f32 %v1920, %v1890
    %v1922 = vadd.f32 %v1921, %v1891
    %v1923 = vadd.f32 %v1922, %v1892
    %v1924 = vadd.f32 %v1923, %v1893
    %v1925 = vadd.f32 %v1924, %v1894
    %v1926 = vadd.f32 %v1925, %v1895
    %v1927 = vadd.f32 %v1926, %v1896
    %v1928 = vadd.f32 %v1927, %v1897
    %v1929 = vadd.f32 %v1928, %v1898
    %v1930 = vadd.f32 %v1929, %v1899
    %v1931 = vadd.f32 %v1930, %v1900
    %v1932 = vadd.f32 %v1931, %v1901
    %v1933 = vadd.f32 %v1932, %v1902
    %v1934 = vrot.slane %v1933, 4
    %v1935 = vadd.f32 %v1933, %v1934
    %v1936 = vrot.slane %v1935, 2
    %v1937 = vadd.f32 %v1935, %v1936
    %v1938 = vrot.slane %v1937, 1
    %v1939 = vadd.f32 %v1937, %v1938
    %v1940 = vmul.f32 %v1939, 0.0625
    %v1941 = vmul.f32 %v1870, %v1870
    %v1942 = vsub.f32 %v1940, %v1941
    %v1943 = vsub.f32 %v1675, %v1870
    %v1944 = vsub.f32 %v1678, %v1870
    %v1945 = vsub.f32 %v1683, %v1870
    %v1946 = vsub.f32 %v1686, %v1870
    %v1947 = vsub.f32 %v1691, %v1870
    %v1948 = vsub.f32 %v1694, %v1870
    %v1949 = vsub.f32 %v1699, %v1870
    %v1950 = vsub.f32 %v1702, %v1870
    %v1951 = vsub.f32 %v1707, %v1870
    %v1952 = vsub.f32 %v1710, %v1870
    %v1953 = vsub.f32 %v1715, %v1870
    %v1954 = vsub.f32 %v1718, %v1870
    %v1955 = vsub.f32 %v1723, %v1870
    %v1956 = vsub.f32 %v1726, %v1870
    %v1957 = vsub.f32 %v1731, %v1870
    %v1958 = vsub.f32 %v1734, %v1870
    %v1959 = vsub.f32 %v1739, %v1870
    %v1960 = vsub.f32 %v1742, %v1870
    %v1961 = vsub.f32 %v1747, %v1870
    %v1962 = vsub.f32 %v1750, %v1870
    %v1963 = vsub.f32 %v1755, %v1870
    %v1964 = vsub.f32 %v1758, %v1870
    %v1965 = vsub.f32 %v1763, %v1870
    %v1966 = vsub.f32 %v1766, %v1870
    %v1967 = vsub.f32 %v1771, %v1870
    %v1968 = vsub.f32 %v1774, %v1870
    %v1969 = vsub.f32 %v1779, %v1870
    %v1970 = vsub.f32 %v1782, %v1870
    %v1971 = vsub.f32 %v1787, %v1870
    %v1972 = vsub.f32 %v1790, %v1870
    %v1973 = vsub.f32 %v1795, %v1870
    %v1974 = vsub.f32 %v1798, %v1870
    %v1975 = vadd.f32 %v1942, 1e-05
    %v1976 = vrsqrt.pop %v1975
    %v1977 = vmul.f32 %v1943, %v1976
    %v1978 = vmul.f32 %v1944, %v1976
    %v1979 = vmul.f32 %v1945, %v1976
    %v1980 = vmul.f32 %v1946, %v1976
    %v1981 = vmul.f32 %v1947, %v1976
    %v1982 = vmul.f32 %v1948, %v1976
    %v1983 = vmul.f32 %v1949, %v1976
    %v1984 = vmul.f32 %v1950, %v1976
    %v1985 = vmul.f32 %v1951, %v1976
    %v1986 = vmul.f32 %v1952, %v1976
    %v1987 = vmul.f32 %v1953, %v1976
    %v1988 = vmul.f32 %v1954, %v1976
    %v1989 = vmul.f32 %v1955, %v1976
    %v1990 = vmul.f32 %v1956, %v1976
    %v1991 = vmul.f32 %v1957, %v1976
    %v1992 = vmul.f32 %v1958, %v1976
    %v1993 = vmul.f32 %v1959, %v1976
    %v1994 = vmul.f32 %v1960, %v1976
    %v1995 = vmul.f32 %v1961, %v1976
    %v1996 = vmul.f32 %v1962, %v1976
    %v1997 = vmul.f32 %v1963, %v1976
    %v1998 = vmul.f32 %v1964, %v1976
    %v1999 = vmul.f32 %v1965, %v1976
    %v2000 = vmul.f32 %v1966, %v1976
    %v2001 = vmul.f32 %v1967, %v1976
    %v2002 = vmul.f32 %v1968, %v1976
    %v2003 = vmul.f32 %v1969, %v1976
    %v2004 = vmul.f32 %v1970, %v1976
    %v2005 = vmul.f32 %v1971, %v1976
    %v2006 = vmul.f32 %v1972, %v1976
    %v2007 = vmul.f32 %v1973, %v1976
    %v2008 = vmul.f32 %v1974, %v1976
    %v2009 = vld [vmem:[%s6] sm:$0x1]
    %v2011 = vlaneseq
    %v2012 = vshrl.u32 %v2011, 7
    %v2013 = vsub.s32 0, %v2012
    %v2014 = vrot.slane %v2009, %v2013
    %v2016 = vmul.f32 %v1977, %v2014
    %v2017 = vmul.f32 %v1978, %v2014
    %v2018 = vmul.f32 %v1979, %v2014
    %v2019 = vmul.f32 %v1980, %v2014
    %v2020 = vmul.f32 %v1981, %v2014
    %v2021 = vmul.f32 %v1982, %v2014
    %v2022 = vmul.f32 %v1983, %v2014
    %v2023 = vmul.f32 %v1984, %v2014
    %v2024 = vmul.f32 %v1985, %v2014
    %v2025 = vmul.f32 %v1986, %v2014
    %v2026 = vmul.f32 %v1987, %v2014
    %v2027 = vmul.f32 %v1988, %v2014
    %v2028 = vmul.f32 %v1989, %v2014
    %v2029 = vmul.f32 %v1990, %v2014
    %v2030 = vmul.f32 %v1991, %v2014
    %v2031 = vmul.f32 %v1992, %v2014
    %v2032 = vmul.f32 %v1993, %v2014
    %v2033 = vmul.f32 %v1994, %v2014
    %v2034 = vmul.f32 %v1995, %v2014
    %v2035 = vmul.f32 %v1996, %v2014
    %v2036 = vmul.f32 %v1997, %v2014
    %v2037 = vmul.f32 %v1998, %v2014
    %v2038 = vmul.f32 %v1999, %v2014
    %v2039 = vmul.f32 %v2000, %v2014
    %v2040 = vmul.f32 %v2001, %v2014
    %v2041 = vmul.f32 %v2002, %v2014
    %v2042 = vmul.f32 %v2003, %v2014
    %v2043 = vmul.f32 %v2004, %v2014
    %v2044 = vmul.f32 %v2005, %v2014
    %v2045 = vmul.f32 %v2006, %v2014
    %v2046 = vmul.f32 %v2007, %v2014
    %v2047 = vmul.f32 %v2008, %v2014
    %v2048 = vld [vmem:[%s7] sm:$0x1]
    %v2050 = vlaneseq
    %v2051 = vshrl.u32 %v2050, 7
    %v2052 = vsub.s32 0, %v2051
    %v2053 = vrot.slane %v2048, %v2052
    %v2055 = vadd.f32 %v2016, %v2053
    %v2056 = vadd.f32 %v2017, %v2053
    %v2057 = vadd.f32 %v2018, %v2053
    %v2058 = vadd.f32 %v2019, %v2053
    %v2059 = vadd.f32 %v2020, %v2053
    %v2060 = vadd.f32 %v2021, %v2053
    %v2061 = vadd.f32 %v2022, %v2053
    %v2062 = vadd.f32 %v2023, %v2053
    %v2063 = vadd.f32 %v2024, %v2053
    %v2064 = vadd.f32 %v2025, %v2053
    %v2065 = vadd.f32 %v2026, %v2053
    %v2066 = vadd.f32 %v2027, %v2053
    %v2067 = vadd.f32 %v2028, %v2053
    %v2068 = vadd.f32 %v2029, %v2053
    %v2069 = vadd.f32 %v2030, %v2053
    %v2070 = vadd.f32 %v2031, %v2053
    %v2071 = vadd.f32 %v2032, %v2053
    %v2072 = vadd.f32 %v2033, %v2053
    %v2073 = vadd.f32 %v2034, %v2053
    %v2074 = vadd.f32 %v2035, %v2053
    %v2075 = vadd.f32 %v2036, %v2053
    %v2076 = vadd.f32 %v2037, %v2053
    %v2077 = vadd.f32 %v2038, %v2053
    %v2078 = vadd.f32 %v2039, %v2053
    %v2079 = vadd.f32 %v2040, %v2053
    %v2080 = vadd.f32 %v2041, %v2053
    %v2081 = vadd.f32 %v2042, %v2053
    %v2082 = vadd.f32 %v2043, %v2053
    %v2083 = vadd.f32 %v2044, %v2053
    %v2084 = vadd.f32 %v2045, %v2053
    %v2085 = vadd.f32 %v2046, %v2053
    %v2086 = vadd.f32 %v2047, %v2053
    %v2087 = vmax.f32 %v2055, 0.0
    %v2088 = vmax.f32 %v2056, 0.0
    %v2089 = vmax.f32 %v2057, 0.0
    %v2090 = vmax.f32 %v2058, 0.0
    %v2091 = vmax.f32 %v2059, 0.0
    %v2092 = vmax.f32 %v2060, 0.0
    %v2093 = vmax.f32 %v2061, 0.0
    %v2094 = vmax.f32 %v2062, 0.0
    %v2095 = vmax.f32 %v2063, 0.0
    %v2096 = vmax.f32 %v2064, 0.0
    %v2097 = vmax.f32 %v2065, 0.0
    %v2098 = vmax.f32 %v2066, 0.0
    %v2099 = vmax.f32 %v2067, 0.0
    %v2100 = vmax.f32 %v2068, 0.0
    %v2101 = vmax.f32 %v2069, 0.0
    %v2102 = vmax.f32 %v2070, 0.0
    %v2103 = vmax.f32 %v2071, 0.0
    %v2104 = vmax.f32 %v2072, 0.0
    %v2105 = vmax.f32 %v2073, 0.0
    %v2106 = vmax.f32 %v2074, 0.0
    %v2107 = vmax.f32 %v2075, 0.0
    %v2108 = vmax.f32 %v2076, 0.0
    %v2109 = vmax.f32 %v2077, 0.0
    %v2110 = vmax.f32 %v2078, 0.0
    %v2111 = vmax.f32 %v2079, 0.0
    %v2112 = vmax.f32 %v2080, 0.0
    %v2113 = vmax.f32 %v2081, 0.0
    %v2114 = vmax.f32 %v2082, 0.0
    %v2115 = vmax.f32 %v2083, 0.0
    %v2116 = vmax.f32 %v2084, 0.0
    %v2117 = vmax.f32 %v2085, 0.0
    %v2118 = vmax.f32 %v2086, 0.0
    %v2119 = vpack.c.bf16 %v2088, %v2087
    %v2120 = vpack.c.bf16 %v2090, %v2089
    %v2121 = vpack.c.bf16 %v2092, %v2091
    %v2122 = vpack.c.bf16 %v2094, %v2093
    %v2123 = vpack.c.bf16 %v2096, %v2095
    %v2124 = vpack.c.bf16 %v2098, %v2097
    %v2125 = vpack.c.bf16 %v2100, %v2099
    %v2126 = vpack.c.bf16 %v2102, %v2101
    %v2127 = vpack.c.bf16 %v2104, %v2103
    %v2128 = vpack.c.bf16 %v2106, %v2105
    %v2129 = vpack.c.bf16 %v2108, %v2107
    %v2130 = vpack.c.bf16 %v2110, %v2109
    %v2131 = vpack.c.bf16 %v2112, %v2111
    %v2132 = vpack.c.bf16 %v2114, %v2113
    %v2133 = vpack.c.bf16 %v2116, %v2115
    %v2134 = vpack.c.bf16 %v2118, %v2117
    %v2135 = vld [vmem:[#allocation2] sm:$0xff]
    %v2136 = vld [vmem:[#allocation2 + $0x8] sm:$0xff]
    %v2137 = vld [vmem:[#allocation2 + $0x10] sm:$0xff]
    %v2138 = vld [vmem:[#allocation2 + $0x18] sm:$0xff]
    %v2139 = vld [vmem:[#allocation2 + $0x20] sm:$0xff]
    %v2140 = vld [vmem:[#allocation2 + $0x28] sm:$0xff]
    %v2141 = vld [vmem:[#allocation2 + $0x30] sm:$0xff]
    %v2142 = vld [vmem:[#allocation2 + $0x38] sm:$0xff]
    %v2143 = vld [vmem:[#allocation2 + $0x40] sm:$0xff]
    %v2144 = vld [vmem:[#allocation2 + $0x48] sm:$0xff]
    %v2145 = vld [vmem:[#allocation2 + $0x50] sm:$0xff]
    %v2146 = vld [vmem:[#allocation2 + $0x58] sm:$0xff]
    %v2147 = vld [vmem:[#allocation2 + $0x60] sm:$0xff]
    %v2148 = vld [vmem:[#allocation2 + $0x68] sm:$0xff]
    %v2149 = vld [vmem:[#allocation2 + $0x70] sm:$0xff]
    %v2150 = vld [vmem:[#allocation2 + $0x78] sm:$0xff]
    %v2151 = vld [vmem:[#allocation2 + $0x80] sm:$0xff]
    %v2152 = vld [vmem:[#allocation2 + $0x88] sm:$0xff]
    %v2153 = vld [vmem:[#allocation2 + $0x90] sm:$0xff]
    %v2154 = vld [vmem:[#allocation2 + $0x98] sm:$0xff]
    %v2155 = vld [vmem:[#allocation2 + $0xa0] sm:$0xff]
    %v2156 = vld [vmem:[#allocation2 + $0xa8] sm:$0xff]
    %v2157 = vld [vmem:[#allocation2 + $0xb0] sm:$0xff]
    %v2158 = vld [vmem:[#allocation2 + $0xb8] sm:$0xff]
    %v2159 = vld [vmem:[#allocation2 + $0xc0] sm:$0xff]
    %v2160 = vld [vmem:[#allocation2 + $0xc8] sm:$0xff]
    %v2161 = vld [vmem:[#allocation2 + $0xd0] sm:$0xff]
    %v2162 = vld [vmem:[#allocation2 + $0xd8] sm:$0xff]
    %v2163 = vld [vmem:[#allocation2 + $0xe0] sm:$0xff]
    %v2164 = vld [vmem:[#allocation2 + $0xe8] sm:$0xff]
    %v2165 = vld [vmem:[#allocation2 + $0xf0] sm:$0xff]
    %v2166 = vld [vmem:[#allocation2 + $0xf8] sm:$0xff]
    %v2199 = vunpack.c.l.b16 %v2135
    %v2200 = vunpack.c.h.b16 %v2135
    %v2201 = vunpack.c.l.b16 %v2136
    %v2202 = vunpack.c.h.b16 %v2136
    %v2203 = vunpack.c.l.b16 %v2137
    %v2204 = vunpack.c.h.b16 %v2137
    %v2205 = vunpack.c.l.b16 %v2138
    %v2206 = vunpack.c.h.b16 %v2138
    %v2207 = vunpack.c.l.b16 %v2139
    %v2208 = vunpack.c.h.b16 %v2139
    %v2209 = vunpack.c.l.b16 %v2140
    %v2210 = vunpack.c.h.b16 %v2140
    %v2211 = vunpack.c.l.b16 %v2141
    %v2212 = vunpack.c.h.b16 %v2141
    %v2213 = vunpack.c.l.b16 %v2142
    %v2214 = vunpack.c.h.b16 %v2142
    %v2215 = vunpack.c.l.b16 %v2143
    %v2216 = vunpack.c.h.b16 %v2143
    %v2217 = vunpack.c.l.b16 %v2144
    %v2218 = vunpack.c.h.b16 %v2144
    %v2219 = vunpack.c.l.b16 %v2145
    %v2220 = vunpack.c.h.b16 %v2145
    %v2221 = vunpack.c.l.b16 %v2146
    %v2222 = vunpack.c.h.b16 %v2146
    %v2223 = vunpack.c.l.b16 %v2147
    %v2224 = vunpack.c.h.b16 %v2147
    %v2225 = vunpack.c.l.b16 %v2148
    %v2226 = vunpack.c.h.b16 %v2148
    %v2227 = vunpack.c.l.b16 %v2149
    %v2228 = vunpack.c.h.b16 %v2149
    %v2229 = vunpack.c.l.b16 %v2150
    %v2230 = vunpack.c.h.b16 %v2150
    %v2231 = vunpack.c.l.b16 %v2151
    %v2232 = vunpack.c.h.b16 %v2151
    %v2233 = vunpack.c.l.b16 %v2152
    %v2234 = vunpack.c.h.b16 %v2152
    %v2235 = vunpack.c.l.b16 %v2153
    %v2236 = vunpack.c.h.b16 %v2153
    %v2237 = vunpack.c.l.b16 %v2154
    %v2238 = vunpack.c.h.b16 %v2154
    %v2239 = vunpack.c.l.b16 %v2155
    %v2240 = vunpack.c.h.b16 %v2155
    %v2241 = vunpack.c.l.b16 %v2156
    %v2242 = vunpack.c.h.b16 %v2156
    %v2243 = vunpack.c.l.b16 %v2157
    %v2244 = vunpack.c.h.b16 %v2157
    %v2245 = vunpack.c.l.b16 %v2158
    %v2246 = vunpack.c.h.b16 %v2158
    %v2247 = vunpack.c.l.b16 %v2159
    %v2248 = vunpack.c.h.b16 %v2159
    %v2249 = vunpack.c.l.b16 %v2160
    %v2250 = vunpack.c.h.b16 %v2160
    %v2251 = vunpack.c.l.b16 %v2161
    %v2252 = vunpack.c.h.b16 %v2161
    %v2253 = vunpack.c.l.b16 %v2162
    %v2254 = vunpack.c.h.b16 %v2162
    %v2255 = vunpack.c.l.b16 %v2163
    %v2256 = vunpack.c.h.b16 %v2163
    %v2257 = vunpack.c.l.b16 %v2164
    %v2258 = vunpack.c.h.b16 %v2164
    %v2259 = vunpack.c.l.b16 %v2165
    %v2260 = vunpack.c.h.b16 %v2165
    %v2261 = vunpack.c.l.b16 %v2166
    %v2262 = vunpack.c.h.b16 %v2166
    %v2263 = vpack.c.b16 %v2201, %v2199
    %v2264 = vpack.c.b16 %v2202, %v2200
    %v2265 = vpack.c.b16 %v2205, %v2203
    %v2266 = vpack.c.b16 %v2206, %v2204
    %v2267 = vpack.c.b16 %v2209, %v2207
    %v2268 = vpack.c.b16 %v2210, %v2208
    %v2269 = vpack.c.b16 %v2213, %v2211
    %v2270 = vpack.c.b16 %v2214, %v2212
    %v2271 = vpack.c.b16 %v2217, %v2215
    %v2272 = vpack.c.b16 %v2218, %v2216
    %v2273 = vpack.c.b16 %v2221, %v2219
    %v2274 = vpack.c.b16 %v2222, %v2220
    %v2275 = vpack.c.b16 %v2225, %v2223
    %v2276 = vpack.c.b16 %v2226, %v2224
    %v2277 = vpack.c.b16 %v2229, %v2227
    %v2278 = vpack.c.b16 %v2230, %v2228
    %v2279 = vpack.c.b16 %v2233, %v2231
    %v2280 = vpack.c.b16 %v2234, %v2232
    %v2281 = vpack.c.b16 %v2237, %v2235
    %v2282 = vpack.c.b16 %v2238, %v2236
    %v2283 = vpack.c.b16 %v2241, %v2239
    %v2284 = vpack.c.b16 %v2242, %v2240
    %v2285 = vpack.c.b16 %v2245, %v2243
    %v2286 = vpack.c.b16 %v2246, %v2244
    %v2287 = vpack.c.b16 %v2249, %v2247
    %v2288 = vpack.c.b16 %v2250, %v2248
    %v2289 = vpack.c.b16 %v2253, %v2251
    %v2290 = vpack.c.b16 %v2254, %v2252
    %v2291 = vpack.c.b16 %v2257, %v2255
    %v2292 = vpack.c.b16 %v2258, %v2256
    %v2293 = vpack.c.b16 %v2261, %v2259
    %v2294 = vpack.c.b16 %v2262, %v2260
    %2327 = vmatprep.subr.bf16.mxu0 0
    %2328 = vmatpush1.bf16.msra.mxu0 %v2126
    %2329 = vmatprep.subr.bf16.mxu0 0
    %2330 = vmatpush1.bf16.msra.mxu0 %v2125
    %2331 = vmatprep.subr.bf16.mxu0 0
    %2332 = vmatpush1.bf16.msra.mxu0 %v2124
    %2333 = vmatprep.subr.bf16.mxu0 0
    %2334 = vmatpush1.bf16.msra.mxu0 %v2123
    %2335 = vmatprep.subr.bf16.mxu0 0
    %2336 = vmatpush1.bf16.msra.mxu0 %v2122
    %2337 = vmatprep.subr.bf16.mxu0 0
    %2338 = vmatpush1.bf16.msra.mxu0 %v2121
    %2339 = vmatprep.subr.bf16.mxu0 0
    %2340 = vmatpush1.bf16.msra.mxu0 %v2120
    %2341 = vmatprep.subr.bf16.mxu0 0
    %2342 = vmatpush1.bf16.msra.mxu0 %v2119
    %2343 = vmatprep.subr.bf16.mxu0 0
    %2344 = vmatpush2.bf16.msra.mxu0 %v2134
    %2345 = vmatprep.subr.bf16.mxu0 0
    %2346 = vmatpush2.bf16.msra.mxu0 %v2133
    %2347 = vmatprep.subr.bf16.mxu0 0
    %2348 = vmatpush2.bf16.msra.mxu0 %v2132
    %2349 = vmatprep.subr.bf16.mxu0 0
    %2350 = vmatpush2.bf16.msra.mxu0 %v2131
    %2351 = vmatprep.subr.bf16.mxu0 0
    %2352 = vmatpush2.bf16.msra.mxu0 %v2130
    %2353 = vmatprep.subr.bf16.mxu0 0
    %2354 = vmatpush2.bf16.msra.mxu0 %v2129
    %2355 = vmatprep.subr.bf16.mxu0 0
    %2356 = vmatpush2.bf16.msra.mxu0 %v2128
    %2357 = vmatprep.subr.bf16.mxu0 0
    %2358 = vmatpush2.bf16.msra.mxu0 %v2127
    %2359 = vmatprep.mubr.bf16.mxu0 %v2264
    %2360 = vmatmul.mubr.bf16.gmra.mxu0 %v2263
    %v2361 = vpop.f32.mrf.mxu0
    %v2362 = vadd.f32 0.0, %v2361
    %v2363 = vpop.f32.mrf.mxu0
    %v2364 = vpop.f32.mrf.mxu0
    %v2365 = vadd.f32 0.0, %v2364
    %v2366 = vpop.f32.mrf.mxu0
    %2367 = vmatprep.mubr.bf16.mxu0 %v2266
    %2368 = vmatmul.mubr.bf16.gmra.mxu0 %v2265
    %v2369 = vpop.f32.mrf.mxu0
    %v2370 = vadd.f32 0.0, %v2369
    %v2371 = vpop.f32.mrf.mxu0
    %v2372 = vpop.f32.mrf.mxu0
    %v2373 = vadd.f32 0.0, %v2372
    %v2374 = vpop.f32.mrf.mxu0
    %2375 = vmatprep.mubr.bf16.mxu0 %v2268
    %2376 = vmatmul.mubr.bf16.gmra.mxu0 %v2267
    %v2377 = vpop.f32.mrf.mxu0
    %v2378 = vadd.f32 0.0, %v2377
    %v2379 = vpop.f32.mrf.mxu0
    %v2380 = vpop.f32.mrf.mxu0
    %v2381 = vadd.f32 0.0, %v2380
    %v2382 = vpop.f32.mrf.mxu0
    %2383 = vmatprep.mubr.bf16.mxu0 %v2270
    %2384 = vmatmul.mubr.bf16.gmra.mxu0 %v2269
    %v2385 = vpop.f32.mrf.mxu0
    %v2386 = vadd.f32 0.0, %v2385
    %v2387 = vpop.f32.mrf.mxu0
    %v2388 = vpop.f32.mrf.mxu0
    %v2389 = vadd.f32 0.0, %v2388
    %v2390 = vpop.f32.mrf.mxu0
    %2391 = vmatprep.mubr.bf16.mxu0 %v2272
    %2392 = vmatmul.mubr.bf16.gmra.mxu0 %v2271
    %v2393 = vpop.f32.mrf.mxu0
    %v2394 = vadd.f32 0.0, %v2393
    %v2395 = vpop.f32.mrf.mxu0
    %v2396 = vpop.f32.mrf.mxu0
    %v2397 = vadd.f32 0.0, %v2396
    %v2398 = vpop.f32.mrf.mxu0
    %2399 = vmatprep.mubr.bf16.mxu0 %v2274
    %2400 = vmatmul.mubr.bf16.gmra.mxu0 %v2273
    %v2401 = vpop.f32.mrf.mxu0
    %v2402 = vadd.f32 0.0, %v2401
    %v2403 = vpop.f32.mrf.mxu0
    %v2404 = vpop.f32.mrf.mxu0
    %v2405 = vadd.f32 0.0, %v2404
    %v2406 = vpop.f32.mrf.mxu0
    %2407 = vmatprep.mubr.bf16.mxu0 %v2276
    %2408 = vmatmul.mubr.bf16.gmra.mxu0 %v2275
    %v2409 = vpop.f32.mrf.mxu0
    %v2410 = vadd.f32 0.0, %v2409
    %v2411 = vpop.f32.mrf.mxu0
    %v2412 = vpop.f32.mrf.mxu0
    %v2413 = vadd.f32 0.0, %v2412
    %v2414 = vpop.f32.mrf.mxu0
    %2415 = vmatprep.mubr.bf16.mxu0 %v2278
    %2416 = vmatmul.mubr.bf16.gmra.mxu0 %v2277
    %v2417 = vpop.f32.mrf.mxu0
    %v2418 = vadd.f32 0.0, %v2417
    %v2419 = vpop.f32.mrf.mxu0
    %v2420 = vpop.f32.mrf.mxu0
    %v2421 = vadd.f32 0.0, %v2420
    %v2422 = vpop.f32.mrf.mxu0
    %2423 = vmatprep.mubr.bf16.mxu0 %v2280
    %2424 = vmatmul.mubr.bf16.gmra.mxu0 %v2279
    %v2425 = vpop.f32.mrf.mxu0
    %v2426 = vadd.f32 0.0, %v2425
    %v2427 = vpop.f32.mrf.mxu0
    %v2428 = vpop.f32.mrf.mxu0
    %v2429 = vadd.f32 0.0, %v2428
    %v2430 = vpop.f32.mrf.mxu0
    %2431 = vmatprep.mubr.bf16.mxu0 %v2282
    %2432 = vmatmul.mubr.bf16.gmra.mxu0 %v2281
    %v2433 = vpop.f32.mrf.mxu0
    %v2434 = vadd.f32 0.0, %v2433
    %v2435 = vpop.f32.mrf.mxu0
    %v2436 = vpop.f32.mrf.mxu0
    %v2437 = vadd.f32 0.0, %v2436
    %v2438 = vpop.f32.mrf.mxu0
    %2439 = vmatprep.mubr.bf16.mxu0 %v2284
    %2440 = vmatmul.mubr.bf16.gmra.mxu0 %v2283
    %v2441 = vpop.f32.mrf.mxu0
    %v2442 = vadd.f32 0.0, %v2441
    %v2443 = vpop.f32.mrf.mxu0
    %v2444 = vpop.f32.mrf.mxu0
    %v2445 = vadd.f32 0.0, %v2444
    %v2446 = vpop.f32.mrf.mxu0
    %2447 = vmatprep.mubr.bf16.mxu0 %v2286
    %2448 = vmatmul.mubr.bf16.gmra.mxu0 %v2285
    %v2449 = vpop.f32.mrf.mxu0
    %v2450 = vadd.f32 0.0, %v2449
    %v2451 = vpop.f32.mrf.mxu0
    %v2452 = vpop.f32.mrf.mxu0
    %v2453 = vadd.f32 0.0, %v2452
    %v2454 = vpop.f32.mrf.mxu0
    %2455 = vmatprep.mubr.bf16.mxu0 %v2288
    %2456 = vmatmul.mubr.bf16.gmra.mxu0 %v2287
    %v2457 = vpop.f32.mrf.mxu0
    %v2458 = vadd.f32 0.0, %v2457
    %v2459 = vpop.f32.mrf.mxu0
    %v2460 = vpop.f32.mrf.mxu0
    %v2461 = vadd.f32 0.0, %v2460
    %v2462 = vpop.f32.mrf.mxu0
    %2463 = vmatprep.mubr.bf16.mxu0 %v2290
    %2464 = vmatmul.mubr.bf16.gmra.mxu0 %v2289
    %v2465 = vpop.f32.mrf.mxu0
    %v2466 = vadd.f32 0.0, %v2465
    %v2467 = vpop.f32.mrf.mxu0
    %v2468 = vpop.f32.mrf.mxu0
    %v2469 = vadd.f32 0.0, %v2468
    %v2470 = vpop.f32.mrf.mxu0
    %2471 = vmatprep.mubr.bf16.mxu0 %v2292
    %2472 = vmatmul.mubr.bf16.gmra.mxu0 %v2291
    %v2473 = vpop.f32.mrf.mxu0
    %v2474 = vadd.f32 0.0, %v2473
    %v2475 = vpop.f32.mrf.mxu0
    %v2476 = vpop.f32.mrf.mxu0
    %v2477 = vadd.f32 0.0, %v2476
    %v2478 = vpop.f32.mrf.mxu0
    %2479 = vmatprep.mubr.bf16.mxu0 %v2294
    %2480 = vmatmul.mubr.bf16.gmra.mxu0 %v2293
    %v2481 = vpop.f32.mrf.mxu0
    %v2482 = vadd.f32 0.0, %v2481
    %v2483 = vpop.f32.mrf.mxu0
    %v2484 = vpop.f32.mrf.mxu0
    %v2485 = vadd.f32 0.0, %v2484
    %v2486 = vpop.f32.mrf.mxu0
    %2487 = vdwg.mxu0
    %v2488 = vpack.c.bf16 %v2365, %v2362
    %v2489 = vpack.c.bf16 %v2373, %v2370
    %v2490 = vpack.c.bf16 %v2381, %v2378
    %v2491 = vpack.c.bf16 %v2389, %v2386
    %v2492 = vpack.c.bf16 %v2397, %v2394
    %v2493 = vpack.c.bf16 %v2405, %v2402
    %v2494 = vpack.c.bf16 %v2413, %v2410
    %v2495 = vpack.c.bf16 %v2421, %v2418
    %v2496 = vpack.c.bf16 %v2429, %v2426
    %v2497 = vpack.c.bf16 %v2437, %v2434
    %v2498 = vpack.c.bf16 %v2445, %v2442
    %v2499 = vpack.c.bf16 %v2453, %v2450
    %v2500 = vpack.c.bf16 %v2461, %v2458
    %v2501 = vpack.c.bf16 %v2469, %v2466
    %v2502 = vpack.c.bf16 %v2477, %v2474
    %v2503 = vpack.c.bf16 %v2485, %v2482
    %v2520 = vunpack.c.l.b16 %v2488
    %v2521 = vunpack.c.h.b16 %v2488
    %v2522 = vunpack.c.l.b16 %v2489
    %v2523 = vunpack.c.h.b16 %v2489
    %v2524 = vunpack.c.l.b16 %v2490
    %v2525 = vunpack.c.h.b16 %v2490
    %v2526 = vunpack.c.l.b16 %v2491
    %v2527 = vunpack.c.h.b16 %v2491
    %v2528 = vunpack.c.l.b16 %v2492
    %v2529 = vunpack.c.h.b16 %v2492
    %v2530 = vunpack.c.l.b16 %v2493
    %v2531 = vunpack.c.h.b16 %v2493
    %v2532 = vunpack.c.l.b16 %v2494
    %v2533 = vunpack.c.h.b16 %v2494
    %v2534 = vunpack.c.l.b16 %v2495
    %v2535 = vunpack.c.h.b16 %v2495
    %v2536 = vunpack.c.l.b16 %v2496
    %v2537 = vunpack.c.h.b16 %v2496
    %v2538 = vunpack.c.l.b16 %v2497
    %v2539 = vunpack.c.h.b16 %v2497
    %v2540 = vunpack.c.l.b16 %v2498
    %v2541 = vunpack.c.h.b16 %v2498
    %v2542 = vunpack.c.l.b16 %v2499
    %v2543 = vunpack.c.h.b16 %v2499
    %v2544 = vunpack.c.l.b16 %v2500
    %v2545 = vunpack.c.h.b16 %v2500
    %v2546 = vunpack.c.l.b16 %v2501
    %v2547 = vunpack.c.h.b16 %v2501
    %v2548 = vunpack.c.l.b16 %v2502
    %v2549 = vunpack.c.h.b16 %v2502
    %v2550 = vunpack.c.l.b16 %v2503
    %v2551 = vunpack.c.h.b16 %v2503
    %v2552 = vpack.c.b16 %v2520, %v2520
    %v2553 = vpack.c.b16 %v2521, %v2521
    %v2554 = vpack.c.b16 %v2522, %v2522
    %v2555 = vpack.c.b16 %v2523, %v2523
    %v2556 = vpack.c.b16 %v2524, %v2524
    %v2557 = vpack.c.b16 %v2525, %v2525
    %v2558 = vpack.c.b16 %v2526, %v2526
    %v2559 = vpack.c.b16 %v2527, %v2527
    %v2560 = vpack.c.b16 %v2528, %v2528
    %v2561 = vpack.c.b16 %v2529, %v2529
    %v2562 = vpack.c.b16 %v2530, %v2530
    %v2563 = vpack.c.b16 %v2531, %v2531
    %v2564 = vpack.c.b16 %v2532, %v2532
    %v2565 = vpack.c.b16 %v2533, %v2533
    %v2566 = vpack.c.b16 %v2534, %v2534
    %v2567 = vpack.c.b16 %v2535, %v2535
    %v2568 = vpack.c.b16 %v2536, %v2536
    %v2569 = vpack.c.b16 %v2537, %v2537
    %v2570 = vpack.c.b16 %v2538, %v2538
    %v2571 = vpack.c.b16 %v2539, %v2539
    %v2572 = vpack.c.b16 %v2540, %v2540
    %v2573 = vpack.c.b16 %v2541, %v2541
    %v2574 = vpack.c.b16 %v2542, %v2542
    %v2575 = vpack.c.b16 %v2543, %v2543
    %v2576 = vpack.c.b16 %v2544, %v2544
    %v2577 = vpack.c.b16 %v2545, %v2545
    %v2578 = vpack.c.b16 %v2546, %v2546
    %v2579 = vpack.c.b16 %v2547, %v2547
    %v2580 = vpack.c.b16 %v2548, %v2548
    %v2581 = vpack.c.b16 %v2549, %v2549
    %v2582 = vpack.c.b16 %v2550, %v2550
    %v2583 = vpack.c.b16 %v2551, %v2551
    %2616 = vst [vmem:[#allocation4] sm:$0xf] %v2552
    %2617 = vst [vmem:[#allocation4 + $0x8] sm:$0xf] %v2553
    %2618 = vst [vmem:[#allocation4 + $0x10] sm:$0xf] %v2554
    %2619 = vst [vmem:[#allocation4 + $0x18] sm:$0xf] %v2555
    %2620 = vst [vmem:[#allocation4 + $0x20] sm:$0xf] %v2556
    %2621 = vst [vmem:[#allocation4 + $0x28] sm:$0xf] %v2557
    %2622 = vst [vmem:[#allocation4 + $0x30] sm:$0xf] %v2558
    %2623 = vst [vmem:[#allocation4 + $0x38] sm:$0xf] %v2559
    %2624 = vst [vmem:[#allocation4 + $0x40] sm:$0xf] %v2560
    %2625 = vst [vmem:[#allocation4 + $0x48] sm:$0xf] %v2561
    %2626 = vst [vmem:[#allocation4 + $0x50] sm:$0xf] %v2562
    %2627 = vst [vmem:[#allocation4 + $0x58] sm:$0xf] %v2563
    %2628 = vst [vmem:[#allocation4 + $0x60] sm:$0xf] %v2564
    %2629 = vst [vmem:[#allocation4 + $0x68] sm:$0xf] %v2565
    %2630 = vst [vmem:[#allocation4 + $0x70] sm:$0xf] %v2566
    %2631 = vst [vmem:[#allocation4 + $0x78] sm:$0xf] %v2567
    %2632 = vst [vmem:[#allocation4 + $0x80] sm:$0xf] %v2568
    %2633 = vst [vmem:[#allocation4 + $0x88] sm:$0xf] %v2569
    %2634 = vst [vmem:[#allocation4 + $0x90] sm:$0xf] %v2570
    %2635 = vst [vmem:[#allocation4 + $0x98] sm:$0xf] %v2571
    %2636 = vst [vmem:[#allocation4 + $0xa0] sm:$0xf] %v2572
    %2637 = vst [vmem:[#allocation4 + $0xa8] sm:$0xf] %v2573
    %2638 = vst [vmem:[#allocation4 + $0xb0] sm:$0xf] %v2574
    %2639 = vst [vmem:[#allocation4 + $0xb8] sm:$0xf] %v2575
    %2640 = vst [vmem:[#allocation4 + $0xc0] sm:$0xf] %v2576
    %2641 = vst [vmem:[#allocation4 + $0xc8] sm:$0xf] %v2577
    %2642 = vst [vmem:[#allocation4 + $0xd0] sm:$0xf] %v2578
    %2643 = vst [vmem:[#allocation4 + $0xd8] sm:$0xf] %v2579
    %2644 = vst [vmem:[#allocation4 + $0xe0] sm:$0xf] %v2580
    %2645 = vst [vmem:[#allocation4 + $0xe8] sm:$0xf] %v2581
    %2646 = vst [vmem:[#allocation4 + $0xf0] sm:$0xf] %v2582
    %2647 = vst [vmem:[#allocation4 + $0xf8] sm:$0xf] %v2583
    %v2648 = vpack.c.bf16 %v1678, %v1675
    %v2649 = vpack.c.bf16 %v1686, %v1683
    %v2650 = vpack.c.bf16 %v1694, %v1691
    %v2651 = vpack.c.bf16 %v1702, %v1699
    %v2652 = vpack.c.bf16 %v1710, %v1707
    %v2653 = vpack.c.bf16 %v1718, %v1715
    %v2654 = vpack.c.bf16 %v1726, %v1723
    %v2655 = vpack.c.bf16 %v1734, %v1731
    %v2656 = vpack.c.bf16 %v1742, %v1739
    %v2657 = vpack.c.bf16 %v1750, %v1747
    %v2658 = vpack.c.bf16 %v1758, %v1755
    %v2659 = vpack.c.bf16 %v1766, %v1763
    %v2660 = vpack.c.bf16 %v1774, %v1771
    %v2661 = vpack.c.bf16 %v1782, %v1779
    %v2662 = vpack.c.bf16 %v1790, %v1787
    %v2663 = vpack.c.bf16 %v1798, %v1795
    %v2680 = vunpack.c.l.b16 %v2648
    %v2681 = vunpack.c.h.b16 %v2648
    %v2682 = vunpack.c.l.b16 %v2649
    %v2683 = vunpack.c.h.b16 %v2649
    %v2684 = vunpack.c.l.b16 %v2650
    %v2685 = vunpack.c.h.b16 %v2650
    %v2686 = vunpack.c.l.b16 %v2651
    %v2687 = vunpack.c.h.b16 %v2651
    %v2688 = vunpack.c.l.b16 %v2652
    %v2689 = vunpack.c.h.b16 %v2652
    %v2690 = vunpack.c.l.b16 %v2653
    %v2691 = vunpack.c.h.b16 %v2653
    %v2692 = vunpack.c.l.b16 %v2654
    %v2693 = vunpack.c.h.b16 %v2654
    %v2694 = vunpack.c.l.b16 %v2655
    %v2695 = vunpack.c.h.b16 %v2655
    %v2696 = vunpack.c.l.b16 %v2656
    %v2697 = vunpack.c.h.b16 %v2656
    %v2698 = vunpack.c.l.b16 %v2657
    %v2699 = vunpack.c.h.b16 %v2657
    %v2700 = vunpack.c.l.b16 %v2658
    %v2701 = vunpack.c.h.b16 %v2658
    %v2702 = vunpack.c.l.b16 %v2659
    %v2703 = vunpack.c.h.b16 %v2659
    %v2704 = vunpack.c.l.b16 %v2660
    %v2705 = vunpack.c.h.b16 %v2660
    %v2706 = vunpack.c.l.b16 %v2661
    %v2707 = vunpack.c.h.b16 %v2661
    %v2708 = vunpack.c.l.b16 %v2662
    %v2709 = vunpack.c.h.b16 %v2662
    %v2710 = vunpack.c.l.b16 %v2663
    %v2711 = vunpack.c.h.b16 %v2663
    %v2712 = vpack.c.b16 %v2680, %v2680
    %v2713 = vpack.c.b16 %v2681, %v2681
    %v2714 = vpack.c.b16 %v2682, %v2682
    %v2715 = vpack.c.b16 %v2683, %v2683
    %v2716 = vpack.c.b16 %v2684, %v2684
    %v2717 = vpack.c.b16 %v2685, %v2685
    %v2718 = vpack.c.b16 %v2686, %v2686
    %v2719 = vpack.c.b16 %v2687, %v2687
    %v2720 = vpack.c.b16 %v2688, %v2688
    %v2721 = vpack.c.b16 %v2689, %v2689
    %v2722 = vpack.c.b16 %v2690, %v2690
    %v2723 = vpack.c.b16 %v2691, %v2691
    %v2724 = vpack.c.b16 %v2692, %v2692
    %v2725 = vpack.c.b16 %v2693, %v2693
    %v2726 = vpack.c.b16 %v2694, %v2694
    %v2727 = vpack.c.b16 %v2695, %v2695
    %v2728 = vpack.c.b16 %v2696, %v2696
    %v2729 = vpack.c.b16 %v2697, %v2697
    %v2730 = vpack.c.b16 %v2698, %v2698
    %v2731 = vpack.c.b16 %v2699, %v2699
    %v2732 = vpack.c.b16 %v2700, %v2700
    %v2733 = vpack.c.b16 %v2701, %v2701
    %v2734 = vpack.c.b16 %v2702, %v2702
    %v2735 = vpack.c.b16 %v2703, %v2703
    %v2736 = vpack.c.b16 %v2704, %v2704
    %v2737 = vpack.c.b16 %v2705, %v2705
    %v2738 = vpack.c.b16 %v2706, %v2706
    %v2739 = vpack.c.b16 %v2707, %v2707
    %v2740 = vpack.c.b16 %v2708, %v2708
    %v2741 = vpack.c.b16 %v2709, %v2709
    %v2742 = vpack.c.b16 %v2710, %v2710
    %v2743 = vpack.c.b16 %v2711, %v2711
    %2776 = vst [vmem:[#allocation4 + $0x4] sm:$0xf] %v2712
    %2777 = vst [vmem:[#allocation4 + $0xc] sm:$0xf] %v2713
    %2778 = vst [vmem:[#allocation4 + $0x14] sm:$0xf] %v2714
    %2779 = vst [vmem:[#allocation4 + $0x1c] sm:$0xf] %v2715
    %2780 = vst [vmem:[#allocation4 + $0x24] sm:$0xf] %v2716
    %2781 = vst [vmem:[#allocation4 + $0x2c] sm:$0xf] %v2717
    %2782 = vst [vmem:[#allocation4 + $0x34] sm:$0xf] %v2718
    %2783 = vst [vmem:[#allocation4 + $0x3c] sm:$0xf] %v2719
    %2784 = vst [vmem:[#allocation4 + $0x44] sm:$0xf] %v2720
    %2785 = vst [vmem:[#allocation4 + $0x4c] sm:$0xf] %v2721
    %2786 = vst [vmem:[#allocation4 + $0x54] sm:$0xf] %v2722
    %2787 = vst [vmem:[#allocation4 + $0x5c] sm:$0xf] %v2723
    %2788 = vst [vmem:[#allocation4 + $0x64] sm:$0xf] %v2724
    %2789 = vst [vmem:[#allocation4 + $0x6c] sm:$0xf] %v2725
    %2790 = vst [vmem:[#allocation4 + $0x74] sm:$0xf] %v2726
    %2791 = vst [vmem:[#allocation4 + $0x7c] sm:$0xf] %v2727
    %2792 = vst [vmem:[#allocation4 + $0x84] sm:$0xf] %v2728
    %2793 = vst [vmem:[#allocation4 + $0x8c] sm:$0xf] %v2729
    %2794 = vst [vmem:[#allocation4 + $0x94] sm:$0xf] %v2730
    %2795 = vst [vmem:[#allocation4 + $0x9c] sm:$0xf] %v2731
    %2796 = vst [vmem:[#allocation4 + $0xa4] sm:$0xf] %v2732
    %2797 = vst [vmem:[#allocation4 + $0xac] sm:$0xf] %v2733
    %2798 = vst [vmem:[#allocation4 + $0xb4] sm:$0xf] %v2734
    %2799 = vst [vmem:[#allocation4 + $0xbc] sm:$0xf] %v2735
    %2800 = vst [vmem:[#allocation4 + $0xc4] sm:$0xf] %v2736
    %2801 = vst [vmem:[#allocation4 + $0xcc] sm:$0xf] %v2737
    %2802 = vst [vmem:[#allocation4 + $0xd4] sm:$0xf] %v2738
    %2803 = vst [vmem:[#allocation4 + $0xdc] sm:$0xf] %v2739
    %2804 = vst [vmem:[#allocation4 + $0xe4] sm:$0xf] %v2740
    %2805 = vst [vmem:[#allocation4 + $0xec] sm:$0xf] %v2741
    %2806 = vst [vmem:[#allocation4 + $0xf4] sm:$0xf] %v2742
    %2807 = vst [vmem:[#allocation4 + $0xfc] sm:$0xf] %v2743
    %v2808 = vld [vmem:[#allocation4] sm:$0xff]
    %v2809 = vld [vmem:[#allocation4 + $0x8] sm:$0xff]
    %v2810 = vld [vmem:[#allocation4 + $0x10] sm:$0xff]
    %v2811 = vld [vmem:[#allocation4 + $0x18] sm:$0xff]
    %v2812 = vld [vmem:[#allocation4 + $0x20] sm:$0xff]
    %v2813 = vld [vmem:[#allocation4 + $0x28] sm:$0xff]
    %v2814 = vld [vmem:[#allocation4 + $0x30] sm:$0xff]
    %v2815 = vld [vmem:[#allocation4 + $0x38] sm:$0xff]
    %v2816 = vld [vmem:[#allocation4 + $0x40] sm:$0xff]
    %v2817 = vld [vmem:[#allocation4 + $0x48] sm:$0xff]
    %v2818 = vld [vmem:[#allocation4 + $0x50] sm:$0xff]
    %v2819 = vld [vmem:[#allocation4 + $0x58] sm:$0xff]
    %v2820 = vld [vmem:[#allocation4 + $0x60] sm:$0xff]
    %v2821 = vld [vmem:[#allocation4 + $0x68] sm:$0xff]
    %v2822 = vld [vmem:[#allocation4 + $0x70] sm:$0xff]
    %v2823 = vld [vmem:[#allocation4 + $0x78] sm:$0xff]
    %v2824 = vld [vmem:[#allocation4 + $0x80] sm:$0xff]
    %v2825 = vld [vmem:[#allocation4 + $0x88] sm:$0xff]
    %v2826 = vld [vmem:[#allocation4 + $0x90] sm:$0xff]
    %v2827 = vld [vmem:[#allocation4 + $0x98] sm:$0xff]
    %v2828 = vld [vmem:[#allocation4 + $0xa0] sm:$0xff]
    %v2829 = vld [vmem:[#allocation4 + $0xa8] sm:$0xff]
    %v2830 = vld [vmem:[#allocation4 + $0xb0] sm:$0xff]
    %v2831 = vld [vmem:[#allocation4 + $0xb8] sm:$0xff]
    %v2832 = vld [vmem:[#allocation4 + $0xc0] sm:$0xff]
    %v2833 = vld [vmem:[#allocation4 + $0xc8] sm:$0xff]
    %v2834 = vld [vmem:[#allocation4 + $0xd0] sm:$0xff]
    %v2835 = vld [vmem:[#allocation4 + $0xd8] sm:$0xff]
    %v2836 = vld [vmem:[#allocation4 + $0xe0] sm:$0xff]
    %v2837 = vld [vmem:[#allocation4 + $0xe8] sm:$0xff]
    %v2838 = vld [vmem:[#allocation4 + $0xf0] sm:$0xff]
    %v2839 = vld [vmem:[#allocation4 + $0xf8] sm:$0xff]
    %s2840 = scalar_lea.vmem [#allocation11], 128
    %v2841 = vld [vmem:[%s2840] sm:$0xf]
    %v2842 = vld [vmem:[%s2840 + $0x4] sm:$0xf]
    %v2843 = vld [vmem:[%s2840 + $0x8] sm:$0xf]
    %v2844 = vld [vmem:[%s2840 + $0xc] sm:$0xf]
    %v2845 = vld [vmem:[%s2840 + $0x10] sm:$0xf]
    %v2846 = vld [vmem:[%s2840 + $0x14] sm:$0xf]
    %v2847 = vld [vmem:[%s2840 + $0x18] sm:$0xf]
    %v2848 = vld [vmem:[%s2840 + $0x1c] sm:$0xf]
    %v2849 = vld [vmem:[%s2840 + $0x20] sm:$0xf]
    %v2850 = vld [vmem:[%s2840 + $0x24] sm:$0xf]
    %v2851 = vld [vmem:[%s2840 + $0x28] sm:$0xf]
    %v2852 = vld [vmem:[%s2840 + $0x2c] sm:$0xf]
    %v2853 = vld [vmem:[%s2840 + $0x30] sm:$0xf]
    %v2854 = vld [vmem:[%s2840 + $0x34] sm:$0xf]
    %v2855 = vld [vmem:[%s2840 + $0x38] sm:$0xf]
    %v2856 = vld [vmem:[%s2840 + $0x3c] sm:$0xf]
    %v2857 = vld [vmem:[%s2840 + $0x40] sm:$0xf]
    %v2858 = vld [vmem:[%s2840 + $0x44] sm:$0xf]
    %v2859 = vld [vmem:[%s2840 + $0x48] sm:$0xf]
    %v2860 = vld [vmem:[%s2840 + $0x4c] sm:$0xf]
    %v2861 = vld [vmem:[%s2840 + $0x50] sm:$0xf]
    %v2862 = vld [vmem:[%s2840 + $0x54] sm:$0xf]
    %v2863 = vld [vmem:[%s2840 + $0x58] sm:$0xf]
    %v2864 = vld [vmem:[%s2840 + $0x5c] sm:$0xf]
    %v2865 = vld [vmem:[%s2840 + $0x60] sm:$0xf]
    %v2866 = vld [vmem:[%s2840 + $0x64] sm:$0xf]
    %v2867 = vld [vmem:[%s2840 + $0x68] sm:$0xf]
    %v2868 = vld [vmem:[%s2840 + $0x6c] sm:$0xf]
    %v2869 = vld [vmem:[%s2840 + $0x70] sm:$0xf]
    %v2870 = vld [vmem:[%s2840 + $0x74] sm:$0xf]
    %v2871 = vld [vmem:[%s2840 + $0x78] sm:$0xf]
    %v2872 = vld [vmem:[%s2840 + $0x7c] sm:$0xf]
    %s2873 = scalar_lea.vmem %s5, 1
    %v2874 = vld [vmem:[%s2873] sm:$0x1]
    %v2876 = vlaneseq
    %v2877 = vshrl.u32 %v2876, 7
    %v2878 = vsub.s32 0, %v2877
    %v2879 = vrot.slane %v2874, %v2878
    %v2913 = vunpack.c.l.b16 %v2808
    %v2914 = vunpack.c.h.b16 %v2808
    %v2915 = vunpack.c.l.b16 %v2809
    %v2916 = vunpack.c.h.b16 %v2809
    %v2917 = vunpack.c.l.b16 %v2810
    %v2918 = vunpack.c.h.b16 %v2810
    %v2919 = vunpack.c.l.b16 %v2811
    %v2920 = vunpack.c.h.b16 %v2811
    %v2921 = vunpack.c.l.b16 %v2812
    %v2922 = vunpack.c.h.b16 %v2812
    %v2923 = vunpack.c.l.b16 %v2813
    %v2924 = vunpack.c.h.b16 %v2813
    %v2925 = vunpack.c.l.b16 %v2814
    %v2926 = vunpack.c.h.b16 %v2814
    %v2927 = vunpack.c.l.b16 %v2815
    %v2928 = vunpack.c.h.b16 %v2815
    %v2929 = vunpack.c.l.b16 %v2816
    %v2930 = vunpack.c.h.b16 %v2816
    %v2931 = vunpack.c.l.b16 %v2817
    %v2932 = vunpack.c.h.b16 %v2817
    %v2933 = vunpack.c.l.b16 %v2818
    %v2934 = vunpack.c.h.b16 %v2818
    %v2935 = vunpack.c.l.b16 %v2819
    %v2936 = vunpack.c.h.b16 %v2819
    %v2937 = vunpack.c.l.b16 %v2820
    %v2938 = vunpack.c.h.b16 %v2820
    %v2939 = vunpack.c.l.b16 %v2821
    %v2940 = vunpack.c.h.b16 %v2821
    %v2941 = vunpack.c.l.b16 %v2822
    %v2942 = vunpack.c.h.b16 %v2822
    %v2943 = vunpack.c.l.b16 %v2823
    %v2944 = vunpack.c.h.b16 %v2823
    %v2945 = vunpack.c.l.b16 %v2824
    %v2946 = vunpack.c.h.b16 %v2824
    %v2947 = vunpack.c.l.b16 %v2825
    %v2948 = vunpack.c.h.b16 %v2825
    %v2949 = vunpack.c.l.b16 %v2826
    %v2950 = vunpack.c.h.b16 %v2826
    %v2951 = vunpack.c.l.b16 %v2827
    %v2952 = vunpack.c.h.b16 %v2827
    %v2953 = vunpack.c.l.b16 %v2828
    %v2954 = vunpack.c.h.b16 %v2828
    %v2955 = vunpack.c.l.b16 %v2829
    %v2956 = vunpack.c.h.b16 %v2829
    %v2957 = vunpack.c.l.b16 %v2830
    %v2958 = vunpack.c.h.b16 %v2830
    %v2959 = vunpack.c.l.b16 %v2831
    %v2960 = vunpack.c.h.b16 %v2831
    %v2961 = vunpack.c.l.b16 %v2832
    %v2962 = vunpack.c.h.b16 %v2832
    %v2963 = vunpack.c.l.b16 %v2833
    %v2964 = vunpack.c.h.b16 %v2833
    %v2965 = vunpack.c.l.b16 %v2834
    %v2966 = vunpack.c.h.b16 %v2834
    %v2967 = vunpack.c.l.b16 %v2835
    %v2968 = vunpack.c.h.b16 %v2835
    %v2969 = vunpack.c.l.b16 %v2836
    %v2970 = vunpack.c.h.b16 %v2836
    %v2971 = vunpack.c.l.b16 %v2837
    %v2972 = vunpack.c.h.b16 %v2837
    %v2973 = vunpack.c.l.b16 %v2838
    %v2974 = vunpack.c.h.b16 %v2838
    %v2975 = vunpack.c.l.b16 %v2839
    %v2976 = vunpack.c.h.b16 %v2839
    %v2977 = vpack.c.b16 %v2915, %v2913
    %v2978 = vpack.c.b16 %v2916, %v2914
    %v2979 = vpack.c.b16 %v2919, %v2917
    %v2980 = vpack.c.b16 %v2920, %v2918
    %v2981 = vpack.c.b16 %v2923, %v2921
    %v2982 = vpack.c.b16 %v2924, %v2922
    %v2983 = vpack.c.b16 %v2927, %v2925
    %v2984 = vpack.c.b16 %v2928, %v2926
    %v2985 = vpack.c.b16 %v2931, %v2929
    %v2986 = vpack.c.b16 %v2932, %v2930
    %v2987 = vpack.c.b16 %v2935, %v2933
    %v2988 = vpack.c.b16 %v2936, %v2934
    %v2989 = vpack.c.b16 %v2939, %v2937
    %v2990 = vpack.c.b16 %v2940, %v2938
    %v2991 = vpack.c.b16 %v2943, %v2941
    %v2992 = vpack.c.b16 %v2944, %v2942
    %v2993 = vpack.c.b16 %v2947, %v2945
    %v2994 = vpack.c.b16 %v2948, %v2946
    %v2995 = vpack.c.b16 %v2951, %v2949
    %v2996 = vpack.c.b16 %v2952, %v2950
    %v2997 = vpack.c.b16 %v2955, %v2953
    %v2998 = vpack.c.b16 %v2956, %v2954
    %v2999 = vpack.c.b16 %v2959, %v2957
    %v3000 = vpack.c.b16 %v2960, %v2958
    %v3001 = vpack.c.b16 %v2963, %v2961
    %v3002 = vpack.c.b16 %v2964, %v2962
    %v3003 = vpack.c.b16 %v2967, %v2965
    %v3004 = vpack.c.b16 %v2968, %v2966
    %v3005 = vpack.c.b16 %v2971, %v2969
    %v3006 = vpack.c.b16 %v2972, %v2970
    %v3007 = vpack.c.b16 %v2975, %v2973
    %v3008 = vpack.c.b16 %v2976, %v2974
    %v3073 = vunpack.c.l.b16 %v2841
    %v3074 = vunpack.c.l.b16 %v2842
    %v3075 = vunpack.c.l.b16 %v2843
    %v3076 = vunpack.c.l.b16 %v2844
    %v3077 = vunpack.c.l.b16 %v2845
    %v3078 = vunpack.c.l.b16 %v2846
    %v3079 = vunpack.c.l.b16 %v2847
    %v3080 = vunpack.c.l.b16 %v2848
    %v3081 = vunpack.c.l.b16 %v2849
    %v3082 = vunpack.c.l.b16 %v2850
    %v3083 = vunpack.c.l.b16 %v2851
    %v3084 = vunpack.c.l.b16 %v2852
    %v3085 = vunpack.c.l.b16 %v2853
    %v3086 = vunpack.c.l.b16 %v2854
    %v3087 = vunpack.c.l.b16 %v2855
    %v3088 = vunpack.c.l.b16 %v2856
    %v3089 = vunpack.c.l.b16 %v2857
    %v3090 = vunpack.c.l.b16 %v2858
    %v3091 = vunpack.c.l.b16 %v2859
    %v3092 = vunpack.c.l.b16 %v2860
    %v3093 = vunpack.c.l.b16 %v2861
    %v3094 = vunpack.c.l.b16 %v2862
    %v3095 = vunpack.c.l.b16 %v2863
    %v3096 = vunpack.c.l.b16 %v2864
    %v3097 = vunpack.c.l.b16 %v2865
    %v3098 = vunpack.c.l.b16 %v2866
    %v3099 = vunpack.c.l.b16 %v2867
    %v3100 = vunpack.c.l.b16 %v2868
    %v3101 = vunpack.c.l.b16 %v2869
    %v3102 = vunpack.c.l.b16 %v2870
    %v3103 = vunpack.c.l.b16 %v2871
    %v3104 = vunpack.c.l.b16 %v2872
    %v3105 = vpack.c.b16 %v3074, %v3073
    %v3106 = vpack.c.b16 %v3076, %v3075
    %v3107 = vpack.c.b16 %v3078, %v3077
    %v3108 = vpack.c.b16 %v3080, %v3079
    %v3109 = vpack.c.b16 %v3082, %v3081
    %v3110 = vpack.c.b16 %v3084, %v3083
    %v3111 = vpack.c.b16 %v3086, %v3085
    %v3112 = vpack.c.b16 %v3088, %v3087
    %v3113 = vpack.c.b16 %v3090, %v3089
    %v3114 = vpack.c.b16 %v3092, %v3091
    %v3115 = vpack.c.b16 %v3094, %v3093
    %v3116 = vpack.c.b16 %v3096, %v3095
    %v3117 = vpack.c.b16 %v3098, %v3097
    %v3118 = vpack.c.b16 %v3100, %v3099
    %v3119 = vpack.c.b16 %v3102, %v3101
    %v3120 = vpack.c.b16 %v3104, %v3103
    %3137 = vmatprep.subr.bf16.mxu0 0
    %3138 = vmatpush1.bf16.msra.mxu0 %v3112
    %3139 = vmatprep.subr.bf16.mxu0 0
    %3140 = vmatpush1.bf16.msra.mxu0 %v3111
    %3141 = vmatprep.subr.bf16.mxu0 0
    %3142 = vmatpush1.bf16.msra.mxu0 %v3110
    %3143 = vmatprep.subr.bf16.mxu0 0
    %3144 = vmatpush1.bf16.msra.mxu0 %v3109
    %3145 = vmatprep.subr.bf16.mxu0 0
    %3146 = vmatpush1.bf16.msra.mxu0 %v3108
    %3147 = vmatprep.subr.bf16.mxu0 0
    %3148 = vmatpush1.bf16.msra.mxu0 %v3107
    %3149 = vmatprep.subr.bf16.mxu0 0
    %3150 = vmatpush1.bf16.msra.mxu0 %v3106
    %3151 = vmatprep.subr.bf16.mxu0 0
    %3152 = vmatpush1.bf16.msra.mxu0 %v3105
    %3153 = vmatprep.subr.bf16.mxu0 0
    %3154 = vmatpush2.bf16.msra.mxu0 %v3120
    %3155 = vmatprep.subr.bf16.mxu0 0
    %3156 = vmatpush2.bf16.msra.mxu0 %v3119
    %3157 = vmatprep.subr.bf16.mxu0 0
    %3158 = vmatpush2.bf16.msra.mxu0 %v3118
    %3159 = vmatprep.subr.bf16.mxu0 0
    %3160 = vmatpush2.bf16.msra.mxu0 %v3117
    %3161 = vmatprep.subr.bf16.mxu0 0
    %3162 = vmatpush2.bf16.msra.mxu0 %v3116
    %3163 = vmatprep.subr.bf16.mxu0 0
    %3164 = vmatpush2.bf16.msra.mxu0 %v3115
    %3165 = vmatprep.subr.bf16.mxu0 0
    %3166 = vmatpush2.bf16.msra.mxu0 %v3114
    %3167 = vmatprep.subr.bf16.mxu0 0
    %3168 = vmatpush2.bf16.msra.mxu0 %v3113
    %3169 = vmatprep.mubr.bf16.mxu0 %v2978
    %3170 = vmatmul.mubr.bf16.gmra.mxu0 %v2977
    %v3171 = vpop.f32.mrf.mxu0
    %v3172 = vadd.f32 %v2879, %v3171
    %v3173 = vpop.f32.mrf.mxu0
    %v3174 = vpop.f32.mrf.mxu0
    %v3175 = vadd.f32 %v2879, %v3174
    %v3176 = vpop.f32.mrf.mxu0
    %3177 = vmatprep.mubr.bf16.mxu0 %v2980
    %3178 = vmatmul.mubr.bf16.gmra.mxu0 %v2979
    %v3179 = vpop.f32.mrf.mxu0
    %v3180 = vadd.f32 %v2879, %v3179
    %v3181 = vpop.f32.mrf.mxu0
    %v3182 = vpop.f32.mrf.mxu0
    %v3183 = vadd.f32 %v2879, %v3182
    %v3184 = vpop.f32.mrf.mxu0
    %3185 = vmatprep.mubr.bf16.mxu0 %v2982
    %3186 = vmatmul.mubr.bf16.gmra.mxu0 %v2981
    %v3187 = vpop.f32.mrf.mxu0
    %v3188 = vadd.f32 %v2879, %v3187
    %v3189 = vpop.f32.mrf.mxu0
    %v3190 = vpop.f32.mrf.mxu0
    %v3191 = vadd.f32 %v2879, %v3190
    %v3192 = vpop.f32.mrf.mxu0
    %3193 = vmatprep.mubr.bf16.mxu0 %v2984
    %3194 = vmatmul.mubr.bf16.gmra.mxu0 %v2983
    %v3195 = vpop.f32.mrf.mxu0
    %v3196 = vadd.f32 %v2879, %v3195
    %v3197 = vpop.f32.mrf.mxu0
    %v3198 = vpop.f32.mrf.mxu0
    %v3199 = vadd.f32 %v2879, %v3198
    %v3200 = vpop.f32.mrf.mxu0
    %3201 = vmatprep.mubr.bf16.mxu0 %v2986
    %3202 = vmatmul.mubr.bf16.gmra.mxu0 %v2985
    %v3203 = vpop.f32.mrf.mxu0
    %v3204 = vadd.f32 %v2879, %v3203
    %v3205 = vpop.f32.mrf.mxu0
    %v3206 = vpop.f32.mrf.mxu0
    %v3207 = vadd.f32 %v2879, %v3206
    %v3208 = vpop.f32.mrf.mxu0
    %3209 = vmatprep.mubr.bf16.mxu0 %v2988
    %3210 = vmatmul.mubr.bf16.gmra.mxu0 %v2987
    %v3211 = vpop.f32.mrf.mxu0
    %v3212 = vadd.f32 %v2879, %v3211
    %v3213 = vpop.f32.mrf.mxu0
    %v3214 = vpop.f32.mrf.mxu0
    %v3215 = vadd.f32 %v2879, %v3214
    %v3216 = vpop.f32.mrf.mxu0
    %3217 = vmatprep.mubr.bf16.mxu0 %v2990
    %3218 = vmatmul.mubr.bf16.gmra.mxu0 %v2989
    %v3219 = vpop.f32.mrf.mxu0
    %v3220 = vadd.f32 %v2879, %v3219
    %v3221 = vpop.f32.mrf.mxu0
    %v3222 = vpop.f32.mrf.mxu0
    %v3223 = vadd.f32 %v2879, %v3222
    %v3224 = vpop.f32.mrf.mxu0
    %3225 = vmatprep.mubr.bf16.mxu0 %v2992
    %3226 = vmatmul.mubr.bf16.gmra.mxu0 %v2991
    %v3227 = vpop.f32.mrf.mxu0
    %v3228 = vadd.f32 %v2879, %v3227
    %v3229 = vpop.f32.mrf.mxu0
    %v3230 = vpop.f32.mrf.mxu0
    %v3231 = vadd.f32 %v2879, %v3230
    %v3232 = vpop.f32.mrf.mxu0
    %3233 = vmatprep.mubr.bf16.mxu0 %v2994
    %3234 = vmatmul.mubr.bf16.gmra.mxu0 %v2993
    %v3235 = vpop.f32.mrf.mxu0
    %v3236 = vadd.f32 %v2879, %v3235
    %v3237 = vpop.f32.mrf.mxu0
    %v3238 = vpop.f32.mrf.mxu0
    %v3239 = vadd.f32 %v2879, %v3238
    %v3240 = vpop.f32.mrf.mxu0
    %3241 = vmatprep.mubr.bf16.mxu0 %v2996
    %3242 = vmatmul.mubr.bf16.gmra.mxu0 %v2995
    %v3243 = vpop.f32.mrf.mxu0
    %v3244 = vadd.f32 %v2879, %v3243
    %v3245 = vpop.f32.mrf.mxu0
    %v3246 = vpop.f32.mrf.mxu0
    %v3247 = vadd.f32 %v2879, %v3246
    %v3248 = vpop.f32.mrf.mxu0
    %3249 = vmatprep.mubr.bf16.mxu0 %v2998
    %3250 = vmatmul.mubr.bf16.gmra.mxu0 %v2997
    %v3251 = vpop.f32.mrf.mxu0
    %v3252 = vadd.f32 %v2879, %v3251
    %v3253 = vpop.f32.mrf.mxu0
    %v3254 = vpop.f32.mrf.mxu0
    %v3255 = vadd.f32 %v2879, %v3254
    %v3256 = vpop.f32.mrf.mxu0
    %3257 = vmatprep.mubr.bf16.mxu0 %v3000
    %3258 = vmatmul.mubr.bf16.gmra.mxu0 %v2999
    %v3259 = vpop.f32.mrf.mxu0
    %v3260 = vadd.f32 %v2879, %v3259
    %v3261 = vpop.f32.mrf.mxu0
    %v3262 = vpop.f32.mrf.mxu0
    %v3263 = vadd.f32 %v2879, %v3262
    %v3264 = vpop.f32.mrf.mxu0
    %3265 = vmatprep.mubr.bf16.mxu0 %v3002
    %3266 = vmatmul.mubr.bf16.gmra.mxu0 %v3001
    %v3267 = vpop.f32.mrf.mxu0
    %v3268 = vadd.f32 %v2879, %v3267
    %v3269 = vpop.f32.mrf.mxu0
    %v3270 = vpop.f32.mrf.mxu0
    %v3271 = vadd.f32 %v2879, %v3270
    %v3272 = vpop.f32.mrf.mxu0
    %3273 = vmatprep.mubr.bf16.mxu0 %v3004
    %3274 = vmatmul.mubr.bf16.gmra.mxu0 %v3003
    %v3275 = vpop.f32.mrf.mxu0
    %v3276 = vadd.f32 %v2879, %v3275
    %v3277 = vpop.f32.mrf.mxu0
    %v3278 = vpop.f32.mrf.mxu0
    %v3279 = vadd.f32 %v2879, %v3278
    %v3280 = vpop.f32.mrf.mxu0
    %3281 = vmatprep.mubr.bf16.mxu0 %v3006
    %3282 = vmatmul.mubr.bf16.gmra.mxu0 %v3005
    %v3283 = vpop.f32.mrf.mxu0
    %v3284 = vadd.f32 %v2879, %v3283
    %v3285 = vpop.f32.mrf.mxu0
    %v3286 = vpop.f32.mrf.mxu0
    %v3287 = vadd.f32 %v2879, %v3286
    %v3288 = vpop.f32.mrf.mxu0
    %3289 = vmatprep.mubr.bf16.mxu0 %v3008
    %3290 = vmatmul.mubr.bf16.gmra.mxu0 %v3007
    %v3291 = vpop.f32.mrf.mxu0
    %v3292 = vadd.f32 %v2879, %v3291
    %v3293 = vpop.f32.mrf.mxu0
    %v3294 = vpop.f32.mrf.mxu0
    %v3295 = vadd.f32 %v2879, %v3294
    %v3296 = vpop.f32.mrf.mxu0
    %3297 = vdwg.mxu0
    %v3298 = vmul.f32 %v3172, %v212
    %v3299 = vmul.f32 %v3175, %v213
    %v3300 = vmul.f32 %v3180, %v214
    %v3301 = vmul.f32 %v3183, %v215
    %v3302 = vmul.f32 %v3188, %v216
    %v3303 = vmul.f32 %v3191, %v217
    %v3304 = vmul.f32 %v3196, %v218
    %v3305 = vmul.f32 %v3199, %v219
    %v3306 = vmul.f32 %v3204, %v220
    %v3307 = vmul.f32 %v3207, %v221
    %v3308 = vmul.f32 %v3212, %v222
    %v3309 = vmul.f32 %v3215, %v223
    %v3310 = vmul.f32 %v3220, %v224
    %v3311 = vmul.f32 %v3223, %v225
    %v3312 = vmul.f32 %v3228, %v226
    %v3313 = vmul.f32 %v3231, %v227
    %v3314 = vmul.f32 %v3236, %v228
    %v3315 = vmul.f32 %v3239, %v229
    %v3316 = vmul.f32 %v3244, %v230
    %v3317 = vmul.f32 %v3247, %v231
    %v3318 = vmul.f32 %v3252, %v232
    %v3319 = vmul.f32 %v3255, %v233
    %v3320 = vmul.f32 %v3260, %v234
    %v3321 = vmul.f32 %v3263, %v235
    %v3322 = vmul.f32 %v3268, %v236
    %v3323 = vmul.f32 %v3271, %v237
    %v3324 = vmul.f32 %v3276, %v238
    %v3325 = vmul.f32 %v3279, %v239
    %v3326 = vmul.f32 %v3284, %v240
    %v3327 = vmul.f32 %v3287, %v241
    %v3328 = vmul.f32 %v3292, %v242
    %v3329 = vmul.f32 %v3295, %v243
    %v3330 = vadd.f32 %v3298, %v3299
    %v3331 = vadd.f32 %v3330, %v3300
    %v3332 = vadd.f32 %v3331, %v3301
    %v3333 = vadd.f32 %v3332, %v3302
    %v3334 = vadd.f32 %v3333, %v3303
    %v3335 = vadd.f32 %v3334, %v3304
    %v3336 = vadd.f32 %v3335, %v3305
    %v3337 = vadd.f32 %v3336, %v3306
    %v3338 = vadd.f32 %v3337, %v3307
    %v3339 = vadd.f32 %v3338, %v3308
    %v3340 = vadd.f32 %v3339, %v3309
    %v3341 = vadd.f32 %v3340, %v3310
    %v3342 = vadd.f32 %v3341, %v3311
    %v3343 = vadd.f32 %v3342, %v3312
    %v3344 = vadd.f32 %v3343, %v3313
    %v3345 = vadd.f32 %v3344, %v3314
    %v3346 = vadd.f32 %v3345, %v3315
    %v3347 = vadd.f32 %v3346, %v3316
    %v3348 = vadd.f32 %v3347, %v3317
    %v3349 = vadd.f32 %v3348, %v3318
    %v3350 = vadd.f32 %v3349, %v3319
    %v3351 = vadd.f32 %v3350, %v3320
    %v3352 = vadd.f32 %v3351, %v3321
    %v3353 = vadd.f32 %v3352, %v3322
    %v3354 = vadd.f32 %v3353, %v3323
    %v3355 = vadd.f32 %v3354, %v3324
    %v3356 = vadd.f32 %v3355, %v3325
    %v3357 = vadd.f32 %v3356, %v3326
    %v3358 = vadd.f32 %v3357, %v3327
    %v3359 = vadd.f32 %v3358, %v3328
    %v3360 = vadd.f32 %v3359, %v3329
    %v3361 = vrot.slane %v3360, 4
    %v3362 = vadd.f32 %v3360, %v3361
    %v3363 = vrot.slane %v3362, 2
    %v3364 = vadd.f32 %v3362, %v3363
    %v3365 = vrot.slane %v3364, 1
    %v3366 = vadd.f32 %v3364, %v3365
    %v3367 = vmul.f32 %v3366, 0.0625
    %v3368 = vmul.f32 %v3298, %v3172
    %v3369 = vmul.f32 %v3299, %v3175
    %v3370 = vmul.f32 %v3300, %v3180
    %v3371 = vmul.f32 %v3301, %v3183
    %v3372 = vmul.f32 %v3302, %v3188
    %v3373 = vmul.f32 %v3303, %v3191
    %v3374 = vmul.f32 %v3304, %v3196
    %v3375 = vmul.f32 %v3305, %v3199
    %v3376 = vmul.f32 %v3306, %v3204
    %v3377 = vmul.f32 %v3307, %v3207
    %v3378 = vmul.f32 %v3308, %v3212
    %v3379 = vmul.f32 %v3309, %v3215
    %v3380 = vmul.f32 %v3310, %v3220
    %v3381 = vmul.f32 %v3311, %v3223
    %v3382 = vmul.f32 %v3312, %v3228
    %v3383 = vmul.f32 %v3313, %v3231
    %v3384 = vmul.f32 %v3314, %v3236
    %v3385 = vmul.f32 %v3315, %v3239
    %v3386 = vmul.f32 %v3316, %v3244
    %v3387 = vmul.f32 %v3317, %v3247
    %v3388 = vmul.f32 %v3318, %v3252
    %v3389 = vmul.f32 %v3319, %v3255
    %v3390 = vmul.f32 %v3320, %v3260
    %v3391 = vmul.f32 %v3321, %v3263
    %v3392 = vmul.f32 %v3322, %v3268
    %v3393 = vmul.f32 %v3323, %v3271
    %v3394 = vmul.f32 %v3324, %v3276
    %v3395 = vmul.f32 %v3325, %v3279
    %v3396 = vmul.f32 %v3326, %v3284
    %v3397 = vmul.f32 %v3327, %v3287
    %v3398 = vmul.f32 %v3328, %v3292
    %v3399 = vmul.f32 %v3329, %v3295
    %v3400 = vadd.f32 %v3368, %v3369
    %v3401 = vadd.f32 %v3400, %v3370
    %v3402 = vadd.f32 %v3401, %v3371
    %v3403 = vadd.f32 %v3402, %v3372
    %v3404 = vadd.f32 %v3403, %v3373
    %v3405 = vadd.f32 %v3404, %v3374
    %v3406 = vadd.f32 %v3405, %v3375
    %v3407 = vadd.f32 %v3406, %v3376
    %v3408 = vadd.f32 %v3407, %v3377
    %v3409 = vadd.f32 %v3408, %v3378
    %v3410 = vadd.f32 %v3409, %v3379
    %v3411 = vadd.f32 %v3410, %v3380
    %v3412 = vadd.f32 %v3411, %v3381
    %v3413 = vadd.f32 %v3412, %v3382
    %v3414 = vadd.f32 %v3413, %v3383
    %v3415 = vadd.f32 %v3414, %v3384
    %v3416 = vadd.f32 %v3415, %v3385
    %v3417 = vadd.f32 %v3416, %v3386
    %v3418 = vadd.f32 %v3417, %v3387
    %v3419 = vadd.f32 %v3418, %v3388
    %v3420 = vadd.f32 %v3419, %v3389
    %v3421 = vadd.f32 %v3420, %v3390
    %v3422 = vadd.f32 %v3421, %v3391
    %v3423 = vadd.f32 %v3422, %v3392
    %v3424 = vadd.f32 %v3423, %v3393
    %v3425 = vadd.f32 %v3424, %v3394
    %v3426 = vadd.f32 %v3425, %v3395
    %v3427 = vadd.f32 %v3426, %v3396
    %v3428 = vadd.f32 %v3427, %v3397
    %v3429 = vadd.f32 %v3428, %v3398
    %v3430 = vadd.f32 %v3429, %v3399
    %v3431 = vrot.slane %v3430, 4
    %v3432 = vadd.f32 %v3430, %v3431
    %v3433 = vrot.slane %v3432, 2
    %v3434 = vadd.f32 %v3432, %v3433
    %v3435 = vrot.slane %v3434, 1
    %v3436 = vadd.f32 %v3434, %v3435
    %v3437 = vmul.f32 %v3436, 0.0625
    %v3438 = vmul.f32 %v3367, %v3367
    %v3439 = vsub.f32 %v3437, %v3438
    %v3440 = vsub.f32 %v3172, %v3367
    %v3441 = vsub.f32 %v3175, %v3367
    %v3442 = vsub.f32 %v3180, %v3367
    %v3443 = vsub.f32 %v3183, %v3367
    %v3444 = vsub.f32 %v3188, %v3367
    %v3445 = vsub.f32 %v3191, %v3367
    %v3446 = vsub.f32 %v3196, %v3367
    %v3447 = vsub.f32 %v3199, %v3367
    %v3448 = vsub.f32 %v3204, %v3367
    %v3449 = vsub.f32 %v3207, %v3367
    %v3450 = vsub.f32 %v3212, %v3367
    %v3451 = vsub.f32 %v3215, %v3367
    %v3452 = vsub.f32 %v3220, %v3367
    %v3453 = vsub.f32 %v3223, %v3367
    %v3454 = vsub.f32 %v3228, %v3367
    %v3455 = vsub.f32 %v3231, %v3367
    %v3456 = vsub.f32 %v3236, %v3367
    %v3457 = vsub.f32 %v3239, %v3367
    %v3458 = vsub.f32 %v3244, %v3367
    %v3459 = vsub.f32 %v3247, %v3367
    %v3460 = vsub.f32 %v3252, %v3367
    %v3461 = vsub.f32 %v3255, %v3367
    %v3462 = vsub.f32 %v3260, %v3367
    %v3463 = vsub.f32 %v3263, %v3367
    %v3464 = vsub.f32 %v3268, %v3367
    %v3465 = vsub.f32 %v3271, %v3367
    %v3466 = vsub.f32 %v3276, %v3367
    %v3467 = vsub.f32 %v3279, %v3367
    %v3468 = vsub.f32 %v3284, %v3367
    %v3469 = vsub.f32 %v3287, %v3367
    %v3470 = vsub.f32 %v3292, %v3367
    %v3471 = vsub.f32 %v3295, %v3367
    %v3472 = vadd.f32 %v3439, 1e-05
    %v3473 = vrsqrt.pop %v3472
    %v3474 = vmul.f32 %v3440, %v3473
    %v3475 = vmul.f32 %v3441, %v3473
    %v3476 = vmul.f32 %v3442, %v3473
    %v3477 = vmul.f32 %v3443, %v3473
    %v3478 = vmul.f32 %v3444, %v3473
    %v3479 = vmul.f32 %v3445, %v3473
    %v3480 = vmul.f32 %v3446, %v3473
    %v3481 = vmul.f32 %v3447, %v3473
    %v3482 = vmul.f32 %v3448, %v3473
    %v3483 = vmul.f32 %v3449, %v3473
    %v3484 = vmul.f32 %v3450, %v3473
    %v3485 = vmul.f32 %v3451, %v3473
    %v3486 = vmul.f32 %v3452, %v3473
    %v3487 = vmul.f32 %v3453, %v3473
    %v3488 = vmul.f32 %v3454, %v3473
    %v3489 = vmul.f32 %v3455, %v3473
    %v3490 = vmul.f32 %v3456, %v3473
    %v3491 = vmul.f32 %v3457, %v3473
    %v3492 = vmul.f32 %v3458, %v3473
    %v3493 = vmul.f32 %v3459, %v3473
    %v3494 = vmul.f32 %v3460, %v3473
    %v3495 = vmul.f32 %v3461, %v3473
    %v3496 = vmul.f32 %v3462, %v3473
    %v3497 = vmul.f32 %v3463, %v3473
    %v3498 = vmul.f32 %v3464, %v3473
    %v3499 = vmul.f32 %v3465, %v3473
    %v3500 = vmul.f32 %v3466, %v3473
    %v3501 = vmul.f32 %v3467, %v3473
    %v3502 = vmul.f32 %v3468, %v3473
    %v3503 = vmul.f32 %v3469, %v3473
    %v3504 = vmul.f32 %v3470, %v3473
    %v3505 = vmul.f32 %v3471, %v3473
    %s3506 = scalar_lea.vmem %s6, 1
    %v3507 = vld [vmem:[%s3506] sm:$0x1]
    %v3509 = vlaneseq
    %v3510 = vshrl.u32 %v3509, 7
    %v3511 = vsub.s32 0, %v3510
    %v3512 = vrot.slane %v3507, %v3511
    %v3514 = vmul.f32 %v3474, %v3512
    %v3515 = vmul.f32 %v3475, %v3512
    %v3516 = vmul.f32 %v3476, %v3512
    %v3517 = vmul.f32 %v3477, %v3512
    %v3518 = vmul.f32 %v3478, %v3512
    %v3519 = vmul.f32 %v3479, %v3512
    %v3520 = vmul.f32 %v3480, %v3512
    %v3521 = vmul.f32 %v3481, %v3512
    %v3522 = vmul.f32 %v3482, %v3512
    %v3523 = vmul.f32 %v3483, %v3512
    %v3524 = vmul.f32 %v3484, %v3512
    %v3525 = vmul.f32 %v3485, %v3512
    %v3526 = vmul.f32 %v3486, %v3512
    %v3527 = vmul.f32 %v3487, %v3512
    %v3528 = vmul.f32 %v3488, %v3512
    %v3529 = vmul.f32 %v3489, %v3512
    %v3530 = vmul.f32 %v3490, %v3512
    %v3531 = vmul.f32 %v3491, %v3512
    %v3532 = vmul.f32 %v3492, %v3512
    %v3533 = vmul.f32 %v3493, %v3512
    %v3534 = vmul.f32 %v3494, %v3512
    %v3535 = vmul.f32 %v3495, %v3512
    %v3536 = vmul.f32 %v3496, %v3512
    %v3537 = vmul.f32 %v3497, %v3512
    %v3538 = vmul.f32 %v3498, %v3512
    %v3539 = vmul.f32 %v3499, %v3512
    %v3540 = vmul.f32 %v3500, %v3512
    %v3541 = vmul.f32 %v3501, %v3512
    %v3542 = vmul.f32 %v3502, %v3512
    %v3543 = vmul.f32 %v3503, %v3512
    %v3544 = vmul.f32 %v3504, %v3512
    %v3545 = vmul.f32 %v3505, %v3512
    %s3546 = scalar_lea.vmem %s7, 1
    %v3547 = vld [vmem:[%s3546] sm:$0x1]
    %v3549 = vlaneseq
    %v3550 = vshrl.u32 %v3549, 7
    %v3551 = vsub.s32 0, %v3550
    %v3552 = vrot.slane %v3547, %v3551
    %v3554 = vadd.f32 %v3514, %v3552
    %v3555 = vadd.f32 %v3515, %v3552
    %v3556 = vadd.f32 %v3516, %v3552
    %v3557 = vadd.f32 %v3517, %v3552
    %v3558 = vadd.f32 %v3518, %v3552
    %v3559 = vadd.f32 %v3519, %v3552
    %v3560 = vadd.f32 %v3520, %v3552
    %v3561 = vadd.f32 %v3521, %v3552
    %v3562 = vadd.f32 %v3522, %v3552
    %v3563 = vadd.f32 %v3523, %v3552
    %v3564 = vadd.f32 %v3524, %v3552
    %v3565 = vadd.f32 %v3525, %v3552
    %v3566 = vadd.f32 %v3526, %v3552
    %v3567 = vadd.f32 %v3527, %v3552
    %v3568 = vadd.f32 %v3528, %v3552
    %v3569 = vadd.f32 %v3529, %v3552
    %v3570 = vadd.f32 %v3530, %v3552
    %v3571 = vadd.f32 %v3531, %v3552
    %v3572 = vadd.f32 %v3532, %v3552
    %v3573 = vadd.f32 %v3533, %v3552
    %v3574 = vadd.f32 %v3534, %v3552
    %v3575 = vadd.f32 %v3535, %v3552
    %v3576 = vadd.f32 %v3536, %v3552
    %v3577 = vadd.f32 %v3537, %v3552
    %v3578 = vadd.f32 %v3538, %v3552
    %v3579 = vadd.f32 %v3539, %v3552
    %v3580 = vadd.f32 %v3540, %v3552
    %v3581 = vadd.f32 %v3541, %v3552
    %v3582 = vadd.f32 %v3542, %v3552
    %v3583 = vadd.f32 %v3543, %v3552
    %v3584 = vadd.f32 %v3544, %v3552
    %v3585 = vadd.f32 %v3545, %v3552
    %v3586 = vmax.f32 %v3554, 0.0
    %v3587 = vmax.f32 %v3555, 0.0
    %v3588 = vmax.f32 %v3556, 0.0
    %v3589 = vmax.f32 %v3557, 0.0
    %v3590 = vmax.f32 %v3558, 0.0
    %v3591 = vmax.f32 %v3559, 0.0
    %v3592 = vmax.f32 %v3560, 0.0
    %v3593 = vmax.f32 %v3561, 0.0
    %v3594 = vmax.f32 %v3562, 0.0
    %v3595 = vmax.f32 %v3563, 0.0
    %v3596 = vmax.f32 %v3564, 0.0
    %v3597 = vmax.f32 %v3565, 0.0
    %v3598 = vmax.f32 %v3566, 0.0
    %v3599 = vmax.f32 %v3567, 0.0
    %v3600 = vmax.f32 %v3568, 0.0
    %v3601 = vmax.f32 %v3569, 0.0
    %v3602 = vmax.f32 %v3570, 0.0
    %v3603 = vmax.f32 %v3571, 0.0
    %v3604 = vmax.f32 %v3572, 0.0
    %v3605 = vmax.f32 %v3573, 0.0
    %v3606 = vmax.f32 %v3574, 0.0
    %v3607 = vmax.f32 %v3575, 0.0
    %v3608 = vmax.f32 %v3576, 0.0
    %v3609 = vmax.f32 %v3577, 0.0
    %v3610 = vmax.f32 %v3578, 0.0
    %v3611 = vmax.f32 %v3579, 0.0
    %v3612 = vmax.f32 %v3580, 0.0
    %v3613 = vmax.f32 %v3581, 0.0
    %v3614 = vmax.f32 %v3582, 0.0
    %v3615 = vmax.f32 %v3583, 0.0
    %v3616 = vmax.f32 %v3584, 0.0
    %v3617 = vmax.f32 %v3585, 0.0
    %v3618 = vpack.c.bf16 %v3587, %v3586
    %v3619 = vpack.c.bf16 %v3589, %v3588
    %v3620 = vpack.c.bf16 %v3591, %v3590
    %v3621 = vpack.c.bf16 %v3593, %v3592
    %v3622 = vpack.c.bf16 %v3595, %v3594
    %v3623 = vpack.c.bf16 %v3597, %v3596
    %v3624 = vpack.c.bf16 %v3599, %v3598
    %v3625 = vpack.c.bf16 %v3601, %v3600
    %v3626 = vpack.c.bf16 %v3603, %v3602
    %v3627 = vpack.c.bf16 %v3605, %v3604
    %v3628 = vpack.c.bf16 %v3607, %v3606
    %v3629 = vpack.c.bf16 %v3609, %v3608
    %v3630 = vpack.c.bf16 %v3611, %v3610
    %v3631 = vpack.c.bf16 %v3613, %v3612
    %v3632 = vpack.c.bf16 %v3615, %v3614
    %v3633 = vpack.c.bf16 %v3617, %v3616
    %v3634 = vld [vmem:[#allocation2] sm:$0xff]
    %v3635 = vld [vmem:[#allocation2 + $0x8] sm:$0xff]
    %v3636 = vld [vmem:[#allocation2 + $0x10] sm:$0xff]
    %v3637 = vld [vmem:[#allocation2 + $0x18] sm:$0xff]
    %v3638 = vld [vmem:[#allocation2 + $0x20] sm:$0xff]
    %v3639 = vld [vmem:[#allocation2 + $0x28] sm:$0xff]
    %v3640 = vld [vmem:[#allocation2 + $0x30] sm:$0xff]
    %v3641 = vld [vmem:[#allocation2 + $0x38] sm:$0xff]
    %v3642 = vld [vmem:[#allocation2 + $0x40] sm:$0xff]
    %v3643 = vld [vmem:[#allocation2 + $0x48] sm:$0xff]
    %v3644 = vld [vmem:[#allocation2 + $0x50] sm:$0xff]
    %v3645 = vld [vmem:[#allocation2 + $0x58] sm:$0xff]
    %v3646 = vld [vmem:[#allocation2 + $0x60] sm:$0xff]
    %v3647 = vld [vmem:[#allocation2 + $0x68] sm:$0xff]
    %v3648 = vld [vmem:[#allocation2 + $0x70] sm:$0xff]
    %v3649 = vld [vmem:[#allocation2 + $0x78] sm:$0xff]
    %v3650 = vld [vmem:[#allocation2 + $0x80] sm:$0xff]
    %v3651 = vld [vmem:[#allocation2 + $0x88] sm:$0xff]
    %v3652 = vld [vmem:[#allocation2 + $0x90] sm:$0xff]
    %v3653 = vld [vmem:[#allocation2 + $0x98] sm:$0xff]
    %v3654 = vld [vmem:[#allocation2 + $0xa0] sm:$0xff]
    %v3655 = vld [vmem:[#allocation2 + $0xa8] sm:$0xff]
    %v3656 = vld [vmem:[#allocation2 + $0xb0] sm:$0xff]
    %v3657 = vld [vmem:[#allocation2 + $0xb8] sm:$0xff]
    %v3658 = vld [vmem:[#allocation2 + $0xc0] sm:$0xff]
    %v3659 = vld [vmem:[#allocation2 + $0xc8] sm:$0xff]
    %v3660 = vld [vmem:[#allocation2 + $0xd0] sm:$0xff]
    %v3661 = vld [vmem:[#allocation2 + $0xd8] sm:$0xff]
    %v3662 = vld [vmem:[#allocation2 + $0xe0] sm:$0xff]
    %v3663 = vld [vmem:[#allocation2 + $0xe8] sm:$0xff]
    %v3664 = vld [vmem:[#allocation2 + $0xf0] sm:$0xff]
    %v3665 = vld [vmem:[#allocation2 + $0xf8] sm:$0xff]
    %v3698 = vunpack.c.l.b16 %v3634
    %v3699 = vunpack.c.h.b16 %v3634
    %v3700 = vunpack.c.l.b16 %v3635
    %v3701 = vunpack.c.h.b16 %v3635
    %v3702 = vunpack.c.l.b16 %v3636
    %v3703 = vunpack.c.h.b16 %v3636
    %v3704 = vunpack.c.l.b16 %v3637
    %v3705 = vunpack.c.h.b16 %v3637
    %v3706 = vunpack.c.l.b16 %v3638
    %v3707 = vunpack.c.h.b16 %v3638
    %v3708 = vunpack.c.l.b16 %v3639
    %v3709 = vunpack.c.h.b16 %v3639
    %v3710 = vunpack.c.l.b16 %v3640
    %v3711 = vunpack.c.h.b16 %v3640
    %v3712 = vunpack.c.l.b16 %v3641
    %v3713 = vunpack.c.h.b16 %v3641
    %v3714 = vunpack.c.l.b16 %v3642
    %v3715 = vunpack.c.h.b16 %v3642
    %v3716 = vunpack.c.l.b16 %v3643
    %v3717 = vunpack.c.h.b16 %v3643
    %v3718 = vunpack.c.l.b16 %v3644
    %v3719 = vunpack.c.h.b16 %v3644
    %v3720 = vunpack.c.l.b16 %v3645
    %v3721 = vunpack.c.h.b16 %v3645
    %v3722 = vunpack.c.l.b16 %v3646
    %v3723 = vunpack.c.h.b16 %v3646
    %v3724 = vunpack.c.l.b16 %v3647
    %v3725 = vunpack.c.h.b16 %v3647
    %v3726 = vunpack.c.l.b16 %v3648
    %v3727 = vunpack.c.h.b16 %v3648
    %v3728 = vunpack.c.l.b16 %v3649
    %v3729 = vunpack.c.h.b16 %v3649
    %v3730 = vunpack.c.l.b16 %v3650
    %v3731 = vunpack.c.h.b16 %v3650
    %v3732 = vunpack.c.l.b16 %v3651
    %v3733 = vunpack.c.h.b16 %v3651
    %v3734 = vunpack.c.l.b16 %v3652
    %v3735 = vunpack.c.h.b16 %v3652
    %v3736 = vunpack.c.l.b16 %v3653
    %v3737 = vunpack.c.h.b16 %v3653
    %v3738 = vunpack.c.l.b16 %v3654
    %v3739 = vunpack.c.h.b16 %v3654
    %v3740 = vunpack.c.l.b16 %v3655
    %v3741 = vunpack.c.h.b16 %v3655
    %v3742 = vunpack.c.l.b16 %v3656
    %v3743 = vunpack.c.h.b16 %v3656
    %v3744 = vunpack.c.l.b16 %v3657
    %v3745 = vunpack.c.h.b16 %v3657
    %v3746 = vunpack.c.l.b16 %v3658
    %v3747 = vunpack.c.h.b16 %v3658
    %v3748 = vunpack.c.l.b16 %v3659
    %v3749 = vunpack.c.h.b16 %v3659
    %v3750 = vunpack.c.l.b16 %v3660
    %v3751 = vunpack.c.h.b16 %v3660
    %v3752 = vunpack.c.l.b16 %v3661
    %v3753 = vunpack.c.h.b16 %v3661
    %v3754 = vunpack.c.l.b16 %v3662
    %v3755 = vunpack.c.h.b16 %v3662
    %v3756 = vunpack.c.l.b16 %v3663
    %v3757 = vunpack.c.h.b16 %v3663
    %v3758 = vunpack.c.l.b16 %v3664
    %v3759 = vunpack.c.h.b16 %v3664
    %v3760 = vunpack.c.l.b16 %v3665
    %v3761 = vunpack.c.h.b16 %v3665
    %v3762 = vpack.c.b16 %v3700, %v3698
    %v3763 = vpack.c.b16 %v3701, %v3699
    %v3764 = vpack.c.b16 %v3704, %v3702
    %v3765 = vpack.c.b16 %v3705, %v3703
    %v3766 = vpack.c.b16 %v3708, %v3706
    %v3767 = vpack.c.b16 %v3709, %v3707
    %v3768 = vpack.c.b16 %v3712, %v3710
    %v3769 = vpack.c.b16 %v3713, %v3711
    %v3770 = vpack.c.b16 %v3716, %v3714
    %v3771 = vpack.c.b16 %v3717, %v3715
    %v3772 = vpack.c.b16 %v3720, %v3718
    %v3773 = vpack.c.b16 %v3721, %v3719
    %v3774 = vpack.c.b16 %v3724, %v3722
    %v3775 = vpack.c.b16 %v3725, %v3723
    %v3776 = vpack.c.b16 %v3728, %v3726
    %v3777 = vpack.c.b16 %v3729, %v3727
    %v3778 = vpack.c.b16 %v3732, %v3730
    %v3779 = vpack.c.b16 %v3733, %v3731
    %v3780 = vpack.c.b16 %v3736, %v3734
    %v3781 = vpack.c.b16 %v3737, %v3735
    %v3782 = vpack.c.b16 %v3740, %v3738
    %v3783 = vpack.c.b16 %v3741, %v3739
    %v3784 = vpack.c.b16 %v3744, %v3742
    %v3785 = vpack.c.b16 %v3745, %v3743
    %v3786 = vpack.c.b16 %v3748, %v3746
    %v3787 = vpack.c.b16 %v3749, %v3747
    %v3788 = vpack.c.b16 %v3752, %v3750
    %v3789 = vpack.c.b16 %v3753, %v3751
    %v3790 = vpack.c.b16 %v3756, %v3754
    %v3791 = vpack.c.b16 %v3757, %v3755
    %v3792 = vpack.c.b16 %v3760, %v3758
    %v3793 = vpack.c.b16 %v3761, %v3759
    %3826 = vmatprep.subr.bf16.mxu0 0
    %3827 = vmatpush1.bf16.msra.mxu0 %v3625
    %3828 = vmatprep.subr.bf16.mxu0 0
    %3829 = vmatpush1.bf16.msra.mxu0 %v3624
    %3830 = vmatprep.subr.bf16.mxu0 0
    %3831 = vmatpush1.bf16.msra.mxu0 %v3623
    %3832 = vmatprep.subr.bf16.mxu0 0
    %3833 = vmatpush1.bf16.msra.mxu0 %v3622
    %3834 = vmatprep.subr.bf16.mxu0 0
    %3835 = vmatpush1.bf16.msra.mxu0 %v3621
    %3836 = vmatprep.subr.bf16.mxu0 0
    %3837 = vmatpush1.bf16.msra.mxu0 %v3620
    %3838 = vmatprep.subr.bf16.mxu0 0
    %3839 = vmatpush1.bf16.msra.mxu0 %v3619
    %3840 = vmatprep.subr.bf16.mxu0 0
    %3841 = vmatpush1.bf16.msra.mxu0 %v3618
    %3842 = vmatprep.subr.bf16.mxu0 0
    %3843 = vmatpush2.bf16.msra.mxu0 %v3633
    %3844 = vmatprep.subr.bf16.mxu0 0
    %3845 = vmatpush2.bf16.msra.mxu0 %v3632
    %3846 = vmatprep.subr.bf16.mxu0 0
    %3847 = vmatpush2.bf16.msra.mxu0 %v3631
    %3848 = vmatprep.subr.bf16.mxu0 0
    %3849 = vmatpush2.bf16.msra.mxu0 %v3630
    %3850 = vmatprep.subr.bf16.mxu0 0
    %3851 = vmatpush2.bf16.msra.mxu0 %v3629
    %3852 = vmatprep.subr.bf16.mxu0 0
    %3853 = vmatpush2.bf16.msra.mxu0 %v3628
    %3854 = vmatprep.subr.bf16.mxu0 0
    %3855 = vmatpush2.bf16.msra.mxu0 %v3627
    %3856 = vmatprep.subr.bf16.mxu0 0
    %3857 = vmatpush2.bf16.msra.mxu0 %v3626
    %3858 = vmatprep.mubr.bf16.mxu0 %v3763
    %3859 = vmatmul.mubr.bf16.gmra.mxu0 %v3762
    %v3860 = vpop.f32.mrf.mxu0
    %v3861 = vadd.f32 0.0, %v3860
    %v3862 = vpop.f32.mrf.mxu0
    %v3863 = vpop.f32.mrf.mxu0
    %v3864 = vadd.f32 0.0, %v3863
    %v3865 = vpop.f32.mrf.mxu0
    %3866 = vmatprep.mubr.bf16.mxu0 %v3765
    %3867 = vmatmul.mubr.bf16.gmra.mxu0 %v3764
    %v3868 = vpop.f32.mrf.mxu0
    %v3869 = vadd.f32 0.0, %v3868
    %v3870 = vpop.f32.mrf.mxu0
    %v3871 = vpop.f32.mrf.mxu0
    %v3872 = vadd.f32 0.0, %v3871
    %v3873 = vpop.f32.mrf.mxu0
    %3874 = vmatprep.mubr.bf16.mxu0 %v3767
    %3875 = vmatmul.mubr.bf16.gmra.mxu0 %v3766
    %v3876 = vpop.f32.mrf.mxu0
    %v3877 = vadd.f32 0.0, %v3876
    %v3878 = vpop.f32.mrf.mxu0
    %v3879 = vpop.f32.mrf.mxu0
    %v3880 = vadd.f32 0.0, %v3879
    %v3881 = vpop.f32.mrf.mxu0
    %3882 = vmatprep.mubr.bf16.mxu0 %v3769
    %3883 = vmatmul.mubr.bf16.gmra.mxu0 %v3768
    %v3884 = vpop.f32.mrf.mxu0
    %v3885 = vadd.f32 0.0, %v3884
    %v3886 = vpop.f32.mrf.mxu0
    %v3887 = vpop.f32.mrf.mxu0
    %v3888 = vadd.f32 0.0, %v3887
    %v3889 = vpop.f32.mrf.mxu0
    %3890 = vmatprep.mubr.bf16.mxu0 %v3771
    %3891 = vmatmul.mubr.bf16.gmra.mxu0 %v3770
    %v3892 = vpop.f32.mrf.mxu0
    %v3893 = vadd.f32 0.0, %v3892
    %v3894 = vpop.f32.mrf.mxu0
    %v3895 = vpop.f32.mrf.mxu0
    %v3896 = vadd.f32 0.0, %v3895
    %v3897 = vpop.f32.mrf.mxu0
    %3898 = vmatprep.mubr.bf16.mxu0 %v3773
    %3899 = vmatmul.mubr.bf16.gmra.mxu0 %v3772
    %v3900 = vpop.f32.mrf.mxu0
    %v3901 = vadd.f32 0.0, %v3900
    %v3902 = vpop.f32.mrf.mxu0
    %v3903 = vpop.f32.mrf.mxu0
    %v3904 = vadd.f32 0.0, %v3903
    %v3905 = vpop.f32.mrf.mxu0
    %3906 = vmatprep.mubr.bf16.mxu0 %v3775
    %3907 = vmatmul.mubr.bf16.gmra.mxu0 %v3774
    %v3908 = vpop.f32.mrf.mxu0
    %v3909 = vadd.f32 0.0, %v3908
    %v3910 = vpop.f32.mrf.mxu0
    %v3911 = vpop.f32.mrf.mxu0
    %v3912 = vadd.f32 0.0, %v3911
    %v3913 = vpop.f32.mrf.mxu0
    %3914 = vmatprep.mubr.bf16.mxu0 %v3777
    %3915 = vmatmul.mubr.bf16.gmra.mxu0 %v3776
    %v3916 = vpop.f32.mrf.mxu0
    %v3917 = vadd.f32 0.0, %v3916
    %v3918 = vpop.f32.mrf.mxu0
    %v3919 = vpop.f32.mrf.mxu0
    %v3920 = vadd.f32 0.0, %v3919
    %v3921 = vpop.f32.mrf.mxu0
    %3922 = vmatprep.mubr.bf16.mxu0 %v3779
    %3923 = vmatmul.mubr.bf16.gmra.mxu0 %v3778
    %v3924 = vpop.f32.mrf.mxu0
    %v3925 = vadd.f32 0.0, %v3924
    %v3926 = vpop.f32.mrf.mxu0
    %v3927 = vpop.f32.mrf.mxu0
    %v3928 = vadd.f32 0.0, %v3927
    %v3929 = vpop.f32.mrf.mxu0
    %3930 = vmatprep.mubr.bf16.mxu0 %v3781
    %3931 = vmatmul.mubr.bf16.gmra.mxu0 %v3780
    %v3932 = vpop.f32.mrf.mxu0
    %v3933 = vadd.f32 0.0, %v3932
    %v3934 = vpop.f32.mrf.mxu0
    %v3935 = vpop.f32.mrf.mxu0
    %v3936 = vadd.f32 0.0, %v3935
    %v3937 = vpop.f32.mrf.mxu0
    %3938 = vmatprep.mubr.bf16.mxu0 %v3783
    %3939 = vmatmul.mubr.bf16.gmra.mxu0 %v3782
    %v3940 = vpop.f32.mrf.mxu0
    %v3941 = vadd.f32 0.0, %v3940
    %v3942 = vpop.f32.mrf.mxu0
    %v3943 = vpop.f32.mrf.mxu0
    %v3944 = vadd.f32 0.0, %v3943
    %v3945 = vpop.f32.mrf.mxu0
    %3946 = vmatprep.mubr.bf16.mxu0 %v3785
    %3947 = vmatmul.mubr.bf16.gmra.mxu0 %v3784
    %v3948 = vpop.f32.mrf.mxu0
    %v3949 = vadd.f32 0.0, %v3948
    %v3950 = vpop.f32.mrf.mxu0
    %v3951 = vpop.f32.mrf.mxu0
    %v3952 = vadd.f32 0.0, %v3951
    %v3953 = vpop.f32.mrf.mxu0
    %3954 = vmatprep.mubr.bf16.mxu0 %v3787
    %3955 = vmatmul.mubr.bf16.gmra.mxu0 %v3786
    %v3956 = vpop.f32.mrf.mxu0
    %v3957 = vadd.f32 0.0, %v3956
    %v3958 = vpop.f32.mrf.mxu0
    %v3959 = vpop.f32.mrf.mxu0
    %v3960 = vadd.f32 0.0, %v3959
    %v3961 = vpop.f32.mrf.mxu0
    %3962 = vmatprep.mubr.bf16.mxu0 %v3789
    %3963 = vmatmul.mubr.bf16.gmra.mxu0 %v3788
    %v3964 = vpop.f32.mrf.mxu0
    %v3965 = vadd.f32 0.0, %v3964
    %v3966 = vpop.f32.mrf.mxu0
    %v3967 = vpop.f32.mrf.mxu0
    %v3968 = vadd.f32 0.0, %v3967
    %v3969 = vpop.f32.mrf.mxu0
    %3970 = vmatprep.mubr.bf16.mxu0 %v3791
    %3971 = vmatmul.mubr.bf16.gmra.mxu0 %v3790
    %v3972 = vpop.f32.mrf.mxu0
    %v3973 = vadd.f32 0.0, %v3972
    %v3974 = vpop.f32.mrf.mxu0
    %v3975 = vpop.f32.mrf.mxu0
    %v3976 = vadd.f32 0.0, %v3975
    %v3977 = vpop.f32.mrf.mxu0
    %3978 = vmatprep.mubr.bf16.mxu0 %v3793
    %3979 = vmatmul.mubr.bf16.gmra.mxu0 %v3792
    %v3980 = vpop.f32.mrf.mxu0
    %v3981 = vadd.f32 0.0, %v3980
    %v3982 = vpop.f32.mrf.mxu0
    %v3983 = vpop.f32.mrf.mxu0
    %v3984 = vadd.f32 0.0, %v3983
    %v3985 = vpop.f32.mrf.mxu0
    %3986 = vdwg.mxu0
    %v3987 = vpack.c.bf16 %v3864, %v3861
    %v3988 = vpack.c.bf16 %v3872, %v3869
    %v3989 = vpack.c.bf16 %v3880, %v3877
    %v3990 = vpack.c.bf16 %v3888, %v3885
    %v3991 = vpack.c.bf16 %v3896, %v3893
    %v3992 = vpack.c.bf16 %v3904, %v3901
    %v3993 = vpack.c.bf16 %v3912, %v3909
    %v3994 = vpack.c.bf16 %v3920, %v3917
    %v3995 = vpack.c.bf16 %v3928, %v3925
    %v3996 = vpack.c.bf16 %v3936, %v3933
    %v3997 = vpack.c.bf16 %v3944, %v3941
    %v3998 = vpack.c.bf16 %v3952, %v3949
    %v3999 = vpack.c.bf16 %v3960, %v3957
    %v4000 = vpack.c.bf16 %v3968, %v3965
    %v4001 = vpack.c.bf16 %v3976, %v3973
    %v4002 = vpack.c.bf16 %v3984, %v3981
    %v4019 = vunpack.c.l.b16 %v3987
    %v4020 = vunpack.c.h.b16 %v3987
    %v4021 = vunpack.c.l.b16 %v3988
    %v4022 = vunpack.c.h.b16 %v3988
    %v4023 = vunpack.c.l.b16 %v3989
    %v4024 = vunpack.c.h.b16 %v3989
    %v4025 = vunpack.c.l.b16 %v3990
    %v4026 = vunpack.c.h.b16 %v3990
    %v4027 = vunpack.c.l.b16 %v3991
    %v4028 = vunpack.c.h.b16 %v3991
    %v4029 = vunpack.c.l.b16 %v3992
    %v4030 = vunpack.c.h.b16 %v3992
    %v4031 = vunpack.c.l.b16 %v3993
    %v4032 = vunpack.c.h.b16 %v3993
    %v4033 = vunpack.c.l.b16 %v3994
    %v4034 = vunpack.c.h.b16 %v3994
    %v4035 = vunpack.c.l.b16 %v3995
    %v4036 = vunpack.c.h.b16 %v3995
    %v4037 = vunpack.c.l.b16 %v3996
    %v4038 = vunpack.c.h.b16 %v3996
    %v4039 = vunpack.c.l.b16 %v3997
    %v4040 = vunpack.c.h.b16 %v3997
    %v4041 = vunpack.c.l.b16 %v3998
    %v4042 = vunpack.c.h.b16 %v3998
    %v4043 = vunpack.c.l.b16 %v3999
    %v4044 = vunpack.c.h.b16 %v3999
    %v4045 = vunpack.c.l.b16 %v4000
    %v4046 = vunpack.c.h.b16 %v4000
    %v4047 = vunpack.c.l.b16 %v4001
    %v4048 = vunpack.c.h.b16 %v4001
    %v4049 = vunpack.c.l.b16 %v4002
    %v4050 = vunpack.c.h.b16 %v4002
    %v4051 = vpack.c.b16 %v4019, %v4019
    %v4052 = vpack.c.b16 %v4020, %v4020
    %v4053 = vpack.c.b16 %v4021, %v4021
    %v4054 = vpack.c.b16 %v4022, %v4022
    %v4055 = vpack.c.b16 %v4023, %v4023
    %v4056 = vpack.c.b16 %v4024, %v4024
    %v4057 = vpack.c.b16 %v4025, %v4025
    %v4058 = vpack.c.b16 %v4026, %v4026
    %v4059 = vpack.c.b16 %v4027, %v4027
    %v4060 = vpack.c.b16 %v4028, %v4028
    %v4061 = vpack.c.b16 %v4029, %v4029
    %v4062 = vpack.c.b16 %v4030, %v4030
    %v4063 = vpack.c.b16 %v4031, %v4031
    %v4064 = vpack.c.b16 %v4032, %v4032
    %v4065 = vpack.c.b16 %v4033, %v4033
    %v4066 = vpack.c.b16 %v4034, %v4034
    %v4067 = vpack.c.b16 %v4035, %v4035
    %v4068 = vpack.c.b16 %v4036, %v4036
    %v4069 = vpack.c.b16 %v4037, %v4037
    %v4070 = vpack.c.b16 %v4038, %v4038
    %v4071 = vpack.c.b16 %v4039, %v4039
    %v4072 = vpack.c.b16 %v4040, %v4040
    %v4073 = vpack.c.b16 %v4041, %v4041
    %v4074 = vpack.c.b16 %v4042, %v4042
    %v4075 = vpack.c.b16 %v4043, %v4043
    %v4076 = vpack.c.b16 %v4044, %v4044
    %v4077 = vpack.c.b16 %v4045, %v4045
    %v4078 = vpack.c.b16 %v4046, %v4046
    %v4079 = vpack.c.b16 %v4047, %v4047
    %v4080 = vpack.c.b16 %v4048, %v4048
    %v4081 = vpack.c.b16 %v4049, %v4049
    %v4082 = vpack.c.b16 %v4050, %v4050
    %4115 = vst [vmem:[#allocation4] sm:$0xf] %v4051
    %4116 = vst [vmem:[#allocation4 + $0x8] sm:$0xf] %v4052
    %4117 = vst [vmem:[#allocation4 + $0x10] sm:$0xf] %v4053
    %4118 = vst [vmem:[#allocation4 + $0x18] sm:$0xf] %v4054
    %4119 = vst [vmem:[#allocation4 + $0x20] sm:$0xf] %v4055
    %4120 = vst [vmem:[#allocation4 + $0x28] sm:$0xf] %v4056
    %4121 = vst [vmem:[#allocation4 + $0x30] sm:$0xf] %v4057
    %4122 = vst [vmem:[#allocation4 + $0x38] sm:$0xf] %v4058
    %4123 = vst [vmem:[#allocation4 + $0x40] sm:$0xf] %v4059
    %4124 = vst [vmem:[#allocation4 + $0x48] sm:$0xf] %v4060
    %4125 = vst [vmem:[#allocation4 + $0x50] sm:$0xf] %v4061
    %4126 = vst [vmem:[#allocation4 + $0x58] sm:$0xf] %v4062
    %4127 = vst [vmem:[#allocation4 + $0x60] sm:$0xf] %v4063
    %4128 = vst [vmem:[#allocation4 + $0x68] sm:$0xf] %v4064
    %4129 = vst [vmem:[#allocation4 + $0x70] sm:$0xf] %v4065
    %4130 = vst [vmem:[#allocation4 + $0x78] sm:$0xf] %v4066
    %4131 = vst [vmem:[#allocation4 + $0x80] sm:$0xf] %v4067
    %4132 = vst [vmem:[#allocation4 + $0x88] sm:$0xf] %v4068
    %4133 = vst [vmem:[#allocation4 + $0x90] sm:$0xf] %v4069
    %4134 = vst [vmem:[#allocation4 + $0x98] sm:$0xf] %v4070
    %4135 = vst [vmem:[#allocation4 + $0xa0] sm:$0xf] %v4071
    %4136 = vst [vmem:[#allocation4 + $0xa8] sm:$0xf] %v4072
    %4137 = vst [vmem:[#allocation4 + $0xb0] sm:$0xf] %v4073
    %4138 = vst [vmem:[#allocation4 + $0xb8] sm:$0xf] %v4074
    %4139 = vst [vmem:[#allocation4 + $0xc0] sm:$0xf] %v4075
    %4140 = vst [vmem:[#allocation4 + $0xc8] sm:$0xf] %v4076
    %4141 = vst [vmem:[#allocation4 + $0xd0] sm:$0xf] %v4077
    %4142 = vst [vmem:[#allocation4 + $0xd8] sm:$0xf] %v4078
    %4143 = vst [vmem:[#allocation4 + $0xe0] sm:$0xf] %v4079
    %4144 = vst [vmem:[#allocation4 + $0xe8] sm:$0xf] %v4080
    %4145 = vst [vmem:[#allocation4 + $0xf0] sm:$0xf] %v4081
    %4146 = vst [vmem:[#allocation4 + $0xf8] sm:$0xf] %v4082
    %v4147 = vpack.c.bf16 %v3175, %v3172
    %v4148 = vpack.c.bf16 %v3183, %v3180
    %v4149 = vpack.c.bf16 %v3191, %v3188
    %v4150 = vpack.c.bf16 %v3199, %v3196
    %v4151 = vpack.c.bf16 %v3207, %v3204
    %v4152 = vpack.c.bf16 %v3215, %v3212
    %v4153 = vpack.c.bf16 %v3223, %v3220
    %v4154 = vpack.c.bf16 %v3231, %v3228
    %v4155 = vpack.c.bf16 %v3239, %v3236
    %v4156 = vpack.c.bf16 %v3247, %v3244
    %v4157 = vpack.c.bf16 %v3255, %v3252
    %v4158 = vpack.c.bf16 %v3263, %v3260
    %v4159 = vpack.c.bf16 %v3271, %v3268
    %v4160 = vpack.c.bf16 %v3279, %v3276
    %v4161 = vpack.c.bf16 %v3287, %v3284
    %v4162 = vpack.c.bf16 %v3295, %v3292
    %v4179 = vunpack.c.l.b16 %v4147
    %v4180 = vunpack.c.h.b16 %v4147
    %v4181 = vunpack.c.l.b16 %v4148
    %v4182 = vunpack.c.h.b16 %v4148
    %v4183 = vunpack.c.l.b16 %v4149
    %v4184 = vunpack.c.h.b16 %v4149
    %v4185 = vunpack.c.l.b16 %v4150
    %v4186 = vunpack.c.h.b16 %v4150
    %v4187 = vunpack.c.l.b16 %v4151
    %v4188 = vunpack.c.h.b16 %v4151
    %v4189 = vunpack.c.l.b16 %v4152
    %v4190 = vunpack.c.h.b16 %v4152
    %v4191 = vunpack.c.l.b16 %v4153
    %v4192 = vunpack.c.h.b16 %v4153
    %v4193 = vunpack.c.l.b16 %v4154
    %v4194 = vunpack.c.h.b16 %v4154
    %v4195 = vunpack.c.l.b16 %v4155
    %v4196 = vunpack.c.h.b16 %v4155
    %v4197 = vunpack.c.l.b16 %v4156
    %v4198 = vunpack.c.h.b16 %v4156
    %v4199 = vunpack.c.l.b16 %v4157
    %v4200 = vunpack.c.h.b16 %v4157
    %v4201 = vunpack.c.l.b16 %v4158
    %v4202 = vunpack.c.h.b16 %v4158
    %v4203 = vunpack.c.l.b16 %v4159
    %v4204 = vunpack.c.h.b16 %v4159
    %v4205 = vunpack.c.l.b16 %v4160
    %v4206 = vunpack.c.h.b16 %v4160
    %v4207 = vunpack.c.l.b16 %v4161
    %v4208 = vunpack.c.h.b16 %v4161
    %v4209 = vunpack.c.l.b16 %v4162
    %v4210 = vunpack.c.h.b16 %v4162
    %v4211 = vpack.c.b16 %v4179, %v4179
    %v4212 = vpack.c.b16 %v4180, %v4180
    %v4213 = vpack.c.b16 %v4181, %v4181
    %v4214 = vpack.c.b16 %v4182, %v4182
    %v4215 = vpack.c.b16 %v4183, %v4183
    %v4216 = vpack.c.b16 %v4184, %v4184
    %v4217 = vpack.c.b16 %v4185, %v4185
    %v4218 = vpack.c.b16 %v4186, %v4186
    %v4219 = vpack.c.b16 %v4187, %v4187
    %v4220 = vpack.c.b16 %v4188, %v4188
    %v4221 = vpack.c.b16 %v4189, %v4189
    %v4222 = vpack.c.b16 %v4190, %v4190
    %v4223 = vpack.c.b16 %v4191, %v4191
    %v4224 = vpack.c.b16 %v4192, %v4192
    %v4225 = vpack.c.b16 %v4193, %v4193
    %v4226 = vpack.c.b16 %v4194, %v4194
    %v4227 = vpack.c.b16 %v4195, %v4195
    %v4228 = vpack.c.b16 %v4196, %v4196
    %v4229 = vpack.c.b16 %v4197, %v4197
    %v4230 = vpack.c.b16 %v4198, %v4198
    %v4231 = vpack.c.b16 %v4199, %v4199
    %v4232 = vpack.c.b16 %v4200, %v4200
    %v4233 = vpack.c.b16 %v4201, %v4201
    %v4234 = vpack.c.b16 %v4202, %v4202
    %v4235 = vpack.c.b16 %v4203, %v4203
    %v4236 = vpack.c.b16 %v4204, %v4204
    %v4237 = vpack.c.b16 %v4205, %v4205
    %v4238 = vpack.c.b16 %v4206, %v4206
    %v4239 = vpack.c.b16 %v4207, %v4207
    %v4240 = vpack.c.b16 %v4208, %v4208
    %v4241 = vpack.c.b16 %v4209, %v4209
    %v4242 = vpack.c.b16 %v4210, %v4210
    %4275 = vst [vmem:[#allocation4 + $0x4] sm:$0xf] %v4211
    %4276 = vst [vmem:[#allocation4 + $0xc] sm:$0xf] %v4212
    %4277 = vst [vmem:[#allocation4 + $0x14] sm:$0xf] %v4213
    %4278 = vst [vmem:[#allocation4 + $0x1c] sm:$0xf] %v4214
    %4279 = vst [vmem:[#allocation4 + $0x24] sm:$0xf] %v4215
    %4280 = vst [vmem:[#allocation4 + $0x2c] sm:$0xf] %v4216
    %4281 = vst [vmem:[#allocation4 + $0x34] sm:$0xf] %v4217
    %4282 = vst [vmem:[#allocation4 + $0x3c] sm:$0xf] %v4218
    %4283 = vst [vmem:[#allocation4 + $0x44] sm:$0xf] %v4219
    %4284 = vst [vmem:[#allocation4 + $0x4c] sm:$0xf] %v4220
    %4285 = vst [vmem:[#allocation4 + $0x54] sm:$0xf] %v4221
    %4286 = vst [vmem:[#allocation4 + $0x5c] sm:$0xf] %v4222
    %4287 = vst [vmem:[#allocation4 + $0x64] sm:$0xf] %v4223
    %4288 = vst [vmem:[#allocation4 + $0x6c] sm:$0xf] %v4224
    %4289 = vst [vmem:[#allocation4 + $0x74] sm:$0xf] %v4225
    %4290 = vst [vmem:[#allocation4 + $0x7c] sm:$0xf] %v4226
    %4291 = vst [vmem:[#allocation4 + $0x84] sm:$0xf] %v4227
    %4292 = vst [vmem:[#allocation4 + $0x8c] sm:$0xf] %v4228
    %4293 = vst [vmem:[#allocation4 + $0x94] sm:$0xf] %v4229
    %4294 = vst [vmem:[#allocation4 + $0x9c] sm:$0xf] %v4230
    %4295 = vst [vmem:[#allocation4 + $0xa4] sm:$0xf] %v4231
    %4296 = vst [vmem:[#allocation4 + $0xac] sm:$0xf] %v4232
    %4297 = vst [vmem:[#allocation4 + $0xb4] sm:$0xf] %v4233
    %4298 = vst [vmem:[#allocation4 + $0xbc] sm:$0xf] %v4234
    %4299 = vst [vmem:[#allocation4 + $0xc4] sm:$0xf] %v4235
    %4300 = vst [vmem:[#allocation4 + $0xcc] sm:$0xf] %v4236
    %4301 = vst [vmem:[#allocation4 + $0xd4] sm:$0xf] %v4237
    %4302 = vst [vmem:[#allocation4 + $0xdc] sm:$0xf] %v4238
    %4303 = vst [vmem:[#allocation4 + $0xe4] sm:$0xf] %v4239
    %4304 = vst [vmem:[#allocation4 + $0xec] sm:$0xf] %v4240
    %4305 = vst [vmem:[#allocation4 + $0xf4] sm:$0xf] %v4241
    %4306 = vst [vmem:[#allocation4 + $0xfc] sm:$0xf] %v4242
    %v4307 = vld [vmem:[#allocation4] sm:$0xff]
    %v4308 = vld [vmem:[#allocation4 + $0x8] sm:$0xff]
    %v4309 = vld [vmem:[#allocation4 + $0x10] sm:$0xff]
    %v4310 = vld [vmem:[#allocation4 + $0x18] sm:$0xff]
    %v4311 = vld [vmem:[#allocation4 + $0x20] sm:$0xff]
    %v4312 = vld [vmem:[#allocation4 + $0x28] sm:$0xff]
    %v4313 = vld [vmem:[#allocation4 + $0x30] sm:$0xff]
    %v4314 = vld [vmem:[#allocation4 + $0x38] sm:$0xff]
    %v4315 = vld [vmem:[#allocation4 + $0x40] sm:$0xff]
    %v4316 = vld [vmem:[#allocation4 + $0x48] sm:$0xff]
    %v4317 = vld [vmem:[#allocation4 + $0x50] sm:$0xff]
    %v4318 = vld [vmem:[#allocation4 + $0x58] sm:$0xff]
    %v4319 = vld [vmem:[#allocation4 + $0x60] sm:$0xff]
    %v4320 = vld [vmem:[#allocation4 + $0x68] sm:$0xff]
    %v4321 = vld [vmem:[#allocation4 + $0x70] sm:$0xff]
    %v4322 = vld [vmem:[#allocation4 + $0x78] sm:$0xff]
    %v4323 = vld [vmem:[#allocation4 + $0x80] sm:$0xff]
    %v4324 = vld [vmem:[#allocation4 + $0x88] sm:$0xff]
    %v4325 = vld [vmem:[#allocation4 + $0x90] sm:$0xff]
    %v4326 = vld [vmem:[#allocation4 + $0x98] sm:$0xff]
    %v4327 = vld [vmem:[#allocation4 + $0xa0] sm:$0xff]
    %v4328 = vld [vmem:[#allocation4 + $0xa8] sm:$0xff]
    %v4329 = vld [vmem:[#allocation4 + $0xb0] sm:$0xff]
    %v4330 = vld [vmem:[#allocation4 + $0xb8] sm:$0xff]
    %v4331 = vld [vmem:[#allocation4 + $0xc0] sm:$0xff]
    %v4332 = vld [vmem:[#allocation4 + $0xc8] sm:$0xff]
    %v4333 = vld [vmem:[#allocation4 + $0xd0] sm:$0xff]
    %v4334 = vld [vmem:[#allocation4 + $0xd8] sm:$0xff]
    %v4335 = vld [vmem:[#allocation4 + $0xe0] sm:$0xff]
    %v4336 = vld [vmem:[#allocation4 + $0xe8] sm:$0xff]
    %v4337 = vld [vmem:[#allocation4 + $0xf0] sm:$0xff]
    %v4338 = vld [vmem:[#allocation4 + $0xf8] sm:$0xff]
    %s4339 = scalar_lea.vmem [#allocation11], 256
    %v4340 = vld [vmem:[%s4339] sm:$0xf]
    %v4341 = vld [vmem:[%s4339 + $0x4] sm:$0xf]
    %v4342 = vld [vmem:[%s4339 + $0x8] sm:$0xf]
    %v4343 = vld [vmem:[%s4339 + $0xc] sm:$0xf]
    %v4344 = vld [vmem:[%s4339 + $0x10] sm:$0xf]
    %v4345 = vld [vmem:[%s4339 + $0x14] sm:$0xf]
    %v4346 = vld [vmem:[%s4339 + $0x18] sm:$0xf]
    %v4347 = vld [vmem:[%s4339 + $0x1c] sm:$0xf]
    %v4348 = vld [vmem:[%s4339 + $0x20] sm:$0xf]
    %v4349 = vld [vmem:[%s4339 + $0x24] sm:$0xf]
    %v4350 = vld [vmem:[%s4339 + $0x28] sm:$0xf]
    %v4351 = vld [vmem:[%s4339 + $0x2c] sm:$0xf]
    %v4352 = vld [vmem:[%s4339 + $0x30] sm:$0xf]
    %v4353 = vld [vmem:[%s4339 + $0x34] sm:$0xf]
    %v4354 = vld [vmem:[%s4339 + $0x38] sm:$0xf]
    %v4355 = vld [vmem:[%s4339 + $0x3c] sm:$0xf]
    %v4356 = vld [vmem:[%s4339 + $0x40] sm:$0xf]
    %v4357 = vld [vmem:[%s4339 + $0x44] sm:$0xf]
    %v4358 = vld [vmem:[%s4339 + $0x48] sm:$0xf]
    %v4359 = vld [vmem:[%s4339 + $0x4c] sm:$0xf]
    %v4360 = vld [vmem:[%s4339 + $0x50] sm:$0xf]
    %v4361 = vld [vmem:[%s4339 + $0x54] sm:$0xf]
    %v4362 = vld [vmem:[%s4339 + $0x58] sm:$0xf]
    %v4363 = vld [vmem:[%s4339 + $0x5c] sm:$0xf]
    %v4364 = vld [vmem:[%s4339 + $0x60] sm:$0xf]
    %v4365 = vld [vmem:[%s4339 + $0x64] sm:$0xf]
    %v4366 = vld [vmem:[%s4339 + $0x68] sm:$0xf]
    %v4367 = vld [vmem:[%s4339 + $0x6c] sm:$0xf]
    %v4368 = vld [vmem:[%s4339 + $0x70] sm:$0xf]
    %v4369 = vld [vmem:[%s4339 + $0x74] sm:$0xf]
    %v4370 = vld [vmem:[%s4339 + $0x78] sm:$0xf]
    %v4371 = vld [vmem:[%s4339 + $0x7c] sm:$0xf]
    %s4372 = scalar_lea.vmem %s5, 2
    %v4373 = vld [vmem:[%s4372] sm:$0x1]
    %v4375 = vlaneseq
    %v4376 = vshrl.u32 %v4375, 7
    %v4377 = vsub.s32 0, %v4376
    %v4378 = vrot.slane %v4373, %v4377
    %v4412 = vunpack.c.l.b16 %v4307
    %v4413 = vunpack.c.h.b16 %v4307
    %v4414 = vunpack.c.l.b16 %v4308
    %v4415 = vunpack.c.h.b16 %v4308
    %v4416 = vunpack.c.l.b16 %v4309
    %v4417 = vunpack.c.h.b16 %v4309
    %v4418 = vunpack.c.l.b16 %v4310
    %v4419 = vunpack.c.h.b16 %v4310
    %v4420 = vunpack.c.l.b16 %v4311
    %v4421 = vunpack.c.h.b16 %v4311
    %v4422 = vunpack.c.l.b16 %v4312
    %v4423 = vunpack.c.h.b16 %v4312
    %v4424 = vunpack.c.l.b16 %v4313
    %v4425 = vunpack.c.h.b16 %v4313
    %v4426 = vunpack.c.l.b16 %v4314
    %v4427 = vunpack.c.h.b16 %v4314
    %v4428 = vunpack.c.l.b16 %v4315
    %v4429 = vunpack.c.h.b16 %v4315
    %v4430 = vunpack.c.l.b16 %v4316
    %v4431 = vunpack.c.h.b16 %v4316
    %v4432 = vunpack.c.l.b16 %v4317
    %v4433 = vunpack.c.h.b16 %v4317
    %v4434 = vunpack.c.l.b16 %v4318
    %v4435 = vunpack.c.h.b16 %v4318
    %v4436 = vunpack.c.l.b16 %v4319
    %v4437 = vunpack.c.h.b16 %v4319
    %v4438 = vunpack.c.l.b16 %v4320
    %v4439 = vunpack.c.h.b16 %v4320
    %v4440 = vunpack.c.l.b16 %v4321
    %v4441 = vunpack.c.h.b16 %v4321
    %v4442 = vunpack.c.l.b16 %v4322
    %v4443 = vunpack.c.h.b16 %v4322
    %v4444 = vunpack.c.l.b16 %v4323
    %v4445 = vunpack.c.h.b16 %v4323
    %v4446 = vunpack.c.l.b16 %v4324
    %v4447 = vunpack.c.h.b16 %v4324
    %v4448 = vunpack.c.l.b16 %v4325
    %v4449 = vunpack.c.h.b16 %v4325
    %v4450 = vunpack.c.l.b16 %v4326
    %v4451 = vunpack.c.h.b16 %v4326
    %v4452 = vunpack.c.l.b16 %v4327
    %v4453 = vunpack.c.h.b16 %v4327
    %v4454 = vunpack.c.l.b16 %v4328
    %v4455 = vunpack.c.h.b16 %v4328
    %v4456 = vunpack.c.l.b16 %v4329
    %v4457 = vunpack.c.h.b16 %v4329
    %v4458 = vunpack.c.l.b16 %v4330
    %v4459 = vunpack.c.h.b16 %v4330
    %v4460 = vunpack.c.l.b16 %v4331
    %v4461 = vunpack.c.h.b16 %v4331
    %v4462 = vunpack.c.l.b16 %v4332
    %v4463 = vunpack.c.h.b16 %v4332
    %v4464 = vunpack.c.l.b16 %v4333
    %v4465 = vunpack.c.h.b16 %v4333
    %v4466 = vunpack.c.l.b16 %v4334
    %v4467 = vunpack.c.h.b16 %v4334
    %v4468 = vunpack.c.l.b16 %v4335
    %v4469 = vunpack.c.h.b16 %v4335
    %v4470 = vunpack.c.l.b16 %v4336
    %v4471 = vunpack.c.h.b16 %v4336
    %v4472 = vunpack.c.l.b16 %v4337
    %v4473 = vunpack.c.h.b16 %v4337
    %v4474 = vunpack.c.l.b16 %v4338
    %v4475 = vunpack.c.h.b16 %v4338
    %v4476 = vpack.c.b16 %v4414, %v4412
    %v4477 = vpack.c.b16 %v4415, %v4413
    %v4478 = vpack.c.b16 %v4418, %v4416
    %v4479 = vpack.c.b16 %v4419, %v4417
    %v4480 = vpack.c.b16 %v4422, %v4420
    %v4481 = vpack.c.b16 %v4423, %v4421
    %v4482 = vpack.c.b16 %v4426, %v4424
    %v4483 = vpack.c.b16 %v4427, %v4425
    %v4484 = vpack.c.b16 %v4430, %v4428
    %v4485 = vpack.c.b16 %v4431, %v4429
    %v4486 = vpack.c.b16 %v4434, %v4432
    %v4487 = vpack.c.b16 %v4435, %v4433
    %v4488 = vpack.c.b16 %v4438, %v4436
    %v4489 = vpack.c.b16 %v4439, %v4437
    %v4490 = vpack.c.b16 %v4442, %v4440
    %v4491 = vpack.c.b16 %v4443, %v4441
    %v4492 = vpack.c.b16 %v4446, %v4444
    %v4493 = vpack.c.b16 %v4447, %v4445
    %v4494 = vpack.c.b16 %v4450, %v4448
    %v4495 = vpack.c.b16 %v4451, %v4449
    %v4496 = vpack.c.b16 %v4454, %v4452
    %v4497 = vpack.c.b16 %v4455, %v4453
    %v4498 = vpack.c.b16 %v4458, %v4456
    %v4499 = vpack.c.b16 %v4459, %v4457
    %v4500 = vpack.c.b16 %v4462, %v4460
    %v4501 = vpack.c.b16 %v4463, %v4461
    %v4502 = vpack.c.b16 %v4466, %v4464
    %v4503 = vpack.c.b16 %v4467, %v4465
    %v4504 = vpack.c.b16 %v4470, %v4468
    %v4505 = vpack.c.b16 %v4471, %v4469
    %v4506 = vpack.c.b16 %v4474, %v4472
    %v4507 = vpack.c.b16 %v4475, %v4473
    %v4572 = vunpack.c.l.b16 %v4340
    %v4573 = vunpack.c.l.b16 %v4341
    %v4574 = vunpack.c.l.b16 %v4342
    %v4575 = vunpack.c.l.b16 %v4343
    %v4576 = vunpack.c.l.b16 %v4344
    %v4577 = vunpack.c.l.b16 %v4345
    %v4578 = vunpack.c.l.b16 %v4346
    %v4579 = vunpack.c.l.b16 %v4347
    %v4580 = vunpack.c.l.b16 %v4348
    %v4581 = vunpack.c.l.b16 %v4349
    %v4582 = vunpack.c.l.b16 %v4350
    %v4583 = vunpack.c.l.b16 %v4351
    %v4584 = vunpack.c.l.b16 %v4352
    %v4585 = vunpack.c.l.b16 %v4353
    %v4586 = vunpack.c.l.b16 %v4354
    %v4587 = vunpack.c.l.b16 %v4355
    %v4588 = vunpack.c.l.b16 %v4356
    %v4589 = vunpack.c.l.b16 %v4357
    %v4590 = vunpack.c.l.b16 %v4358
    %v4591 = vunpack.c.l.b16 %v4359
    %v4592 = vunpack.c.l.b16 %v4360
    %v4593 = vunpack.c.l.b16 %v4361
    %v4594 = vunpack.c.l.b16 %v4362
    %v4595 = vunpack.c.l.b16 %v4363
    %v4596 = vunpack.c.l.b16 %v4364
    %v4597 = vunpack.c.l.b16 %v4365
    %v4598 = vunpack.c.l.b16 %v4366
    %v4599 = vunpack.c.l.b16 %v4367
    %v4600 = vunpack.c.l.b16 %v4368
    %v4601 = vunpack.c.l.b16 %v4369
    %v4602 = vunpack.c.l.b16 %v4370
    %v4603 = vunpack.c.l.b16 %v4371
    %v4604 = vpack.c.b16 %v4573, %v4572
    %v4605 = vpack.c.b16 %v4575, %v4574
    %v4606 = vpack.c.b16 %v4577, %v4576
    %v4607 = vpack.c.b16 %v4579, %v4578
    %v4608 = vpack.c.b16 %v4581, %v4580
    %v4609 = vpack.c.b16 %v4583, %v4582
    %v4610 = vpack.c.b16 %v4585, %v4584
    %v4611 = vpack.c.b16 %v4587, %v4586
    %v4612 = vpack.c.b16 %v4589, %v4588
    %v4613 = vpack.c.b16 %v4591, %v4590
    %v4614 = vpack.c.b16 %v4593, %v4592
    %v4615 = vpack.c.b16 %v4595, %v4594
    %v4616 = vpack.c.b16 %v4597, %v4596
    %v4617 = vpack.c.b16 %v4599, %v4598
    %v4618 = vpack.c.b16 %v4601, %v4600
    %v4619 = vpack.c.b16 %v4603, %v4602
    %4636 = vmatprep.subr.bf16.mxu0 0
    %4637 = vmatpush1.bf16.msra.mxu0 %v4611
    %4638 = vmatprep.subr.bf16.mxu0 0
    %4639 = vmatpush1.bf16.msra.mxu0 %v4610
    %4640 = vmatprep.subr.bf16.mxu0 0
    %4641 = vmatpush1.bf16.msra.mxu0 %v4609
    %4642 = vmatprep.subr.bf16.mxu0 0
    %4643 = vmatpush1.bf16.msra.mxu0 %v4608
    %4644 = vmatprep.subr.bf16.mxu0 0
    %4645 = vmatpush1.bf16.msra.mxu0 %v4607
    %4646 = vmatprep.subr.bf16.mxu0 0
    %4647 = vmatpush1.bf16.msra.mxu0 %v4606
    %4648 = vmatprep.subr.bf16.mxu0 0
    %4649 = vmatpush1.bf16.msra.mxu0 %v4605
    %4650 = vmatprep.subr.bf16.mxu0 0
    %4651 = vmatpush1.bf16.msra.mxu0 %v4604
    %4652 = vmatprep.subr.bf16.mxu0 0
    %4653 = vmatpush2.bf16.msra.mxu0 %v4619
    %4654 = vmatprep.subr.bf16.mxu0 0
    %4655 = vmatpush2.bf16.msra.mxu0 %v4618
    %4656 = vmatprep.subr.bf16.mxu0 0
    %4657 = vmatpush2.bf16.msra.mxu0 %v4617
    %4658 = vmatprep.subr.bf16.mxu0 0
    %4659 = vmatpush2.bf16.msra.mxu0 %v4616
    %4660 = vmatprep.subr.bf16.mxu0 0
    %4661 = vmatpush2.bf16.msra.mxu0 %v4615
    %4662 = vmatprep.subr.bf16.mxu0 0
    %4663 = vmatpush2.bf16.msra.mxu0 %v4614
    %4664 = vmatprep.subr.bf16.mxu0 0
    %4665 = vmatpush2.bf16.msra.mxu0 %v4613
    %4666 = vmatprep.subr.bf16.mxu0 0
    %4667 = vmatpush2.bf16.msra.mxu0 %v4612
    %4668 = vmatprep.mubr.bf16.mxu0 %v4477
    %4669 = vmatmul.mubr.bf16.gmra.mxu0 %v4476
    %v4670 = vpop.f32.mrf.mxu0
    %v4671 = vadd.f32 %v4378, %v4670
    %v4672 = vpop.f32.mrf.mxu0
    %v4673 = vpop.f32.mrf.mxu0
    %v4674 = vadd.f32 %v4378, %v4673
    %v4675 = vpop.f32.mrf.mxu0
    %4676 = vmatprep.mubr.bf16.mxu0 %v4479
    %4677 = vmatmul.mubr.bf16.gmra.mxu0 %v4478
    %v4678 = vpop.f32.mrf.mxu0
    %v4679 = vadd.f32 %v4378, %v4678
    %v4680 = vpop.f32.mrf.mxu0
    %v4681 = vpop.f32.mrf.mxu0
    %v4682 = vadd.f32 %v4378, %v4681
    %v4683 = vpop.f32.mrf.mxu0
    %4684 = vmatprep.mubr.bf16.mxu0 %v4481
    %4685 = vmatmul.mubr.bf16.gmra.mxu0 %v4480
    %v4686 = vpop.f32.mrf.mxu0
    %v4687 = vadd.f32 %v4378, %v4686
    %v4688 = vpop.f32.mrf.mxu0
    %v4689 = vpop.f32.mrf.mxu0
    %v4690 = vadd.f32 %v4378, %v4689
    %v4691 = vpop.f32.mrf.mxu0
    %4692 = vmatprep.mubr.bf16.mxu0 %v4483
    %4693 = vmatmul.mubr.bf16.gmra.mxu0 %v4482
    %v4694 = vpop.f32.mrf.mxu0
    %v4695 = vadd.f32 %v4378, %v4694
    %v4696 = vpop.f32.mrf.mxu0
    %v4697 = vpop.f32.mrf.mxu0
    %v4698 = vadd.f32 %v4378, %v4697
    %v4699 = vpop.f32.mrf.mxu0
    %4700 = vmatprep.mubr.bf16.mxu0 %v4485
    %4701 = vmatmul.mubr.bf16.gmra.mxu0 %v4484
    %v4702 = vpop.f32.mrf.mxu0
    %v4703 = vadd.f32 %v4378, %v4702
    %v4704 = vpop.f32.mrf.mxu0
    %v4705 = vpop.f32.mrf.mxu0
    %v4706 = vadd.f32 %v4378, %v4705
    %v4707 = vpop.f32.mrf.mxu0
    %4708 = vmatprep.mubr.bf16.mxu0 %v4487
    %4709 = vmatmul.mubr.bf16.gmra.mxu0 %v4486
    %v4710 = vpop.f32.mrf.mxu0
    %v4711 = vadd.f32 %v4378, %v4710
    %v4712 = vpop.f32.mrf.mxu0
    %v4713 = vpop.f32.mrf.mxu0
    %v4714 = vadd.f32 %v4378, %v4713
    %v4715 = vpop.f32.mrf.mxu0
    %4716 = vmatprep.mubr.bf16.mxu0 %v4489
    %4717 = vmatmul.mubr.bf16.gmra.mxu0 %v4488
    %v4718 = vpop.f32.mrf.mxu0
    %v4719 = vadd.f32 %v4378, %v4718
    %v4720 = vpop.f32.mrf.mxu0
    %v4721 = vpop.f32.mrf.mxu0
    %v4722 = vadd.f32 %v4378, %v4721
    %v4723 = vpop.f32.mrf.mxu0
    %4724 = vmatprep.mubr.bf16.mxu0 %v4491
    %4725 = vmatmul.mubr.bf16.gmra.mxu0 %v4490
    %v4726 = vpop.f32.mrf.mxu0
    %v4727 = vadd.f32 %v4378, %v4726
    %v4728 = vpop.f32.mrf.mxu0
    %v4729 = vpop.f32.mrf.mxu0
    %v4730 = vadd.f32 %v4378, %v4729
    %v4731 = vpop.f32.mrf.mxu0
    %4732 = vmatprep.mubr.bf16.mxu0 %v4493
    %4733 = vmatmul.mubr.bf16.gmra.mxu0 %v4492
    %v4734 = vpop.f32.mrf.mxu0
    %v4735 = vadd.f32 %v4378, %v4734
    %v4736 = vpop.f32.mrf.mxu0
    %v4737 = vpop.f32.mrf.mxu0
    %v4738 = vadd.f32 %v4378, %v4737
    %v4739 = vpop.f32.mrf.mxu0
    %4740 = vmatprep.mubr.bf16.mxu0 %v4495
    %4741 = vmatmul.mubr.bf16.gmra.mxu0 %v4494
    %v4742 = vpop.f32.mrf.mxu0
    %v4743 = vadd.f32 %v4378, %v4742
    %v4744 = vpop.f32.mrf.mxu0
    %v4745 = vpop.f32.mrf.mxu0
    %v4746 = vadd.f32 %v4378, %v4745
    %v4747 = vpop.f32.mrf.mxu0
    %4748 = vmatprep.mubr.bf16.mxu0 %v4497
    %4749 = vmatmul.mubr.bf16.gmra.mxu0 %v4496
    %v4750 = vpop.f32.mrf.mxu0
    %v4751 = vadd.f32 %v4378, %v4750
    %v4752 = vpop.f32.mrf.mxu0
    %v4753 = vpop.f32.mrf.mxu0
    %v4754 = vadd.f32 %v4378, %v4753
    %v4755 = vpop.f32.mrf.mxu0
    %4756 = vmatprep.mubr.bf16.mxu0 %v4499
    %4757 = vmatmul.mubr.bf16.gmra.mxu0 %v4498
    %v4758 = vpop.f32.mrf.mxu0
    %v4759 = vadd.f32 %v4378, %v4758
    %v4760 = vpop.f32.mrf.mxu0
    %v4761 = vpop.f32.mrf.mxu0
    %v4762 = vadd.f32 %v4378, %v4761
    %v4763 = vpop.f32.mrf.mxu0
    %4764 = vmatprep.mubr.bf16.mxu0 %v4501
    %4765 = vmatmul.mubr.bf16.gmra.mxu0 %v4500
    %v4766 = vpop.f32.mrf.mxu0
    %v4767 = vadd.f32 %v4378, %v4766
    %v4768 = vpop.f32.mrf.mxu0
    %v4769 = vpop.f32.mrf.mxu0
    %v4770 = vadd.f32 %v4378, %v4769
    %v4771 = vpop.f32.mrf.mxu0
    %4772 = vmatprep.mubr.bf16.mxu0 %v4503
    %4773 = vmatmul.mubr.bf16.gmra.mxu0 %v4502
    %v4774 = vpop.f32.mrf.mxu0
    %v4775 = vadd.f32 %v4378, %v4774
    %v4776 = vpop.f32.mrf.mxu0
    %v4777 = vpop.f32.mrf.mxu0
    %v4778 = vadd.f32 %v4378, %v4777
    %v4779 = vpop.f32.mrf.mxu0
    %4780 = vmatprep.mubr.bf16.mxu0 %v4505
    %4781 = vmatmul.mubr.bf16.gmra.mxu0 %v4504
    %v4782 = vpop.f32.mrf.mxu0
    %v4783 = vadd.f32 %v4378, %v4782
    %v4784 = vpop.f32.mrf.mxu0
    %v4785 = vpop.f32.mrf.mxu0
    %v4786 = vadd.f32 %v4378, %v4785
    %v4787 = vpop.f32.mrf.mxu0
    %4788 = vmatprep.mubr.bf16.mxu0 %v4507
    %4789 = vmatmul.mubr.bf16.gmra.mxu0 %v4506
    %v4790 = vpop.f32.mrf.mxu0
    %v4791 = vadd.f32 %v4378, %v4790
    %v4792 = vpop.f32.mrf.mxu0
    %v4793 = vpop.f32.mrf.mxu0
    %v4794 = vadd.f32 %v4378, %v4793
    %v4795 = vpop.f32.mrf.mxu0
    %4796 = vdwg.mxu0
    %v4797 = vmul.f32 %v4671, %v212
    %v4798 = vmul.f32 %v4674, %v213
    %v4799 = vmul.f32 %v4679, %v214
    %v4800 = vmul.f32 %v4682, %v215
    %v4801 = vmul.f32 %v4687, %v216
    %v4802 = vmul.f32 %v4690, %v217
    %v4803 = vmul.f32 %v4695, %v218
    %v4804 = vmul.f32 %v4698, %v219
    %v4805 = vmul.f32 %v4703, %v220
    %v4806 = vmul.f32 %v4706, %v221
    %v4807 = vmul.f32 %v4711, %v222
    %v4808 = vmul.f32 %v4714, %v223
    %v4809 = vmul.f32 %v4719, %v224
    %v4810 = vmul.f32 %v4722, %v225
    %v4811 = vmul.f32 %v4727, %v226
    %v4812 = vmul.f32 %v4730, %v227
    %v4813 = vmul.f32 %v4735, %v228
    %v4814 = vmul.f32 %v4738, %v229
    %v4815 = vmul.f32 %v4743, %v230
    %v4816 = vmul.f32 %v4746, %v231
    %v4817 = vmul.f32 %v4751, %v232
    %v4818 = vmul.f32 %v4754, %v233
    %v4819 = vmul.f32 %v4759, %v234
    %v4820 = vmul.f32 %v4762, %v235
    %v4821 = vmul.f32 %v4767, %v236
    %v4822 = vmul.f32 %v4770, %v237
    %v4823 = vmul.f32 %v4775, %v238
    %v4824 = vmul.f32 %v4778, %v239
    %v4825 = vmul.f32 %v4783, %v240
    %v4826 = vmul.f32 %v4786, %v241
    %v4827 = vmul.f32 %v4791, %v242
    %v4828 = vmul.f32 %v4794, %v243
    %v4829 = vadd.f32 %v4797, %v4798
    %v4830 = vadd.f32 %v4829, %v4799
    %v4831 = vadd.f32 %v4830, %v4800
    %v4832 = vadd.f32 %v4831, %v4801
    %v4833 = vadd.f32 %v4832, %v4802
    %v4834 = vadd.f32 %v4833, %v4803
    %v4835 = vadd.f32 %v4834, %v4804
    %v4836 = vadd.f32 %v4835, %v4805
    %v4837 = vadd.f32 %v4836, %v4806
    %v4838 = vadd.f32 %v4837, %v4807
    %v4839 = vadd.f32 %v4838, %v4808
    %v4840 = vadd.f32 %v4839, %v4809
    %v4841 = vadd.f32 %v4840, %v4810
    %v4842 = vadd.f32 %v4841, %v4811
    %v4843 = vadd.f32 %v4842, %v4812
    %v4844 = vadd.f32 %v4843, %v4813
    %v4845 = vadd.f32 %v4844, %v4814
    %v4846 = vadd.f32 %v4845, %v4815
    %v4847 = vadd.f32 %v4846, %v4816
    %v4848 = vadd.f32 %v4847, %v4817
    %v4849 = vadd.f32 %v4848, %v4818
    %v4850 = vadd.f32 %v4849, %v4819
    %v4851 = vadd.f32 %v4850, %v4820
    %v4852 = vadd.f32 %v4851, %v4821
    %v4853 = vadd.f32 %v4852, %v4822
    %v4854 = vadd.f32 %v4853, %v4823
    %v4855 = vadd.f32 %v4854, %v4824
    %v4856 = vadd.f32 %v4855, %v4825
    %v4857 = vadd.f32 %v4856, %v4826
    %v4858 = vadd.f32 %v4857, %v4827
    %v4859 = vadd.f32 %v4858, %v4828
    %v4860 = vrot.slane %v4859, 4
    %v4861 = vadd.f32 %v4859, %v4860
    %v4862 = vrot.slane %v4861, 2
    %v4863 = vadd.f32 %v4861, %v4862
    %v4864 = vrot.slane %v4863, 1
    %v4865 = vadd.f32 %v4863, %v4864
    %v4866 = vmul.f32 %v4865, 0.0625
    %v4867 = vmul.f32 %v4797, %v4671
    %v4868 = vmul.f32 %v4798, %v4674
    %v4869 = vmul.f32 %v4799, %v4679
    %v4870 = vmul.f32 %v4800, %v4682
    %v4871 = vmul.f32 %v4801, %v4687
    %v4872 = vmul.f32 %v4802, %v4690
    %v4873 = vmul.f32 %v4803, %v4695
    %v4874 = vmul.f32 %v4804, %v4698
    %v4875 = vmul.f32 %v4805, %v4703
    %v4876 = vmul.f32 %v4806, %v4706
    %v4877 = vmul.f32 %v4807, %v4711
    %v4878 = vmul.f32 %v4808, %v4714
    %v4879 = vmul.f32 %v4809, %v4719
    %v4880 = vmul.f32 %v4810, %v4722
    %v4881 = vmul.f32 %v4811, %v4727
    %v4882 = vmul.f32 %v4812, %v4730
    %v4883 = vmul.f32 %v4813, %v4735
    %v4884 = vmul.f32 %v4814, %v4738
    %v4885 = vmul.f32 %v4815, %v4743
    %v4886 = vmul.f32 %v4816, %v4746
    %v4887 = vmul.f32 %v4817, %v4751
    %v4888 = vmul.f32 %v4818, %v4754
    %v4889 = vmul.f32 %v4819, %v4759
    %v4890 = vmul.f32 %v4820, %v4762
    %v4891 = vmul.f32 %v4821, %v4767
    %v4892 = vmul.f32 %v4822, %v4770
    %v4893 = vmul.f32 %v4823, %v4775
    %v4894 = vmul.f32 %v4824, %v4778
    %v4895 = vmul.f32 %v4825, %v4783
    %v4896 = vmul.f32 %v4826, %v4786
    %v4897 = vmul.f32 %v4827, %v4791
    %v4898 = vmul.f32 %v4828, %v4794
    %v4899 = vadd.f32 %v4867, %v4868
    %v4900 = vadd.f32 %v4899, %v4869
    %v4901 = vadd.f32 %v4900, %v4870
    %v4902 = vadd.f32 %v4901, %v4871
    %v4903 = vadd.f32 %v4902, %v4872
    %v4904 = vadd.f32 %v4903, %v4873
    %v4905 = vadd.f32 %v4904, %v4874
    %v4906 = vadd.f32 %v4905, %v4875
    %v4907 = vadd.f32 %v4906, %v4876
    %v4908 = vadd.f32 %v4907, %v4877
    %v4909 = vadd.f32 %v4908, %v4878
    %v4910 = vadd.f32 %v4909, %v4879
    %v4911 = vadd.f32 %v4910, %v4880
    %v4912 = vadd.f32 %v4911, %v4881
    %v4913 = vadd.f32 %v4912, %v4882
    %v4914 = vadd.f32 %v4913, %v4883
    %v4915 = vadd.f32 %v4914, %v4884
    %v4916 = vadd.f32 %v4915, %v4885
    %v4917 = vadd.f32 %v4916, %v4886
    %v4918 = vadd.f32 %v4917, %v4887
    %v4919 = vadd.f32 %v4918, %v4888
    %v4920 = vadd.f32 %v4919, %v4889
    %v4921 = vadd.f32 %v4920, %v4890
    %v4922 = vadd.f32 %v4921, %v4891
    %v4923 = vadd.f32 %v4922, %v4892
    %v4924 = vadd.f32 %v4923, %v4893
    %v4925 = vadd.f32 %v4924, %v4894
    %v4926 = vadd.f32 %v4925, %v4895
    %v4927 = vadd.f32 %v4926, %v4896
    %v4928 = vadd.f32 %v4927, %v4897
    %v4929 = vadd.f32 %v4928, %v4898
    %v4930 = vrot.slane %v4929, 4
    %v4931 = vadd.f32 %v4929, %v4930
    %v4932 = vrot.slane %v4931, 2
    %v4933 = vadd.f32 %v4931, %v4932
    %v4934 = vrot.slane %v4933, 1
    %v4935 = vadd.f32 %v4933, %v4934
    %v4936 = vmul.f32 %v4935, 0.0625
    %v4937 = vmul.f32 %v4866, %v4866
    %v4938 = vsub.f32 %v4936, %v4937
    %v4939 = vsub.f32 %v4671, %v4866
    %v4940 = vsub.f32 %v4674, %v4866
    %v4941 = vsub.f32 %v4679, %v4866
    %v4942 = vsub.f32 %v4682, %v4866
    %v4943 = vsub.f32 %v4687, %v4866
    %v4944 = vsub.f32 %v4690, %v4866
    %v4945 = vsub.f32 %v4695, %v4866
    %v4946 = vsub.f32 %v4698, %v4866
    %v4947 = vsub.f32 %v4703, %v4866
    %v4948 = vsub.f32 %v4706, %v4866
    %v4949 = vsub.f32 %v4711, %v4866
    %v4950 = vsub.f32 %v4714, %v4866
    %v4951 = vsub.f32 %v4719, %v4866
    %v4952 = vsub.f32 %v4722, %v4866
    %v4953 = vsub.f32 %v4727, %v4866
    %v4954 = vsub.f32 %v4730, %v4866
    %v4955 = vsub.f32 %v4735, %v4866
    %v4956 = vsub.f32 %v4738, %v4866
    %v4957 = vsub.f32 %v4743, %v4866
    %v4958 = vsub.f32 %v4746, %v4866
    %v4959 = vsub.f32 %v4751, %v4866
    %v4960 = vsub.f32 %v4754, %v4866
    %v4961 = vsub.f32 %v4759, %v4866
    %v4962 = vsub.f32 %v4762, %v4866
    %v4963 = vsub.f32 %v4767, %v4866
    %v4964 = vsub.f32 %v4770, %v4866
    %v4965 = vsub.f32 %v4775, %v4866
    %v4966 = vsub.f32 %v4778, %v4866
    %v4967 = vsub.f32 %v4783, %v4866
    %v4968 = vsub.f32 %v4786, %v4866
    %v4969 = vsub.f32 %v4791, %v4866
    %v4970 = vsub.f32 %v4794, %v4866
    %v4971 = vadd.f32 %v4938, 1e-05
    %v4972 = vrsqrt.pop %v4971
    %v4973 = vmul.f32 %v4939, %v4972
    %v4974 = vmul.f32 %v4940, %v4972
    %v4975 = vmul.f32 %v4941, %v4972
    %v4976 = vmul.f32 %v4942, %v4972
    %v4977 = vmul.f32 %v4943, %v4972
    %v4978 = vmul.f32 %v4944, %v4972
    %v4979 = vmul.f32 %v4945, %v4972
    %v4980 = vmul.f32 %v4946, %v4972
    %v4981 = vmul.f32 %v4947, %v4972
    %v4982 = vmul.f32 %v4948, %v4972
    %v4983 = vmul.f32 %v4949, %v4972
    %v4984 = vmul.f32 %v4950, %v4972
    %v4985 = vmul.f32 %v4951, %v4972
    %v4986 = vmul.f32 %v4952, %v4972
    %v4987 = vmul.f32 %v4953, %v4972
    %v4988 = vmul.f32 %v4954, %v4972
    %v4989 = vmul.f32 %v4955, %v4972
    %v4990 = vmul.f32 %v4956, %v4972
    %v4991 = vmul.f32 %v4957, %v4972
    %v4992 = vmul.f32 %v4958, %v4972
    %v4993 = vmul.f32 %v4959, %v4972
    %v4994 = vmul.f32 %v4960, %v4972
    %v4995 = vmul.f32 %v4961, %v4972
    %v4996 = vmul.f32 %v4962, %v4972
    %v4997 = vmul.f32 %v4963, %v4972
    %v4998 = vmul.f32 %v4964, %v4972
    %v4999 = vmul.f32 %v4965, %v4972
    %v5000 = vmul.f32 %v4966, %v4972
    %v5001 = vmul.f32 %v4967, %v4972
    %v5002 = vmul.f32 %v4968, %v4972
    %v5003 = vmul.f32 %v4969, %v4972
    %v5004 = vmul.f32 %v4970, %v4972
    %s5005 = scalar_lea.vmem %s6, 2
    %v5006 = vld [vmem:[%s5005] sm:$0x1]
    %v5008 = vlaneseq
    %v5009 = vshrl.u32 %v5008, 7
    %v5010 = vsub.s32 0, %v5009
    %v5011 = vrot.slane %v5006, %v5010
    %v5013 = vmul.f32 %v4973, %v5011
    %v5014 = vmul.f32 %v4974, %v5011
    %v5015 = vmul.f32 %v4975, %v5011
    %v5016 = vmul.f32 %v4976, %v5011
    %v5017 = vmul.f32 %v4977, %v5011
    %v5018 = vmul.f32 %v4978, %v5011
    %v5019 = vmul.f32 %v4979, %v5011
    %v5020 = vmul.f32 %v4980, %v5011
    %v5021 = vmul.f32 %v4981, %v5011
    %v5022 = vmul.f32 %v4982, %v5011
    %v5023 = vmul.f32 %v4983, %v5011
    %v5024 = vmul.f32 %v4984, %v5011
    %v5025 = vmul.f32 %v4985, %v5011
    %v5026 = vmul.f32 %v4986, %v5011
    %v5027 = vmul.f32 %v4987, %v5011
    %v5028 = vmul.f32 %v4988, %v5011
    %v5029 = vmul.f32 %v4989, %v5011
    %v5030 = vmul.f32 %v4990, %v5011
    %v5031 = vmul.f32 %v4991, %v5011
    %v5032 = vmul.f32 %v4992, %v5011
    %v5033 = vmul.f32 %v4993, %v5011
    %v5034 = vmul.f32 %v4994, %v5011
    %v5035 = vmul.f32 %v4995, %v5011
    %v5036 = vmul.f32 %v4996, %v5011
    %v5037 = vmul.f32 %v4997, %v5011
    %v5038 = vmul.f32 %v4998, %v5011
    %v5039 = vmul.f32 %v4999, %v5011
    %v5040 = vmul.f32 %v5000, %v5011
    %v5041 = vmul.f32 %v5001, %v5011
    %v5042 = vmul.f32 %v5002, %v5011
    %v5043 = vmul.f32 %v5003, %v5011
    %v5044 = vmul.f32 %v5004, %v5011
    %s5045 = scalar_lea.vmem %s7, 2
    %v5046 = vld [vmem:[%s5045] sm:$0x1]
    %v5048 = vlaneseq
    %v5049 = vshrl.u32 %v5048, 7
    %v5050 = vsub.s32 0, %v5049
    %v5051 = vrot.slane %v5046, %v5050
    %v5053 = vadd.f32 %v5013, %v5051
    %v5054 = vadd.f32 %v5014, %v5051
    %v5055 = vadd.f32 %v5015, %v5051
    %v5056 = vadd.f32 %v5016, %v5051
    %v5057 = vadd.f32 %v5017, %v5051
    %v5058 = vadd.f32 %v5018, %v5051
    %v5059 = vadd.f32 %v5019, %v5051
    %v5060 = vadd.f32 %v5020, %v5051
    %v5061 = vadd.f32 %v5021, %v5051
    %v5062 = vadd.f32 %v5022, %v5051
    %v5063 = vadd.f32 %v5023, %v5051
    %v5064 = vadd.f32 %v5024, %v5051
    %v5065 = vadd.f32 %v5025, %v5051
    %v5066 = vadd.f32 %v5026, %v5051
    %v5067 = vadd.f32 %v5027, %v5051
    %v5068 = vadd.f32 %v5028, %v5051
    %v5069 = vadd.f32 %v5029, %v5051
    %v5070 = vadd.f32 %v5030, %v5051
    %v5071 = vadd.f32 %v5031, %v5051
    %v5072 = vadd.f32 %v5032, %v5051
    %v5073 = vadd.f32 %v5033, %v5051
    %v5074 = vadd.f32 %v5034, %v5051
    %v5075 = vadd.f32 %v5035, %v5051
    %v5076 = vadd.f32 %v5036, %v5051
    %v5077 = vadd.f32 %v5037, %v5051
    %v5078 = vadd.f32 %v5038, %v5051
    %v5079 = vadd.f32 %v5039, %v5051
    %v5080 = vadd.f32 %v5040, %v5051
    %v5081 = vadd.f32 %v5041, %v5051
    %v5082 = vadd.f32 %v5042, %v5051
    %v5083 = vadd.f32 %v5043, %v5051
    %v5084 = vadd.f32 %v5044, %v5051
    %v5085 = vmax.f32 %v5053, 0.0
    %v5086 = vmax.f32 %v5054, 0.0
    %v5087 = vmax.f32 %v5055, 0.0
    %v5088 = vmax.f32 %v5056, 0.0
    %v5089 = vmax.f32 %v5057, 0.0
    %v5090 = vmax.f32 %v5058, 0.0
    %v5091 = vmax.f32 %v5059, 0.0
    %v5092 = vmax.f32 %v5060, 0.0
    %v5093 = vmax.f32 %v5061, 0.0
    %v5094 = vmax.f32 %v5062, 0.0
    %v5095 = vmax.f32 %v5063, 0.0
    %v5096 = vmax.f32 %v5064, 0.0
    %v5097 = vmax.f32 %v5065, 0.0
    %v5098 = vmax.f32 %v5066, 0.0
    %v5099 = vmax.f32 %v5067, 0.0
    %v5100 = vmax.f32 %v5068, 0.0
    %v5101 = vmax.f32 %v5069, 0.0
    %v5102 = vmax.f32 %v5070, 0.0
    %v5103 = vmax.f32 %v5071, 0.0
    %v5104 = vmax.f32 %v5072, 0.0
    %v5105 = vmax.f32 %v5073, 0.0
    %v5106 = vmax.f32 %v5074, 0.0
    %v5107 = vmax.f32 %v5075, 0.0
    %v5108 = vmax.f32 %v5076, 0.0
    %v5109 = vmax.f32 %v5077, 0.0
    %v5110 = vmax.f32 %v5078, 0.0
    %v5111 = vmax.f32 %v5079, 0.0
    %v5112 = vmax.f32 %v5080, 0.0
    %v5113 = vmax.f32 %v5081, 0.0
    %v5114 = vmax.f32 %v5082, 0.0
    %v5115 = vmax.f32 %v5083, 0.0
    %v5116 = vmax.f32 %v5084, 0.0
    %v5117 = vpack.c.bf16 %v5086, %v5085
    %v5118 = vpack.c.bf16 %v5088, %v5087
    %v5119 = vpack.c.bf16 %v5090, %v5089
    %v5120 = vpack.c.bf16 %v5092, %v5091
    %v5121 = vpack.c.bf16 %v5094, %v5093
    %v5122 = vpack.c.bf16 %v5096, %v5095
    %v5123 = vpack.c.bf16 %v5098, %v5097
    %v5124 = vpack.c.bf16 %v5100, %v5099
    %v5125 = vpack.c.bf16 %v5102, %v5101
    %v5126 = vpack.c.bf16 %v5104, %v5103
    %v5127 = vpack.c.bf16 %v5106, %v5105
    %v5128 = vpack.c.bf16 %v5108, %v5107
    %v5129 = vpack.c.bf16 %v5110, %v5109
    %v5130 = vpack.c.bf16 %v5112, %v5111
    %v5131 = vpack.c.bf16 %v5114, %v5113
    %v5132 = vpack.c.bf16 %v5116, %v5115
    %v5133 = vld [vmem:[#allocation13] sm:$0xf]
    %v5134 = vld [vmem:[#allocation13 + $0x4] sm:$0xf]
    %v5135 = vld [vmem:[#allocation13 + $0x8] sm:$0xf]
    %v5136 = vld [vmem:[#allocation13 + $0xc] sm:$0xf]
    %v5137 = vld [vmem:[#allocation13 + $0x10] sm:$0xf]
    %v5138 = vld [vmem:[#allocation13 + $0x14] sm:$0xf]
    %v5139 = vld [vmem:[#allocation13 + $0x18] sm:$0xf]
    %v5140 = vld [vmem:[#allocation13 + $0x1c] sm:$0xf]
    %v5141 = vld [vmem:[#allocation13 + $0x20] sm:$0xf]
    %v5142 = vld [vmem:[#allocation13 + $0x24] sm:$0xf]
    %v5143 = vld [vmem:[#allocation13 + $0x28] sm:$0xf]
    %v5144 = vld [vmem:[#allocation13 + $0x2c] sm:$0xf]
    %v5145 = vld [vmem:[#allocation13 + $0x30] sm:$0xf]
    %v5146 = vld [vmem:[#allocation13 + $0x34] sm:$0xf]
    %v5147 = vld [vmem:[#allocation13 + $0x38] sm:$0xf]
    %v5148 = vld [vmem:[#allocation13 + $0x3c] sm:$0xf]
    %v5149 = vld [vmem:[%s9] sm:$0x1]
    %v5151 = vlaneseq
    %v5152 = vshrl.u32 %v5151, 7
    %v5153 = vsub.s32 0, %v5152
    %v5154 = vrot.slane %v5149, %v5153
    %v5172 = vunpack.c.l.b16 %v5133
    %v5173 = vunpack.c.l.b16 %v5134
    %v5174 = vunpack.c.l.b16 %v5135
    %v5175 = vunpack.c.l.b16 %v5136
    %v5176 = vunpack.c.l.b16 %v5137
    %v5177 = vunpack.c.l.b16 %v5138
    %v5178 = vunpack.c.l.b16 %v5139
    %v5179 = vunpack.c.l.b16 %v5140
    %v5180 = vunpack.c.l.b16 %v5141
    %v5181 = vunpack.c.l.b16 %v5142
    %v5182 = vunpack.c.l.b16 %v5143
    %v5183 = vunpack.c.l.b16 %v5144
    %v5184 = vunpack.c.l.b16 %v5145
    %v5185 = vunpack.c.l.b16 %v5146
    %v5186 = vunpack.c.l.b16 %v5147
    %v5187 = vunpack.c.l.b16 %v5148
    %v5188 = vpack.c.b16 %v5173, %v5172
    %v5189 = vpack.c.b16 %v5175, %v5174
    %v5190 = vpack.c.b16 %v5177, %v5176
    %v5191 = vpack.c.b16 %v5179, %v5178
    %v5192 = vpack.c.b16 %v5181, %v5180
    %v5193 = vpack.c.b16 %v5183, %v5182
    %v5194 = vpack.c.b16 %v5185, %v5184
    %v5195 = vpack.c.b16 %v5187, %v5186
    %5204 = vmatprep.subr.bf16.mxu0 0
    %5205 = vmatpush1.bf16.msra.mxu0 %v5195
    %5206 = vmatprep.subr.bf16.mxu0 0
    %5207 = vmatpush1.bf16.msra.mxu0 %v5194
    %5208 = vmatprep.subr.bf16.mxu0 0
    %5209 = vmatpush1.bf16.msra.mxu0 %v5193
    %5210 = vmatprep.subr.bf16.mxu0 0
    %5211 = vmatpush1.bf16.msra.mxu0 %v5192
    %5212 = vmatprep.subr.bf16.mxu0 0
    %5213 = vmatpush1.bf16.msra.mxu0 %v5191
    %5214 = vmatprep.subr.bf16.mxu0 0
    %5215 = vmatpush1.bf16.msra.mxu0 %v5190
    %5216 = vmatprep.subr.bf16.mxu0 0
    %5217 = vmatpush1.bf16.msra.mxu0 %v5189
    %5218 = vmatprep.subr.bf16.mxu0 0
    %5219 = vmatpush1.bf16.msra.mxu0 %v5188
    %5220 = vmatprep.subr.bf16.mxu0 0
    %5221 = vmatpush2.bf16.msra.mxu0 0
    %5222 = vmatprep.subr.bf16.mxu0 0
    %5223 = vmatpush2.bf16.msra.mxu0 0
    %5224 = vmatprep.subr.bf16.mxu0 0
    %5225 = vmatpush2.bf16.msra.mxu0 0
    %5226 = vmatprep.subr.bf16.mxu0 0
    %5227 = vmatpush2.bf16.msra.mxu0 0
    %5228 = vmatprep.subr.bf16.mxu0 0
    %5229 = vmatpush2.bf16.msra.mxu0 0
    %5230 = vmatprep.subr.bf16.mxu0 0
    %5231 = vmatpush2.bf16.msra.mxu0 0
    %5232 = vmatprep.subr.bf16.mxu0 0
    %5233 = vmatpush2.bf16.msra.mxu0 0
    %5234 = vmatprep.subr.bf16.mxu0 0
    %5235 = vmatpush2.bf16.msra.mxu0 0
    %5236 = vmatprep.mubr.bf16.mxu0 0
    %5237 = vmatmul.mubr.bf16.gmra.mxu0 %v5117
    %v5238 = vpop.f32.mrf.mxu0
    %v5239 = vadd.f32 %v5154, %v5238
    %v5240 = vpop.f32.mrf.mxu0
    %v5241 = vpop.f32.mrf.mxu0
    %v5242 = vadd.f32 %v5154, %v5241
    %v5243 = vpop.f32.mrf.mxu0
    %5244 = vmatprep.mubr.bf16.mxu0 0
    %5245 = vmatmul.mubr.bf16.gmra.mxu0 %v5118
    %v5246 = vpop.f32.mrf.mxu0
    %v5247 = vadd.f32 %v5154, %v5246
    %v5248 = vpop.f32.mrf.mxu0
    %v5249 = vpop.f32.mrf.mxu0
    %v5250 = vadd.f32 %v5154, %v5249
    %v5251 = vpop.f32.mrf.mxu0
    %5252 = vmatprep.mubr.bf16.mxu0 0
    %5253 = vmatmul.mubr.bf16.gmra.mxu0 %v5119
    %v5254 = vpop.f32.mrf.mxu0
    %v5255 = vadd.f32 %v5154, %v5254
    %v5256 = vpop.f32.mrf.mxu0
    %v5257 = vpop.f32.mrf.mxu0
    %v5258 = vadd.f32 %v5154, %v5257
    %v5259 = vpop.f32.mrf.mxu0
    %5260 = vmatprep.mubr.bf16.mxu0 0
    %5261 = vmatmul.mubr.bf16.gmra.mxu0 %v5120
    %v5262 = vpop.f32.mrf.mxu0
    %v5263 = vadd.f32 %v5154, %v5262
    %v5264 = vpop.f32.mrf.mxu0
    %v5265 = vpop.f32.mrf.mxu0
    %v5266 = vadd.f32 %v5154, %v5265
    %v5267 = vpop.f32.mrf.mxu0
    %5268 = vmatprep.mubr.bf16.mxu0 0
    %5269 = vmatmul.mubr.bf16.gmra.mxu0 %v5121
    %v5270 = vpop.f32.mrf.mxu0
    %v5271 = vadd.f32 %v5154, %v5270
    %v5272 = vpop.f32.mrf.mxu0
    %v5273 = vpop.f32.mrf.mxu0
    %v5274 = vadd.f32 %v5154, %v5273
    %v5275 = vpop.f32.mrf.mxu0
    %5276 = vmatprep.mubr.bf16.mxu0 0
    %5277 = vmatmul.mubr.bf16.gmra.mxu0 %v5122
    %v5278 = vpop.f32.mrf.mxu0
    %v5279 = vadd.f32 %v5154, %v5278
    %v5280 = vpop.f32.mrf.mxu0
    %v5281 = vpop.f32.mrf.mxu0
    %v5282 = vadd.f32 %v5154, %v5281
    %v5283 = vpop.f32.mrf.mxu0
    %5284 = vmatprep.mubr.bf16.mxu0 0
    %5285 = vmatmul.mubr.bf16.gmra.mxu0 %v5123
    %v5286 = vpop.f32.mrf.mxu0
    %v5287 = vadd.f32 %v5154, %v5286
    %v5288 = vpop.f32.mrf.mxu0
    %v5289 = vpop.f32.mrf.mxu0
    %v5290 = vadd.f32 %v5154, %v5289
    %v5291 = vpop.f32.mrf.mxu0
    %5292 = vmatprep.mubr.bf16.mxu0 0
    %5293 = vmatmul.mubr.bf16.gmra.mxu0 %v5124
    %v5294 = vpop.f32.mrf.mxu0
    %v5295 = vadd.f32 %v5154, %v5294
    %v5296 = vpop.f32.mrf.mxu0
    %v5297 = vpop.f32.mrf.mxu0
    %v5298 = vadd.f32 %v5154, %v5297
    %v5299 = vpop.f32.mrf.mxu0
    %5300 = vmatprep.mubr.bf16.mxu0 0
    %5301 = vmatmul.mubr.bf16.gmra.mxu0 %v5125
    %v5302 = vpop.f32.mrf.mxu0
    %v5303 = vadd.f32 %v5154, %v5302
    %v5304 = vpop.f32.mrf.mxu0
    %v5305 = vpop.f32.mrf.mxu0
    %v5306 = vadd.f32 %v5154, %v5305
    %v5307 = vpop.f32.mrf.mxu0
    %5308 = vmatprep.mubr.bf16.mxu0 0
    %5309 = vmatmul.mubr.bf16.gmra.mxu0 %v5126
    %v5310 = vpop.f32.mrf.mxu0
    %v5311 = vadd.f32 %v5154, %v5310
    %v5312 = vpop.f32.mrf.mxu0
    %v5313 = vpop.f32.mrf.mxu0
    %v5314 = vadd.f32 %v5154, %v5313
    %v5315 = vpop.f32.mrf.mxu0
    %5316 = vmatprep.mubr.bf16.mxu0 0
    %5317 = vmatmul.mubr.bf16.gmra.mxu0 %v5127
    %v5318 = vpop.f32.mrf.mxu0
    %v5319 = vadd.f32 %v5154, %v5318
    %v5320 = vpop.f32.mrf.mxu0
    %v5321 = vpop.f32.mrf.mxu0
    %v5322 = vadd.f32 %v5154, %v5321
    %v5323 = vpop.f32.mrf.mxu0
    %5324 = vmatprep.mubr.bf16.mxu0 0
    %5325 = vmatmul.mubr.bf16.gmra.mxu0 %v5128
    %v5326 = vpop.f32.mrf.mxu0
    %v5327 = vadd.f32 %v5154, %v5326
    %v5328 = vpop.f32.mrf.mxu0
    %v5329 = vpop.f32.mrf.mxu0
    %v5330 = vadd.f32 %v5154, %v5329
    %v5331 = vpop.f32.mrf.mxu0
    %5332 = vmatprep.mubr.bf16.mxu0 0
    %5333 = vmatmul.mubr.bf16.gmra.mxu0 %v5129
    %v5334 = vpop.f32.mrf.mxu0
    %v5335 = vadd.f32 %v5154, %v5334
    %v5336 = vpop.f32.mrf.mxu0
    %v5337 = vpop.f32.mrf.mxu0
    %v5338 = vadd.f32 %v5154, %v5337
    %v5339 = vpop.f32.mrf.mxu0
    %5340 = vmatprep.mubr.bf16.mxu0 0
    %5341 = vmatmul.mubr.bf16.gmra.mxu0 %v5130
    %v5342 = vpop.f32.mrf.mxu0
    %v5343 = vadd.f32 %v5154, %v5342
    %v5344 = vpop.f32.mrf.mxu0
    %v5345 = vpop.f32.mrf.mxu0
    %v5346 = vadd.f32 %v5154, %v5345
    %v5347 = vpop.f32.mrf.mxu0
    %5348 = vmatprep.mubr.bf16.mxu0 0
    %5349 = vmatmul.mubr.bf16.gmra.mxu0 %v5131
    %v5350 = vpop.f32.mrf.mxu0
    %v5351 = vadd.f32 %v5154, %v5350
    %v5352 = vpop.f32.mrf.mxu0
    %v5353 = vpop.f32.mrf.mxu0
    %v5354 = vadd.f32 %v5154, %v5353
    %v5355 = vpop.f32.mrf.mxu0
    %5356 = vmatprep.mubr.bf16.mxu0 0
    %5357 = vmatmul.mubr.bf16.gmra.mxu0 %v5132
    %v5358 = vpop.f32.mrf.mxu0
    %v5359 = vadd.f32 %v5154, %v5358
    %v5360 = vpop.f32.mrf.mxu0
    %v5361 = vpop.f32.mrf.mxu0
    %v5362 = vadd.f32 %v5154, %v5361
    %v5363 = vpop.f32.mrf.mxu0
    %5364 = vdwg.mxu0
    %v5365 = vpack.c.bf16 %v4674, %v4671
    %v5366 = vpack.c.bf16 %v4682, %v4679
    %v5367 = vpack.c.bf16 %v4690, %v4687
    %v5368 = vpack.c.bf16 %v4698, %v4695
    %v5369 = vpack.c.bf16 %v4706, %v4703
    %v5370 = vpack.c.bf16 %v4714, %v4711
    %v5371 = vpack.c.bf16 %v4722, %v4719
    %v5372 = vpack.c.bf16 %v4730, %v4727
    %v5373 = vpack.c.bf16 %v4738, %v4735
    %v5374 = vpack.c.bf16 %v4746, %v4743
    %v5375 = vpack.c.bf16 %v4754, %v4751
    %v5376 = vpack.c.bf16 %v4762, %v4759
    %v5377 = vpack.c.bf16 %v4770, %v4767
    %v5378 = vpack.c.bf16 %v4778, %v4775
    %v5379 = vpack.c.bf16 %v4786, %v4783
    %v5380 = vpack.c.bf16 %v4794, %v4791
    %v5397 = vunpack.c.l.b16 %v5365
    %v5398 = vunpack.c.h.b16 %v5365
    %v5399 = vunpack.c.l.b16 %v5366
    %v5400 = vunpack.c.h.b16 %v5366
    %v5401 = vunpack.c.l.b16 %v5367
    %v5402 = vunpack.c.h.b16 %v5367
    %v5403 = vunpack.c.l.b16 %v5368
    %v5404 = vunpack.c.h.b16 %v5368
    %v5405 = vunpack.c.l.b16 %v5369
    %v5406 = vunpack.c.h.b16 %v5369
    %v5407 = vunpack.c.l.b16 %v5370
    %v5408 = vunpack.c.h.b16 %v5370
    %v5409 = vunpack.c.l.b16 %v5371
    %v5410 = vunpack.c.h.b16 %v5371
    %v5411 = vunpack.c.l.b16 %v5372
    %v5412 = vunpack.c.h.b16 %v5372
    %v5413 = vunpack.c.l.b16 %v5373
    %v5414 = vunpack.c.h.b16 %v5373
    %v5415 = vunpack.c.l.b16 %v5374
    %v5416 = vunpack.c.h.b16 %v5374
    %v5417 = vunpack.c.l.b16 %v5375
    %v5418 = vunpack.c.h.b16 %v5375
    %v5419 = vunpack.c.l.b16 %v5376
    %v5420 = vunpack.c.h.b16 %v5376
    %v5421 = vunpack.c.l.b16 %v5377
    %v5422 = vunpack.c.h.b16 %v5377
    %v5423 = vunpack.c.l.b16 %v5378
    %v5424 = vunpack.c.h.b16 %v5378
    %v5425 = vunpack.c.l.b16 %v5379
    %v5426 = vunpack.c.h.b16 %v5379
    %v5427 = vunpack.c.l.b16 %v5380
    %v5428 = vunpack.c.h.b16 %v5380
    %v5429 = vpack.c.b16 %v5397, %v5397
    %v5430 = vpack.c.b16 %v5398, %v5398
    %v5431 = vpack.c.b16 %v5399, %v5399
    %v5432 = vpack.c.b16 %v5400, %v5400
    %v5433 = vpack.c.b16 %v5401, %v5401
    %v5434 = vpack.c.b16 %v5402, %v5402
    %v5435 = vpack.c.b16 %v5403, %v5403
    %v5436 = vpack.c.b16 %v5404, %v5404
    %v5437 = vpack.c.b16 %v5405, %v5405
    %v5438 = vpack.c.b16 %v5406, %v5406
    %v5439 = vpack.c.b16 %v5407, %v5407
    %v5440 = vpack.c.b16 %v5408, %v5408
    %v5441 = vpack.c.b16 %v5409, %v5409
    %v5442 = vpack.c.b16 %v5410, %v5410
    %v5443 = vpack.c.b16 %v5411, %v5411
    %v5444 = vpack.c.b16 %v5412, %v5412
    %v5445 = vpack.c.b16 %v5413, %v5413
    %v5446 = vpack.c.b16 %v5414, %v5414
    %v5447 = vpack.c.b16 %v5415, %v5415
    %v5448 = vpack.c.b16 %v5416, %v5416
    %v5449 = vpack.c.b16 %v5417, %v5417
    %v5450 = vpack.c.b16 %v5418, %v5418
    %v5451 = vpack.c.b16 %v5419, %v5419
    %v5452 = vpack.c.b16 %v5420, %v5420
    %v5453 = vpack.c.b16 %v5421, %v5421
    %v5454 = vpack.c.b16 %v5422, %v5422
    %v5455 = vpack.c.b16 %v5423, %v5423
    %v5456 = vpack.c.b16 %v5424, %v5424
    %v5457 = vpack.c.b16 %v5425, %v5425
    %v5458 = vpack.c.b16 %v5426, %v5426
    %v5459 = vpack.c.b16 %v5427, %v5427
    %v5460 = vpack.c.b16 %v5428, %v5428
    %5493 = vst [vmem:[#allocation14] sm:$0xf] %v5429
    %5494 = vst [vmem:[#allocation14 + $0x4] sm:$0xf] %v5430
    %5495 = vst [vmem:[#allocation14 + $0x8] sm:$0xf] %v5431
    %5496 = vst [vmem:[#allocation14 + $0xc] sm:$0xf] %v5432
    %5497 = vst [vmem:[#allocation14 + $0x10] sm:$0xf] %v5433
    %5498 = vst [vmem:[#allocation14 + $0x14] sm:$0xf] %v5434
    %5499 = vst [vmem:[#allocation14 + $0x18] sm:$0xf] %v5435
    %5500 = vst [vmem:[#allocation14 + $0x1c] sm:$0xf] %v5436
    %5501 = vst [vmem:[#allocation14 + $0x20] sm:$0xf] %v5437
    %5502 = vst [vmem:[#allocation14 + $0x24] sm:$0xf] %v5438
    %5503 = vst [vmem:[#allocation14 + $0x28] sm:$0xf] %v5439
    %5504 = vst [vmem:[#allocation14 + $0x2c] sm:$0xf] %v5440
    %5505 = vst [vmem:[#allocation14 + $0x30] sm:$0xf] %v5441
    %5506 = vst [vmem:[#allocation14 + $0x34] sm:$0xf] %v5442
    %5507 = vst [vmem:[#allocation14 + $0x38] sm:$0xf] %v5443
    %5508 = vst [vmem:[#allocation14 + $0x3c] sm:$0xf] %v5444
    %5509 = vst [vmem:[#allocation14 + $0x40] sm:$0xf] %v5445
    %5510 = vst [vmem:[#allocation14 + $0x44] sm:$0xf] %v5446
    %5511 = vst [vmem:[#allocation14 + $0x48] sm:$0xf] %v5447
    %5512 = vst [vmem:[#allocation14 + $0x4c] sm:$0xf] %v5448
    %5513 = vst [vmem:[#allocation14 + $0x50] sm:$0xf] %v5449
    %5514 = vst [vmem:[#allocation14 + $0x54] sm:$0xf] %v5450
    %5515 = vst [vmem:[#allocation14 + $0x58] sm:$0xf] %v5451
    %5516 = vst [vmem:[#allocation14 + $0x5c] sm:$0xf] %v5452
    %5517 = vst [vmem:[#allocation14 + $0x60] sm:$0xf] %v5453
    %5518 = vst [vmem:[#allocation14 + $0x64] sm:$0xf] %v5454
    %5519 = vst [vmem:[#allocation14 + $0x68] sm:$0xf] %v5455
    %5520 = vst [vmem:[#allocation14 + $0x6c] sm:$0xf] %v5456
    %5521 = vst [vmem:[#allocation14 + $0x70] sm:$0xf] %v5457
    %5522 = vst [vmem:[#allocation14 + $0x74] sm:$0xf] %v5458
    %5523 = vst [vmem:[#allocation14 + $0x78] sm:$0xf] %v5459
    %5524 = vst [vmem:[#allocation14 + $0x7c] sm:$0xf] %v5460
    %v5525 = vpack.c.bf16 %v5242, %v5239
    %v5526 = vpack.c.bf16 %v5250, %v5247
    %v5527 = vpack.c.bf16 %v5258, %v5255
    %v5528 = vpack.c.bf16 %v5266, %v5263
    %v5529 = vpack.c.bf16 %v5274, %v5271
    %v5530 = vpack.c.bf16 %v5282, %v5279
    %v5531 = vpack.c.bf16 %v5290, %v5287
    %v5532 = vpack.c.bf16 %v5298, %v5295
    %v5533 = vpack.c.bf16 %v5306, %v5303
    %v5534 = vpack.c.bf16 %v5314, %v5311
    %v5535 = vpack.c.bf16 %v5322, %v5319
    %v5536 = vpack.c.bf16 %v5330, %v5327
    %v5537 = vpack.c.bf16 %v5338, %v5335
    %v5538 = vpack.c.bf16 %v5346, %v5343
    %v5539 = vpack.c.bf16 %v5354, %v5351
    %v5540 = vpack.c.bf16 %v5362, %v5359
    %v5557 = vunpack.c.l.b16 %v5525
    %v5558 = vunpack.c.h.b16 %v5525
    %v5559 = vunpack.c.l.b16 %v5526
    %v5560 = vunpack.c.h.b16 %v5526
    %v5561 = vunpack.c.l.b16 %v5527
    %v5562 = vunpack.c.h.b16 %v5527
    %v5563 = vunpack.c.l.b16 %v5528
    %v5564 = vunpack.c.h.b16 %v5528
    %v5565 = vunpack.c.l.b16 %v5529
    %v5566 = vunpack.c.h.b16 %v5529
    %v5567 = vunpack.c.l.b16 %v5530
    %v5568 = vunpack.c.h.b16 %v5530
    %v5569 = vunpack.c.l.b16 %v5531
    %v5570 = vunpack.c.h.b16 %v5531
    %v5571 = vunpack.c.l.b16 %v5532
    %v5572 = vunpack.c.h.b16 %v5532
    %v5573 = vunpack.c.l.b16 %v5533
    %v5574 = vunpack.c.h.b16 %v5533
    %v5575 = vunpack.c.l.b16 %v5534
    %v5576 = vunpack.c.h.b16 %v5534
    %v5577 = vunpack.c.l.b16 %v5535
    %v5578 = vunpack.c.h.b16 %v5535
    %v5579 = vunpack.c.l.b16 %v5536
    %v5580 = vunpack.c.h.b16 %v5536
    %v5581 = vunpack.c.l.b16 %v5537
    %v5582 = vunpack.c.h.b16 %v5537
    %v5583 = vunpack.c.l.b16 %v5538
    %v5584 = vunpack.c.h.b16 %v5538
    %v5585 = vunpack.c.l.b16 %v5539
    %v5586 = vunpack.c.h.b16 %v5539
    %v5587 = vunpack.c.l.b16 %v5540
    %v5588 = vunpack.c.h.b16 %v5540
    %v5589 = vpack.c.b16 %v5557, %v5557
    %v5590 = vpack.c.b16 %v5558, %v5558
    %v5591 = vpack.c.b16 %v5559, %v5559
    %v5592 = vpack.c.b16 %v5560, %v5560
    %v5593 = vpack.c.b16 %v5561, %v5561
    %v5594 = vpack.c.b16 %v5562, %v5562
    %v5595 = vpack.c.b16 %v5563, %v5563
    %v5596 = vpack.c.b16 %v5564, %v5564
    %v5597 = vpack.c.b16 %v5565, %v5565
    %v5598 = vpack.c.b16 %v5566, %v5566
    %v5599 = vpack.c.b16 %v5567, %v5567
    %v5600 = vpack.c.b16 %v5568, %v5568
    %v5601 = vpack.c.b16 %v5569, %v5569
    %v5602 = vpack.c.b16 %v5570, %v5570
    %v5603 = vpack.c.b16 %v5571, %v5571
    %v5604 = vpack.c.b16 %v5572, %v5572
    %v5605 = vpack.c.b16 %v5573, %v5573
    %v5606 = vpack.c.b16 %v5574, %v5574
    %v5607 = vpack.c.b16 %v5575, %v5575
    %v5608 = vpack.c.b16 %v5576, %v5576
    %v5609 = vpack.c.b16 %v5577, %v5577
    %v5610 = vpack.c.b16 %v5578, %v5578
    %v5611 = vpack.c.b16 %v5579, %v5579
    %v5612 = vpack.c.b16 %v5580, %v5580
    %v5613 = vpack.c.b16 %v5581, %v5581
    %v5614 = vpack.c.b16 %v5582, %v5582
    %v5615 = vpack.c.b16 %v5583, %v5583
    %v5616 = vpack.c.b16 %v5584, %v5584
    %v5617 = vpack.c.b16 %v5585, %v5585
    %v5618 = vpack.c.b16 %v5586, %v5586
    %v5619 = vpack.c.b16 %v5587, %v5587
    %v5620 = vpack.c.b16 %v5588, %v5588
    %5653 = vst [vmem:[#allocation15] sm:$0xf] %v5589
    %5654 = vst [vmem:[#allocation15 + $0x4] sm:$0xf] %v5590
    %5655 = vst [vmem:[#allocation15 + $0x8] sm:$0xf] %v5591
    %5656 = vst [vmem:[#allocation15 + $0xc] sm:$0xf] %v5592
    %5657 = vst [vmem:[#allocation15 + $0x10] sm:$0xf] %v5593
    %5658 = vst [vmem:[#allocation15 + $0x14] sm:$0xf] %v5594
    %5659 = vst [vmem:[#allocation15 + $0x18] sm:$0xf] %v5595
    %5660 = vst [vmem:[#allocation15 + $0x1c] sm:$0xf] %v5596
    %5661 = vst [vmem:[#allocation15 + $0x20] sm:$0xf] %v5597
    %5662 = vst [vmem:[#allocation15 + $0x24] sm:$0xf] %v5598
    %5663 = vst [vmem:[#allocation15 + $0x28] sm:$0xf] %v5599
    %5664 = vst [vmem:[#allocation15 + $0x2c] sm:$0xf] %v5600
    %5665 = vst [vmem:[#allocation15 + $0x30] sm:$0xf] %v5601
    %5666 = vst [vmem:[#allocation15 + $0x34] sm:$0xf] %v5602
    %5667 = vst [vmem:[#allocation15 + $0x38] sm:$0xf] %v5603
    %5668 = vst [vmem:[#allocation15 + $0x3c] sm:$0xf] %v5604
    %5669 = vst [vmem:[#allocation15 + $0x40] sm:$0xf] %v5605
    %5670 = vst [vmem:[#allocation15 + $0x44] sm:$0xf] %v5606
    %5671 = vst [vmem:[#allocation15 + $0x48] sm:$0xf] %v5607
    %5672 = vst [vmem:[#allocation15 + $0x4c] sm:$0xf] %v5608
    %5673 = vst [vmem:[#allocation15 + $0x50] sm:$0xf] %v5609
    %5674 = vst [vmem:[#allocation15 + $0x54] sm:$0xf] %v5610
    %5675 = vst [vmem:[#allocation15 + $0x58] sm:$0xf] %v5611
    %5676 = vst [vmem:[#allocation15 + $0x5c] sm:$0xf] %v5612
    %5677 = vst [vmem:[#allocation15 + $0x60] sm:$0xf] %v5613
    %5678 = vst [vmem:[#allocation15 + $0x64] sm:$0xf] %v5614
    %5679 = vst [vmem:[#allocation15 + $0x68] sm:$0xf] %v5615
    %5680 = vst [vmem:[#allocation15 + $0x6c] sm:$0xf] %v5616
    %5681 = vst [vmem:[#allocation15 + $0x70] sm:$0xf] %v5617
    %5682 = vst [vmem:[#allocation15 + $0x74] sm:$0xf] %v5618
    %5683 = vst [vmem:[#allocation15 + $0x78] sm:$0xf] %v5619
    %5684 = vst [vmem:[#allocation15 + $0x7c] sm:$0xf] %v5620
    // Predicated region
    $region62: #{tpu_custom_call.1} parent=1 // pred_check
      _
    $region63: #{tpu_custom_call.1} parent=1 // pred_check_branch
      %5686 = sbr.rel (0) target = $region65
    $region64: #{tpu_custom_call.1} parent=1 // pred_region
      %s5688 = ssub.s32 2048, 2048
      %5689 = vsyncadd [#allocation7], %s5688
      %s5690 = sshll.u32 [#allocation14], 4
      %s5691 = int_to_ptr.vmem [resolvable:$true] %s5690
      %5696 = dma.vmem_to_hbm [thread:$0]  %s5691, 2048, %s10, [#allocation7], 64, 64, 4
    $region65: #{tpu_custom_call.1} parent=1 // pred_fallthru
      _
    // Predicated region
    $region66: #{tpu_custom_call.1} parent=1 // pred_check
      _
    $region67: #{tpu_custom_call.1} parent=1 // pred_check_branch
      %5698 = sbr.rel (0) target = $region69
    $region68: #{tpu_custom_call.1} parent=1 // pred_region
      %s5700 = ssub.s32 2048, 2048
      %5701 = vsyncadd [#allocation16], %s5700
      %s5702 = sshll.u32 [#allocation15], 4
      %s5703 = int_to_ptr.vmem [resolvable:$true] %s5702
      %5708 = dma.vmem_to_hbm [thread:$0]  %s5703, 2048, %s11, [#allocation16], 64, 64, 4
    $region69: #{tpu_custom_call.1} parent=1 // pred_fallthru
      _
    // Predicated region
    $region70: #{tpu_custom_call.1} parent=1 // pred_check
      _
    $region71: #{tpu_custom_call.1} parent=1 // pred_check_branch
      %5710 = sbr.rel (0) target = $region73
    $region72: #{tpu_custom_call.1} parent=1 // pred_region
      %5711 = dma.done [#allocation7], 2048
    $region73: #{tpu_custom_call.1} parent=1 // pred_fallthru
      _
    // Predicated region
    $region74: #{tpu_custom_call.1} parent=1 // pred_check
      _
    $region75: #{tpu_custom_call.1} parent=1 // pred_check_branch
      %5713 = sbr.rel (0) target = $region77
    $region76: #{tpu_custom_call.1} parent=1 // pred_region
      %5714 = dma.done [#allocation16], 2048
    $region77: #{tpu_custom_call.1} parent=1 // pred_fallthru
      _
    %5715 = vsyncpa [#allocation6], 1
    %5716 = vsyncpa [#allocation9], 1
    %5717 = vsyncpa [#allocation12], 1
    %5718 = vsyncpa [#allocation7], 1
    %5719 = vsyncpa [#allocation16], 1
  %5720 = vsyncmov [#allocation3]
  %s5721 = vpop.sfrf %5720
  %p5722 = scmp.eq.s32.totalorder %s5721, 0
  %p5723 = pneg %p5722
  %5725 = shalt.err (%p5723)

</llo_original>
